<compile_context>
chip_gen: v7x
topology: tpu7x:2x2x1
jax: 0.10.0
libtpu: 0.0.40
codegen_flags: <defaults>
</compile_context>

<pallas_src>
import functools

import jax
import jax.numpy as jnp
from jax.experimental import pallas as pl
from jax.experimental.pallas import tpu as pltpu


NUM_LAYERS = 10   # nn.RNN(..., num_layers=10) is hard-coded in the module
LANE_ALIGN = 256  # pack layers so LP*H is a multiple of 256 lanes (v6e/v7x
                  # MXU tile; also 2x the v5e 128-lane tile)


# ------------------------------ Pallas kernel -------------------------------


def wavefront_rnn_fc_kernel(x_ref, wih0_ref, wcomb_ref, b_ref, wfc_ref,
                            bfc_ref, out_ref, x0_ref, *,
                            batch, seq_len, num_layers, hidden):
    """Entire network in one kernel invocation (no grid).

    x_ref    : (T*B, D)        time-major, flattened input sequence
    wih0_ref : (D, LP*H)       layer-0 W_ih^T, placed in columns [0:H], 0 else
    wcomb_ref: (LP*H, LP*H)    diag blocks = W_hh[l]^T, super-diag = W_ih[l]^T
    b_ref    : (1, LP*H)       b_ih + b_hh per layer slot (0 in padded slots)
    wfc_ref  : (LP*H, O)       FC weight^T in the last real layer's rows
    bfc_ref  : (1, O)          FC bias
    out_ref  : (B, O)          logits (only HBM write of the whole network)
    x0_ref   : (T*B, LP*H)     VMEM scratch for the hoisted layer-0 projection
    """
    B, T, L, H = batch, seq_len, num_layers, hidden
    LPH = wcomb_ref.shape[0]            # packed lane width = padded_layers * H
    n_steps = T + L - 1                 # number of wavefronts (anti-diagonals)

    # ---- hoisted layer-0 input projection (off the serial critical path) ---
    # One (T*B, D) @ (D, LP*H) MXU matmul.  wih0_ref is already padded to the
    # packed lane width, so each per-step add below is a plain full-width add
    # at a sublane-aligned offset (B = 8).
    x0_ref[...] = jnp.dot(x_ref[...], wih0_ref[...],
                          preferred_element_type=jnp.float32)

    w_comb = wcomb_ref[...]             # (LPH, LPH)
    b_bd = b_ref[...]                   # (1, LPH)
    lane = jax.lax.broadcasted_iota(jnp.int32, (1, LPH), 1)

    # ---- wavefront recurrence ----------------------------------------------
    # State holds, per layer slot l, that layer's most recent hidden state.
    # At wavefront step s, layer l computes time t = s - l:
    #   h_l[t] = tanh(h_{l-1}[t] @ W_ih[l]^T + h_l[t-1] @ W_hh[l]^T + b[l])
    # Both terms for EVERY layer come from the single block-packed matmul.
    state = jnp.zeros((B, LPH), jnp.float32)
    for s in range(n_steps):                        # static unroll (17 steps)
        pre = jnp.dot(state, w_comb, preferred_element_type=jnp.float32)
        if s < L - 1:
            # Layers l > s have not started yet: withhold their bias so their
            # preactivation is exactly 0 and tanh keeps them at h == 0
            # (their matmul inputs are already exactly 0).
            pre = pre + jnp.where(lane < (s + 1) * H, b_bd, 0.0)
        else:
            pre = pre + b_bd
        if s < T:                                   # layer-0 input for time s
            pre = pre + x0_ref[pl.ds(s * B, B), :]
        state = jnp.tanh(pre)

    # ---- fused FC head -------------------------------------------------------
    # wfc_ref has nonzero rows only in the last real layer's slot, so the
    # final hidden state is extracted by the matmul itself (no lane slice).
    out_ref[...] = (
        jnp.dot(state, wfc_ref[...], preferred_element_type=jnp.float32)
        + bfc_ref[...]
    ).astype(out_ref.dtype)


# ------------------------------ JAX wrapper ---------------------------------


@functools.partial(jax.jit, static_argnames=("num_layers", "hidden_size"))
def method_rnn_forward(x, packed, num_layers, hidden_size):
    """x: (B, T, input_size) batch_first, like the PyTorch module."""
    B, T, D = x.shape
    L, H = num_layers, hidden_size
    LPH = packed["w_comb"].shape[0]
    O = packed["wfc_big"].shape[-1]

    # glue: batch_first -> time-major, flattened to (T*B, D) for the kernel
    x_tm = jnp.transpose(x, (1, 0, 2)).reshape(T * B, D).astype(jnp.float32)

    kernel = functools.partial(wavefront_rnn_fc_kernel, batch=B, seq_len=T,
                               num_layers=L, hidden=H)

    # Honest tiny cost estimate so XLA does not treat the call as expensive.
    n_steps = T + L - 1
    flops = (2 * T * B * D * LPH              # hoisted layer-0 projection
             + n_steps * 2 * B * LPH * LPH    # wavefront recurrence
             + 2 * B * LPH * O)               # FC head
    trans = n_steps * B * LPH
    bytes_acc = 4 * (T * B * D + D * LPH + LPH * LPH + LPH
                     + LPH * O + O + B * O)

    vmem = pl.BlockSpec(memory_space=pltpu.MemorySpace.VMEM)
    # Whole working set (< 2 MiB) is VMEM-resident on every generation; no
    # grid (grid steps would only add pipeline-setup overhead here).
    return pl.pallas_call(
        kernel,
        out_shape=jax.ShapeDtypeStruct((B, O), jnp.float32),
        in_specs=[vmem] * 6,
        out_specs=vmem,
        scratch_shapes=[pltpu.VMEM((T * B, LPH), jnp.float32)],
        cost_estimate=pl.CostEstimate(
            flops=int(flops), transcendentals=int(trans),
            bytes_accessed=int(bytes_acc)),
    )(x_tm, packed["wih0_big"], packed["w_comb"], packed["b_bd"],
      packed["wfc_big"], packed["bfc"])


# ----------------------- deterministic parameter init -----------------------


def init_params(key, input_size, hidden_size, output_size, num_layers):
    H = hidden_size
    bound = 1.0 / jnp.sqrt(H)
    wih0_t = None
    wihr_t, whh_t, biases = [], [], []
    for l in range(num_layers):
        d_in = input_size if l == 0 else H
        key, k1, k2, k3, k4 = jax.random.split(key, 5)
        w_ih = jax.random.uniform(k1, (H, d_in), jnp.float32, -bound, bound)
        w_hh = jax.random.uniform(k2, (H, H), jnp.float32, -bound, bound)
        b_ih = jax.random.uniform(k3, (H,), jnp.float32, -bound, bound)
        b_hh = jax.random.uniform(k4, (H,), jnp.float32, -bound, bound)
        if l == 0:
            wih0_t = w_ih.T                             # (D, H)
        else:
            wihr_t.append(w_ih.T)                       # (H, H)
        whh_t.append(w_hh.T)                            # (H, H)
        biases.append((b_ih + b_hh).reshape(1, H))      # fold b_ih + b_hh

    key, k1, k2 = jax.random.split(key, 3)
    w_fc = jax.random.uniform(k1, (output_size, H), jnp.float32, -bound, bound)
    b_fc = jax.random.uniform(k2, (output_size,), jnp.float32, -bound, bound)

    return {
        "wih0_t": wih0_t,                               # (D, H)
        "wihr_t": jnp.stack(wihr_t, axis=0),            # (L-1, H, H)
        "whh_t": jnp.stack(whh_t, axis=0),              # (L, H, H)
        "b": jnp.stack(biases, axis=0),                 # (L, 1, H)
        "wfc_t": w_fc.T,                                # (H, O)
        "bfc": b_fc.reshape(1, output_size),            # (1, O)
    }


# --------------------- one-time lane-dense weight packing -------------------


def pack_params(params, input_size, hidden_size, num_layers, output_size,
                lane_align=LANE_ALIGN):
    """Build the block-packed operands the wavefront kernel consumes.

    w_comb's diagonal blocks hold W_hh[l]^T (recurrence) and its
    super-diagonal blocks (row block l-1 -> column block l) hold W_ih[l]^T
    (layer-to-layer projection), so one matmul per wavefront step computes
    both terms for every layer.  L is padded to LP so LP*H is a multiple of
    `lane_align` lanes; padded blocks are zero and stay exactly zero.
    """
    D, H, L, O = input_size, hidden_size, num_layers, output_size
    lph = ((L * H + lane_align - 1) // lane_align) * lane_align
    assert lph % H == 0 and lph >= L * H

    wih0_big = jnp.zeros((D, lph), jnp.float32).at[:, :H].set(params["wih0_t"])

    w_comb = jnp.zeros((lph, lph), jnp.float32)
    for l in range(L):
        w_comb = w_comb.at[l * H:(l + 1) * H,
                           l * H:(l + 1) * H].set(params["whh_t"][l])
    for l in range(1, L):
        w_comb = w_comb.at[(l - 1) * H:l * H,
                           l * H:(l + 1) * H].set(params["wihr_t"][l - 1])

    b_bd = jnp.zeros((1, lph), jnp.float32)
    for l in range(L):
        b_bd = b_bd.at[:, l * H:(l + 1) * H].set(params["b"][l])

    wfc_big = jnp.zeros((lph, O), jnp.float32)
    wfc_big = wfc_big.at[(L - 1) * H:L * H, :].set(params["wfc_t"])

    return {"wih0_big": wih0_big, "w_comb": w_comb, "b_bd": b_bd,
            "wfc_big": wfc_big, "bfc": params["bfc"]}


# ------------------------------ pure-JAX ref ---------------------------------


def reference_forward(x, params):
    B, T, _ = x.shape
    L, _, H = params["whh_t"].shape
    seq = jnp.transpose(x, (1, 0, 2)).astype(jnp.float32)   # (T, B, D)
    for l in range(L):
        w_ih_t = params["wih0_t"] if l == 0 else params["wihr_t"][l - 1]
        w_hh_t = params["whh_t"][l]
        b = params["b"][l]
        h = jnp.zeros((B, H), jnp.float32)
        outs = []
        for t in range(T):
            h = jnp.tanh(seq[t] @ w_ih_t + h @ w_hh_t + b)
            outs.append(h)
        seq = jnp.stack(outs, axis=0)
    return seq[-1] @ params["wfc_t"] + params["bfc"]


# ----------------------------------- main ------------------------------------

if __name__ == "__main__":
    batch, seq_len = 8, 8
    input_size, hidden_size, output_size = 16, 32, 4

    key = jax.random.PRNGKey(0)
    key, kx = jax.random.split(key)
    x = jax.random.normal(kx, (batch, seq_len, input_size), jnp.float32)

    params = init_params(key, input_size, hidden_size, output_size, NUM_LAYERS)
    packed = pack_params(params, input_size, hidden_size, NUM_LAYERS,
                         output_size)

    out = jax.block_until_ready(
        method_rnn_forward(x, packed, NUM_LAYERS, hidden_size))
    ref = reference_forward(x, params)

    assert out.shape == (batch, output_size)
    # Tolerance relaxed slightly vs the per-layer version: the block-packed
    # matmul (K = 32 -> K = 512 with exact zeros, W_ih/W_hh fused into one
    # contraction) changes the MXU accumulation order by a few ULP per step.
    assert jnp.allclose(out, ref, atol=1e-4, rtol=1e-4), "mismatch vs reference"

    print("KERNEL_OK")
</pallas_src>

<mosaic_0001>
module attributes {stable_mosaic.version = 11 : i64} {
  func.func @wavefront_rnn_fc_kernel(%arg0: memref<64x16xf32, #tpu.memory_space<vmem>>, %arg1: memref<16x512xf32, #tpu.memory_space<vmem>>, %arg2: memref<512x512xf32, #tpu.memory_space<vmem>>, %arg3: memref<1x512xf32, #tpu.memory_space<vmem>>, %arg4: memref<512x4xf32, #tpu.memory_space<vmem>>, %arg5: memref<1x4xf32, #tpu.memory_space<vmem>>, %arg6: memref<8x4xf32, #tpu.memory_space<vmem>>, %arg7: memref<64x512xf32, #tpu.memory_space<vmem>>) attributes {dimension_semantics = [], scalar_prefetch = 0 : i64, scratch_operands = 1 : i64, tpu.core_type = #tpu.core_type<tc>} {
    %c0 = arith.constant 0 : index
    %c0_0 = arith.constant 0 : index
    %0 = vector.load %arg0[%c0, %c0_0] : memref<64x16xf32, #tpu.memory_space<vmem>>, vector<64x16xf32>
    %c0_1 = arith.constant 0 : index
    %c0_2 = arith.constant 0 : index
    %1 = vector.load %arg1[%c0_1, %c0_2] : memref<16x512xf32, #tpu.memory_space<vmem>>, vector<16x512xf32>
    %cst = arith.constant dense<0.000000e+00> : vector<64x512xf32>
    %2 = tpu.matmul %0, %1, %cst {dimension_numbers = #tpu.dot_dimension_numbers<[1], [0], [0], [1], [0, 0, 1, 1], [], []>} : vector<64x16xf32>, vector<16x512xf32>, vector<64x512xf32> -> vector<64x512xf32>
    %c0_3 = arith.constant 0 : index
    %c0_4 = arith.constant 0 : index
    %3 = vector.load %arg7[%c0_3, %c0_4] : memref<64x512xf32, #tpu.memory_space<vmem>>, vector<64x512xf32>
    tpu.vector_store %arg7[%c0_3, %c0_4], %2 {strides = array<i32>} : memref<64x512xf32, #tpu.memory_space<vmem>>, vector<64x512xf32>,
    %c0_5 = arith.constant 0 : index
    %c0_6 = arith.constant 0 : index
    %4 = vector.load %arg2[%c0_5, %c0_6] : memref<512x512xf32, #tpu.memory_space<vmem>>, vector<512x512xf32>
    %c0_7 = arith.constant 0 : index
    %c0_8 = arith.constant 0 : index
    %5 = vector.load %arg3[%c0_7, %c0_8] : memref<1x512xf32, #tpu.memory_space<vmem>>, vector<1x512xf32>
    %6 = tpu.iota {dimensions = array<i32: 1>} : vector<1x512xi32>
    %cst_9 = arith.constant 0.000000e+00 : f32
    %7 = vector.broadcast %cst_9 : f32 to vector<8x512xf32>
    %cst_10 = arith.constant dense<0.000000e+00> : vector<8x512xf32>
    %8 = tpu.matmul %7, %4, %cst_10 {dimension_numbers = #tpu.dot_dimension_numbers<[1], [0], [0], [1], [0, 0, 1, 1], [], []>} : vector<8x512xf32>, vector<512x512xf32>, vector<8x512xf32> -> vector<8x512xf32>
    %c32_i32 = arith.constant 32 : i32
    %9 = vector.broadcast %c32_i32 : i32 to vector<1x512xi32>
    %10 = arith.cmpi slt, %6, %9 : vector<1x512xi32>
    %cst_11 = arith.constant 0.000000e+00 : f32
    %11 = vector.broadcast %cst_11 : f32 to vector<1x512xf32>
    %12 = arith.select %10, %5, %11 : vector<1x512xi1>, vector<1x512xf32>
    %13 = vector.broadcast %12 : vector<1x512xf32> to vector<8x512xf32>
    %14 = arith.addf %8, %13 : vector<8x512xf32>
    %c0_12 = arith.constant 0 : index
    %c0_13 = arith.constant 0 : index
    %15 = vector.load %arg7[%c0_12, %c0_13] : memref<64x512xf32, #tpu.memory_space<vmem>>, vector<8x512xf32>
    %16 = arith.addf %14, %15 : vector<8x512xf32>
    %17 = math.tanh %16 : vector<8x512xf32>
    %cst_14 = arith.constant dense<0.000000e+00> : vector<8x512xf32>
    %18 = tpu.matmul %17, %4, %cst_14 {dimension_numbers = #tpu.dot_dimension_numbers<[1], [0], [0], [1], [0, 0, 1, 1], [], []>} : vector<8x512xf32>, vector<512x512xf32>, vector<8x512xf32> -> vector<8x512xf32>
    %c64_i32 = arith.constant 64 : i32
    %19 = vector.broadcast %c64_i32 : i32 to vector<1x512xi32>
    %20 = arith.cmpi slt, %6, %19 : vector<1x512xi32>
    %cst_15 = arith.constant 0.000000e+00 : f32
    %21 = vector.broadcast %cst_15 : f32 to vector<1x512xf32>
    %22 = arith.select %20, %5, %21 : vector<1x512xi1>, vector<1x512xf32>
    %23 = vector.broadcast %22 : vector<1x512xf32> to vector<8x512xf32>
    %24 = arith.addf %18, %23 : vector<8x512xf32>
    %c8 = arith.constant 8 : index
    %c0_16 = arith.constant 0 : index
    %25 = vector.load %arg7[%c8, %c0_16] : memref<64x512xf32, #tpu.memory_space<vmem>>, vector<8x512xf32>
    %26 = arith.addf %24, %25 : vector<8x512xf32>
    %27 = math.tanh %26 : vector<8x512xf32>
    %cst_17 = arith.constant dense<0.000000e+00> : vector<8x512xf32>
    %28 = tpu.matmul %27, %4, %cst_17 {dimension_numbers = #tpu.dot_dimension_numbers<[1], [0], [0], [1], [0, 0, 1, 1], [], []>} : vector<8x512xf32>, vector<512x512xf32>, vector<8x512xf32> -> vector<8x512xf32>
    %c96_i32 = arith.constant 96 : i32
    %29 = vector.broadcast %c96_i32 : i32 to vector<1x512xi32>
    %30 = arith.cmpi slt, %6, %29 : vector<1x512xi32>
    %cst_18 = arith.constant 0.000000e+00 : f32
    %31 = vector.broadcast %cst_18 : f32 to vector<1x512xf32>
    %32 = arith.select %30, %5, %31 : vector<1x512xi1>, vector<1x512xf32>
    %33 = vector.broadcast %32 : vector<1x512xf32> to vector<8x512xf32>
    %34 = arith.addf %28, %33 : vector<8x512xf32>
    %c16 = arith.constant 16 : index
    %c0_19 = arith.constant 0 : index
    %35 = vector.load %arg7[%c16, %c0_19] : memref<64x512xf32, #tpu.memory_space<vmem>>, vector<8x512xf32>
    %36 = arith.addf %34, %35 : vector<8x512xf32>
    %37 = math.tanh %36 : vector<8x512xf32>
    %cst_20 = arith.constant dense<0.000000e+00> : vector<8x512xf32>
    %38 = tpu.matmul %37, %4, %cst_20 {dimension_numbers = #tpu.dot_dimension_numbers<[1], [0], [0], [1], [0, 0, 1, 1], [], []>} : vector<8x512xf32>, vector<512x512xf32>, vector<8x512xf32> -> vector<8x512xf32>
    %c128_i32 = arith.constant 128 : i32
    %39 = vector.broadcast %c128_i32 : i32 to vector<1x512xi32>
    %40 = arith.cmpi slt, %6, %39 : vector<1x512xi32>
    %cst_21 = arith.constant 0.000000e+00 : f32
    %41 = vector.broadcast %cst_21 : f32 to vector<1x512xf32>
    %42 = arith.select %40, %5, %41 : vector<1x512xi1>, vector<1x512xf32>
    %43 = vector.broadcast %42 : vector<1x512xf32> to vector<8x512xf32>
    %44 = arith.addf %38, %43 : vector<8x512xf32>
    %c24 = arith.constant 24 : index
    %c0_22 = arith.constant 0 : index
    %45 = vector.load %arg7[%c24, %c0_22] : memref<64x512xf32, #tpu.memory_space<vmem>>, vector<8x512xf32>
    %46 = arith.addf %44, %45 : vector<8x512xf32>
    %47 = math.tanh %46 : vector<8x512xf32>
    %cst_23 = arith.constant dense<0.000000e+00> : vector<8x512xf32>
    %48 = tpu.matmul %47, %4, %cst_23 {dimension_numbers = #tpu.dot_dimension_numbers<[1], [0], [0], [1], [0, 0, 1, 1], [], []>} : vector<8x512xf32>, vector<512x512xf32>, vector<8x512xf32> -> vector<8x512xf32>
    %c160_i32 = arith.constant 160 : i32
    %49 = vector.broadcast %c160_i32 : i32 to vector<1x512xi32>
    %50 = arith.cmpi slt, %6, %49 : vector<1x512xi32>
    %cst_24 = arith.constant 0.000000e+00 : f32
    %51 = vector.broadcast %cst_24 : f32 to vector<1x512xf32>
    %52 = arith.select %50, %5, %51 : vector<1x512xi1>, vector<1x512xf32>
    %53 = vector.broadcast %52 : vector<1x512xf32> to vector<8x512xf32>
    %54 = arith.addf %48, %53 : vector<8x512xf32>
    %c32 = arith.constant 32 : index
    %c0_25 = arith.constant 0 : index
    %55 = vector.load %arg7[%c32, %c0_25] : memref<64x512xf32, #tpu.memory_space<vmem>>, vector<8x512xf32>
    %56 = arith.addf %54, %55 : vector<8x512xf32>
    %57 = math.tanh %56 : vector<8x512xf32>
    %cst_26 = arith.constant dense<0.000000e+00> : vector<8x512xf32>
    %58 = tpu.matmul %57, %4, %cst_26 {dimension_numbers = #tpu.dot_dimension_numbers<[1], [0], [0], [1], [0, 0, 1, 1], [], []>} : vector<8x512xf32>, vector<512x512xf32>, vector<8x512xf32> -> vector<8x512xf32>
    %c192_i32 = arith.constant 192 : i32
    %59 = vector.broadcast %c192_i32 : i32 to vector<1x512xi32>
    %60 = arith.cmpi slt, %6, %59 : vector<1x512xi32>
    %cst_27 = arith.constant 0.000000e+00 : f32
    %61 = vector.broadcast %cst_27 : f32 to vector<1x512xf32>
    %62 = arith.select %60, %5, %61 : vector<1x512xi1>, vector<1x512xf32>
    %63 = vector.broadcast %62 : vector<1x512xf32> to vector<8x512xf32>
    %64 = arith.addf %58, %63 : vector<8x512xf32>
    %c40 = arith.constant 40 : index
    %c0_28 = arith.constant 0 : index
    %65 = vector.load %arg7[%c40, %c0_28] : memref<64x512xf32, #tpu.memory_space<vmem>>, vector<8x512xf32>
    %66 = arith.addf %64, %65 : vector<8x512xf32>
    %67 = math.tanh %66 : vector<8x512xf32>
    %cst_29 = arith.constant dense<0.000000e+00> : vector<8x512xf32>
    %68 = tpu.matmul %67, %4, %cst_29 {dimension_numbers = #tpu.dot_dimension_numbers<[1], [0], [0], [1], [0, 0, 1, 1], [], []>} : vector<8x512xf32>, vector<512x512xf32>, vector<8x512xf32> -> vector<8x512xf32>
    %c224_i32 = arith.constant 224 : i32
    %69 = vector.broadcast %c224_i32 : i32 to vector<1x512xi32>
    %70 = arith.cmpi slt, %6, %69 : vector<1x512xi32>
    %cst_30 = arith.constant 0.000000e+00 : f32
    %71 = vector.broadcast %cst_30 : f32 to vector<1x512xf32>
    %72 = arith.select %70, %5, %71 : vector<1x512xi1>, vector<1x512xf32>
    %73 = vector.broadcast %72 : vector<1x512xf32> to vector<8x512xf32>
    %74 = arith.addf %68, %73 : vector<8x512xf32>
    %c48 = arith.constant 48 : index
    %c0_31 = arith.constant 0 : index
    %75 = vector.load %arg7[%c48, %c0_31] : memref<64x512xf32, #tpu.memory_space<vmem>>, vector<8x512xf32>
    %76 = arith.addf %74, %75 : vector<8x512xf32>
    %77 = math.tanh %76 : vector<8x512xf32>
    %cst_32 = arith.constant dense<0.000000e+00> : vector<8x512xf32>
    %78 = tpu.matmul %77, %4, %cst_32 {dimension_numbers = #tpu.dot_dimension_numbers<[1], [0], [0], [1], [0, 0, 1, 1], [], []>} : vector<8x512xf32>, vector<512x512xf32>, vector<8x512xf32> -> vector<8x512xf32>
    %c256_i32 = arith.constant 256 : i32
    %79 = vector.broadcast %c256_i32 : i32 to vector<1x512xi32>
    %80 = arith.cmpi slt, %6, %79 : vector<1x512xi32>
    %cst_33 = arith.constant 0.000000e+00 : f32
    %81 = vector.broadcast %cst_33 : f32 to vector<1x512xf32>
    %82 = arith.select %80, %5, %81 : vector<1x512xi1>, vector<1x512xf32>
    %83 = vector.broadcast %82 : vector<1x512xf32> to vector<8x512xf32>
    %84 = arith.addf %78, %83 : vector<8x512xf32>
    %c56 = arith.constant 56 : index
    %c0_34 = arith.constant 0 : index
    %85 = vector.load %arg7[%c56, %c0_34] : memref<64x512xf32, #tpu.memory_space<vmem>>, vector<8x512xf32>
    %86 = arith.addf %84, %85 : vector<8x512xf32>
    %87 = math.tanh %86 : vector<8x512xf32>
    %cst_35 = arith.constant dense<0.000000e+00> : vector<8x512xf32>
    %88 = tpu.matmul %87, %4, %cst_35 {dimension_numbers = #tpu.dot_dimension_numbers<[1], [0], [0], [1], [0, 0, 1, 1], [], []>} : vector<8x512xf32>, vector<512x512xf32>, vector<8x512xf32> -> vector<8x512xf32>
    %c288_i32 = arith.constant 288 : i32
    %89 = vector.broadcast %c288_i32 : i32 to vector<1x512xi32>
    %90 = arith.cmpi slt, %6, %89 : vector<1x512xi32>
    %cst_36 = arith.constant 0.000000e+00 : f32
    %91 = vector.broadcast %cst_36 : f32 to vector<1x512xf32>
    %92 = arith.select %90, %5, %91 : vector<1x512xi1>, vector<1x512xf32>
    %93 = vector.broadcast %92 : vector<1x512xf32> to vector<8x512xf32>
    %94 = arith.addf %88, %93 : vector<8x512xf32>
    %95 = math.tanh %94 : vector<8x512xf32>
    %cst_37 = arith.constant dense<0.000000e+00> : vector<8x512xf32>
    %96 = tpu.matmul %95, %4, %cst_37 {dimension_numbers = #tpu.dot_dimension_numbers<[1], [0], [0], [1], [0, 0, 1, 1], [], []>} : vector<8x512xf32>, vector<512x512xf32>, vector<8x512xf32> -> vector<8x512xf32>
    %97 = vector.broadcast %5 : vector<1x512xf32> to vector<8x512xf32>
    %98 = arith.addf %96, %97 : vector<8x512xf32>
    %99 = math.tanh %98 : vector<8x512xf32>
    %cst_38 = arith.constant dense<0.000000e+00> : vector<8x512xf32>
    %100 = tpu.matmul %99, %4, %cst_38 {dimension_numbers = #tpu.dot_dimension_numbers<[1], [0], [0], [1], [0, 0, 1, 1], [], []>} : vector<8x512xf32>, vector<512x512xf32>, vector<8x512xf32> -> vector<8x512xf32>
    %101 = vector.broadcast %5 : vector<1x512xf32> to vector<8x512xf32>
    %102 = arith.addf %100, %101 : vector<8x512xf32>
    %103 = math.tanh %102 : vector<8x512xf32>
    %cst_39 = arith.constant dense<0.000000e+00> : vector<8x512xf32>
    %104 = tpu.matmul %103, %4, %cst_39 {dimension_numbers = #tpu.dot_dimension_numbers<[1], [0], [0], [1], [0, 0, 1, 1], [], []>} : vector<8x512xf32>, vector<512x512xf32>, vector<8x512xf32> -> vector<8x512xf32>
    %105 = vector.broadcast %5 : vector<1x512xf32> to vector<8x512xf32>
    %106 = arith.addf %104, %105 : vector<8x512xf32>
    %107 = math.tanh %106 : vector<8x512xf32>
    %cst_40 = arith.constant dense<0.000000e+00> : vector<8x512xf32>
    %108 = tpu.matmul %107, %4, %cst_40 {dimension_numbers = #tpu.dot_dimension_numbers<[1], [0], [0], [1], [0, 0, 1, 1], [], []>} : vector<8x512xf32>, vector<512x512xf32>, vector<8x512xf32> -> vector<8x512xf32>
    %109 = vector.broadcast %5 : vector<1x512xf32> to vector<8x512xf32>
    %110 = arith.addf %108, %109 : vector<8x512xf32>
    %111 = math.tanh %110 : vector<8x512xf32>
    %cst_41 = arith.constant dense<0.000000e+00> : vector<8x512xf32>
    %112 = tpu.matmul %111, %4, %cst_41 {dimension_numbers = #tpu.dot_dimension_numbers<[1], [0], [0], [1], [0, 0, 1, 1], [], []>} : vector<8x512xf32>, vector<512x512xf32>, vector<8x512xf32> -> vector<8x512xf32>
    %113 = vector.broadcast %5 : vector<1x512xf32> to vector<8x512xf32>
    %114 = arith.addf %112, %113 : vector<8x512xf32>
    %115 = math.tanh %114 : vector<8x512xf32>
    %cst_42 = arith.constant dense<0.000000e+00> : vector<8x512xf32>
    %116 = tpu.matmul %115, %4, %cst_42 {dimension_numbers = #tpu.dot_dimension_numbers<[1], [0], [0], [1], [0, 0, 1, 1], [], []>} : vector<8x512xf32>, vector<512x512xf32>, vector<8x512xf32> -> vector<8x512xf32>
    %117 = vector.broadcast %5 : vector<1x512xf32> to vector<8x512xf32>
    %118 = arith.addf %116, %117 : vector<8x512xf32>
    %119 = math.tanh %118 : vector<8x512xf32>
    %cst_43 = arith.constant dense<0.000000e+00> : vector<8x512xf32>
    %120 = tpu.matmul %119, %4, %cst_43 {dimension_numbers = #tpu.dot_dimension_numbers<[1], [0], [0], [1], [0, 0, 1, 1], [], []>} : vector<8x512xf32>, vector<512x512xf32>, vector<8x512xf32> -> vector<8x512xf32>
    %121 = vector.broadcast %5 : vector<1x512xf32> to vector<8x512xf32>
    %122 = arith.addf %120, %121 : vector<8x512xf32>
    %123 = math.tanh %122 : vector<8x512xf32>
    %cst_44 = arith.constant dense<0.000000e+00> : vector<8x512xf32>
    %124 = tpu.matmul %123, %4, %cst_44 {dimension_numbers = #tpu.dot_dimension_numbers<[1], [0], [0], [1], [0, 0, 1, 1], [], []>} : vector<8x512xf32>, vector<512x512xf32>, vector<8x512xf32> -> vector<8x512xf32>
    %125 = vector.broadcast %5 : vector<1x512xf32> to vector<8x512xf32>
    %126 = arith.addf %124, %125 : vector<8x512xf32>
    %127 = math.tanh %126 : vector<8x512xf32>
    %c0_45 = arith.constant 0 : index
    %c0_46 = arith.constant 0 : index
    %128 = vector.load %arg4[%c0_45, %c0_46] : memref<512x4xf32, #tpu.memory_space<vmem>>, vector<512x4xf32>
    %cst_47 = arith.constant dense<0.000000e+00> : vector<8x4xf32>
    %129 = tpu.matmul %127, %128, %cst_47 {dimension_numbers = #tpu.dot_dimension_numbers<[1], [0], [0], [1], [0, 0, 1, 1], [], []>} : vector<8x512xf32>, vector<512x4xf32>, vector<8x4xf32> -> vector<8x4xf32>
    %c0_48 = arith.constant 0 : index
    %c0_49 = arith.constant 0 : index
    %130 = vector.load %arg5[%c0_48, %c0_49] : memref<1x4xf32, #tpu.memory_space<vmem>>, vector<1x4xf32>
    %131 = vector.broadcast %130 : vector<1x4xf32> to vector<8x4xf32>
    %132 = arith.addf %129, %131 : vector<8x4xf32>
    %c0_50 = arith.constant 0 : index
    %c0_51 = arith.constant 0 : index
    %133 = vector.load %arg6[%c0_50, %c0_51] : memref<8x4xf32, #tpu.memory_space<vmem>>, vector<8x4xf32>
    tpu.vector_store %arg6[%c0_50, %c0_51], %132 {strides = array<i32>} : memref<8x4xf32, #tpu.memory_space<vmem>>, vector<8x4xf32>,
    return
  }
}

</mosaic_0001>

<llo_original>
// kernel: method_rnn_forward.1
$region0: #{method_rnn_forward.1}
  #allocation0 [shape = 'u32[]', space=smem, size = 0x4, offset = 0x4, fixed_abs, tag = 'smem constant byte address 0x4 - core index']
  #allocation1 [shape = 'u32[144,128]{1,0:T(1,128)}', space=vmem, size = 0x12000, scoped, tag = 'internal scratch']
  #allocation2 [shape = 'f32[64,512]{1,0:T(8,128)}', space=vmem, size = 0x20000, scoped, tag = 'scratch operand']
  %s0 = inlined_call_operand.vmem [shape: f32[64,16], index: 0, kind: input, shape index: {}]
  %s1 = inlined_call_operand.vmem [shape: f32[16,512], index: 1, kind: input, shape index: {}]
  %s2 = inlined_call_operand.hbm [shape: f32[512,512], index: 2, kind: input, shape index: {}]
  %s3 = inlined_call_operand.vmem [shape: f32[1,512], index: 3, kind: input, shape index: {}]
  %s4 = inlined_call_operand.vmem [shape: f32[512,4], index: 4, kind: input, shape index: {}]
  %s5 = inlined_call_operand.vmem [shape: f32[1,4], index: 5, kind: input, shape index: {}]
  %s6 = inlined_call_operand.vmem [shape: f32[8,4], index: 6, kind: output, shape index: {}]
  %s7 = sld [smem:[#allocation0]]
  $region38: #{method_rnn_forward.1} parent=0
    _
  %s9 = ssub.s32 1, %s7
  %s10 = scalar_select 0, %s9, %s7
  $region1: #{method_rnn_forward.1} parent=0
    #allocation3 [shape = 'u8[1048576]{0}', space=vmem, size = 0x100000, scoped, tag = 'input window, operand 2, single buffered']
    #allocation4 [shape = 's32[1]{0}', space=sflag, size = 0x4, scoped, tag = 'scoped memory for method_rnn_forward.1']
    %11 = vsyncpa [#allocation4], 0
    // Predicated region
    $region2: #{method_rnn_forward.1} parent=1 // pred_check
      _
    $region3: #{method_rnn_forward.1} parent=1 // pred_check_branch
      %13 = sbr.rel (0) target = $region5
    $region4: #{method_rnn_forward.1} parent=1 // pred_region
      _
    $region5: #{method_rnn_forward.1} parent=1 // pred_fallthru
      _
    // Predicated region
    $region6: #{method_rnn_forward.1} parent=1 // pred_check
      _
    $region7: #{method_rnn_forward.1} parent=1 // pred_check_branch
      %15 = sbr.rel (0) target = $region9
    $region8: #{method_rnn_forward.1} parent=1 // pred_region
      _
    $region9: #{method_rnn_forward.1} parent=1 // pred_fallthru
      _
    // Predicated region
    $region10: #{method_rnn_forward.1} parent=1 // pred_check
      _
    $region11: #{method_rnn_forward.1} parent=1 // pred_check_branch
      %17 = sbr.rel (0) target = $region13
    $region12: #{method_rnn_forward.1} parent=1 // pred_region
      %s19 = ssub.s32 32768, 32768
      %20 = vsyncadd [#allocation4], %s19
      %s21 = sshll.u32 [#allocation3], 4
      %s22 = int_to_ptr.vmem [resolvable:$true] %s21
      %27 = dma.hbm_to_vmem [thread:$0]  %s2, 32768, %s22, [#allocation4], 512, 512, 32
    $region13: #{method_rnn_forward.1} parent=1 // pred_fallthru
      _
    // Predicated region
    $region14: #{method_rnn_forward.1} parent=1 // pred_check
      _
    $region15: #{method_rnn_forward.1} parent=1 // pred_check_branch
      %29 = sbr.rel (0) target = $region17
    $region16: #{method_rnn_forward.1} parent=1 // pred_region
      _
    $region17: #{method_rnn_forward.1} parent=1 // pred_fallthru
      _
    // Predicated region
    $region18: #{method_rnn_forward.1} parent=1 // pred_check
      _
    $region19: #{method_rnn_forward.1} parent=1 // pred_check_branch
      %31 = sbr.rel (0) target = $region21
    $region20: #{method_rnn_forward.1} parent=1 // pred_region
      _
    $region21: #{method_rnn_forward.1} parent=1 // pred_fallthru
      _
    // Predicated region
    $region22: #{method_rnn_forward.1} parent=1 // pred_check
      _
    $region23: #{method_rnn_forward.1} parent=1 // pred_check_branch
      %33 = sbr.rel (0) target = $region25
    $region24: #{method_rnn_forward.1} parent=1 // pred_region
      _
    $region25: #{method_rnn_forward.1} parent=1 // pred_fallthru
      _
    // Predicated region
    $region26: #{method_rnn_forward.1} parent=1 // pred_check
      _
    $region27: #{method_rnn_forward.1} parent=1 // pred_check_branch
      %35 = sbr.rel (0) target = $region29
    $region28: #{method_rnn_forward.1} parent=1 // pred_region
      %36 = dma.done [#allocation4], 32768
    $region29: #{method_rnn_forward.1} parent=1 // pred_fallthru
      _
    %v37 = vld [vmem:[%s0] sm:$0xff]
    %v38 = vld [vmem:[%s0 + $0x8] sm:$0xff]
    %v39 = vld [vmem:[%s0 + $0x10] sm:$0xff]
    %v40 = vld [vmem:[%s0 + $0x18] sm:$0xff]
    %v41 = vld [vmem:[%s0 + $0x20] sm:$0xff]
    %v42 = vld [vmem:[%s0 + $0x28] sm:$0xff]
    %v43 = vld [vmem:[%s0 + $0x30] sm:$0xff]
    %v44 = vld [vmem:[%s0 + $0x38] sm:$0xff]
    %v45 = vld [vmem:[%s1] sm:$0xff]
    %v46 = vld [vmem:[%s1 + $0x8] sm:$0xff]
    %v47 = vld [vmem:[%s1 + $0x10] sm:$0xff]
    %v48 = vld [vmem:[%s1 + $0x18] sm:$0xff]
    %v49 = vld [vmem:[%s1 + $0x20] sm:$0xff]
    %v50 = vld [vmem:[%s1 + $0x28] sm:$0xff]
    %v51 = vld [vmem:[%s1 + $0x30] sm:$0xff]
    %v52 = vld [vmem:[%s1 + $0x38] sm:$0xff]
    %vm53 = vcmask 130048
    %v55 = vsel %vm53, %v37, 0
    %v58 = vsel %vm53, %v38, 0
    %v61 = vsel %vm53, %v39, 0
    %v64 = vsel %vm53, %v40, 0
    %v67 = vsel %vm53, %v41, 0
    %v70 = vsel %vm53, %v42, 0
    %v73 = vsel %vm53, %v43, 0
    %v76 = vsel %vm53, %v44, 0
    %78 = vmatprep.subr.mxu0 %v46
    %79 = vmatpush1.msra.mxu0 %v45
    %80 = vmatprep.subr.mxu0 %v50
    %81 = vmatpush1.msra.mxu0 %v49
    %82 = vmatprep.subr.mxu0 0.0
    %83 = vmatpush1.msra.mxu0 0.0
    %84 = vmatprep.subr.mxu0 0.0
    %85 = vmatpush1.msra.mxu0 0.0
    %86 = vmatprep.subr.mxu0 0.0
    %87 = vmatpush1.msra.mxu0 0.0
    %88 = vmatprep.subr.mxu0 0.0
    %89 = vmatpush1.msra.mxu0 0.0
    %90 = vmatprep.subr.mxu0 0.0
    %91 = vmatpush1.msra.mxu0 0.0
    %92 = vmatprep.subr.mxu0 0.0
    %93 = vmatpush1.msra.mxu0 0.0
    %94 = vmatprep.subr.mxu0 0.0
    %95 = vmatpush1.msra.mxu0 0.0
    %96 = vmatprep.subr.mxu0 0.0
    %97 = vmatpush1.msra.mxu0 0.0
    %98 = vmatprep.subr.mxu0 0.0
    %99 = vmatpush1.msra.mxu0 0.0
    %100 = vmatprep.subr.mxu0 0.0
    %101 = vmatpush1.msra.mxu0 0.0
    %102 = vmatprep.subr.mxu0 0.0
    %103 = vmatpush1.msra.mxu0 0.0
    %104 = vmatprep.subr.mxu0 0.0
    %105 = vmatpush1.msra.mxu0 0.0
    %106 = vmatprep.subr.mxu0 0.0
    %107 = vmatpush1.msra.mxu0 0.0
    %108 = vmatprep.subr.mxu0 0.0
    %109 = vmatpush1.msra.mxu0 0.0
    %110 = vmatprep.subr.mxu0 0.0
    %111 = vmatpush1.msra.mxu0 0.0
    %112 = vmatprep.subr.mxu0 0.0
    %113 = vmatpush1.msra.mxu0 0.0
    %114 = vmatprep.subr.mxu0 0.0
    %115 = vmatpush1.msra.mxu0 0.0
    %116 = vmatprep.subr.mxu0 0.0
    %117 = vmatpush1.msra.mxu0 0.0
    %118 = vmatprep.subr.mxu0 0.0
    %119 = vmatpush1.msra.mxu0 0.0
    %120 = vmatprep.subr.mxu0 0.0
    %121 = vmatpush1.msra.mxu0 0.0
    %122 = vmatprep.subr.mxu0 0.0
    %123 = vmatpush1.msra.mxu0 0.0
    %124 = vmatprep.subr.mxu0 0.0
    %125 = vmatpush1.msra.mxu0 0.0
    %126 = vmatprep.subr.mxu0 0.0
    %127 = vmatpush1.msra.mxu0 0.0
    %128 = vmatprep.subr.mxu0 0.0
    %129 = vmatpush1.msra.mxu0 0.0
    %130 = vmatprep.subr.mxu0 0.0
    %131 = vmatpush1.msra.mxu0 0.0
    %132 = vmatprep.subr.mxu0 0.0
    %133 = vmatpush1.msra.mxu0 0.0
    %134 = vmatprep.subr.mxu0 0.0
    %135 = vmatpush1.msra.mxu0 0.0
    %136 = vmatprep.subr.mxu0 0.0
    %137 = vmatpush1.msra.mxu0 0.0
    %138 = vmatprep.subr.mxu0 0.0
    %139 = vmatpush1.msra.mxu0 0.0
    %140 = vmatprep.subr.mxu0 0.0
    %141 = vmatpush1.msra.mxu0 0.0
    %142 = vmatprep.mubr.f32.mxu0 0.0
    %143 = vmatmul.mubr.f32.gmra.mrb[0].mxu0 %v55
    %v144 = vpop.f32.mrb[0].mxu0
    %v145 = vadd.f32 0.0, %v144
    %v146 = vpop.f32.mrb[0].mxu0
    %v147 = vadd.f32 0.0, %v146
    %148 = vmatprep.mubr.f32.mxu0 0.0
    %149 = vmatmul.mubr.f32.gmra.mrb[0].mxu0 %v58
    %v150 = vpop.f32.mrb[0].mxu0
    %v151 = vadd.f32 0.0, %v150
    %v152 = vpop.f32.mrb[0].mxu0
    %v153 = vadd.f32 0.0, %v152
    %154 = vmatprep.mubr.f32.mxu0 0.0
    %155 = vmatmul.mubr.f32.gmra.mrb[0].mxu0 %v61
    %v156 = vpop.f32.mrb[0].mxu0
    %v157 = vadd.f32 0.0, %v156
    %v158 = vpop.f32.mrb[0].mxu0
    %v159 = vadd.f32 0.0, %v158
    %160 = vmatprep.mubr.f32.mxu0 0.0
    %161 = vmatmul.mubr.f32.gmra.mrb[0].mxu0 %v64
    %v162 = vpop.f32.mrb[0].mxu0
    %v163 = vadd.f32 0.0, %v162
    %v164 = vpop.f32.mrb[0].mxu0
    %v165 = vadd.f32 0.0, %v164
    %166 = vmatprep.mubr.f32.mxu0 0.0
    %167 = vmatmul.mubr.f32.gmra.mrb[0].mxu0 %v67
    %v168 = vpop.f32.mrb[0].mxu0
    %v169 = vadd.f32 0.0, %v168
    %v170 = vpop.f32.mrb[0].mxu0
    %v171 = vadd.f32 0.0, %v170
    %172 = vmatprep.mubr.f32.mxu0 0.0
    %173 = vmatmul.mubr.f32.gmra.mrb[0].mxu0 %v70
    %v174 = vpop.f32.mrb[0].mxu0
    %v175 = vadd.f32 0.0, %v174
    %v176 = vpop.f32.mrb[0].mxu0
    %v177 = vadd.f32 0.0, %v176
    %178 = vmatprep.mubr.f32.mxu0 0.0
    %179 = vmatmul.mubr.f32.gmra.mrb[0].mxu0 %v73
    %v180 = vpop.f32.mrb[0].mxu0
    %v181 = vadd.f32 0.0, %v180
    %v182 = vpop.f32.mrb[0].mxu0
    %v183 = vadd.f32 0.0, %v182
    %184 = vmatprep.mubr.f32.mxu0 0.0
    %185 = vmatmul.mubr.f32.gmra.mrb[0].mxu0 %v76
    %v186 = vpop.f32.mrb[0].mxu0
    %v187 = vadd.f32 0.0, %v186
    %v188 = vpop.f32.mrb[0].mxu0
    %v189 = vadd.f32 0.0, %v188
    %190 = vdwg.mxu0
    %191 = vmatprep.subr.mxu0 %v48
    %192 = vmatpush1.msra.mxu0 %v47
    %193 = vmatprep.subr.mxu0 %v52
    %194 = vmatpush1.msra.mxu0 %v51
    %195 = vmatprep.subr.mxu0 0.0
    %196 = vmatpush1.msra.mxu0 0.0
    %197 = vmatprep.subr.mxu0 0.0
    %198 = vmatpush1.msra.mxu0 0.0
    %199 = vmatprep.subr.mxu0 0.0
    %200 = vmatpush1.msra.mxu0 0.0
    %201 = vmatprep.subr.mxu0 0.0
    %202 = vmatpush1.msra.mxu0 0.0
    %203 = vmatprep.subr.mxu0 0.0
    %204 = vmatpush1.msra.mxu0 0.0
    %205 = vmatprep.subr.mxu0 0.0
    %206 = vmatpush1.msra.mxu0 0.0
    %207 = vmatprep.subr.mxu0 0.0
    %208 = vmatpush1.msra.mxu0 0.0
    %209 = vmatprep.subr.mxu0 0.0
    %210 = vmatpush1.msra.mxu0 0.0
    %211 = vmatprep.subr.mxu0 0.0
    %212 = vmatpush1.msra.mxu0 0.0
    %213 = vmatprep.subr.mxu0 0.0
    %214 = vmatpush1.msra.mxu0 0.0
    %215 = vmatprep.subr.mxu0 0.0
    %216 = vmatpush1.msra.mxu0 0.0
    %217 = vmatprep.subr.mxu0 0.0
    %218 = vmatpush1.msra.mxu0 0.0
    %219 = vmatprep.subr.mxu0 0.0
    %220 = vmatpush1.msra.mxu0 0.0
    %221 = vmatprep.subr.mxu0 0.0
    %222 = vmatpush1.msra.mxu0 0.0
    %223 = vmatprep.subr.mxu0 0.0
    %224 = vmatpush1.msra.mxu0 0.0
    %225 = vmatprep.subr.mxu0 0.0
    %226 = vmatpush1.msra.mxu0 0.0
    %227 = vmatprep.subr.mxu0 0.0
    %228 = vmatpush1.msra.mxu0 0.0
    %229 = vmatprep.subr.mxu0 0.0
    %230 = vmatpush1.msra.mxu0 0.0
    %231 = vmatprep.subr.mxu0 0.0
    %232 = vmatpush1.msra.mxu0 0.0
    %233 = vmatprep.subr.mxu0 0.0
    %234 = vmatpush1.msra.mxu0 0.0
    %235 = vmatprep.subr.mxu0 0.0
    %236 = vmatpush1.msra.mxu0 0.0
    %237 = vmatprep.subr.mxu0 0.0
    %238 = vmatpush1.msra.mxu0 0.0
    %239 = vmatprep.subr.mxu0 0.0
    %240 = vmatpush1.msra.mxu0 0.0
    %241 = vmatprep.subr.mxu0 0.0
    %242 = vmatpush1.msra.mxu0 0.0
    %243 = vmatprep.subr.mxu0 0.0
    %244 = vmatpush1.msra.mxu0 0.0
    %245 = vmatprep.subr.mxu0 0.0
    %246 = vmatpush1.msra.mxu0 0.0
    %247 = vmatprep.subr.mxu0 0.0
    %248 = vmatpush1.msra.mxu0 0.0
    %249 = vmatprep.subr.mxu0 0.0
    %250 = vmatpush1.msra.mxu0 0.0
    %251 = vmatprep.subr.mxu0 0.0
    %252 = vmatpush1.msra.mxu0 0.0
    %253 = vmatprep.subr.mxu0 0.0
    %254 = vmatpush1.msra.mxu0 0.0
    %255 = vmatprep.mubr.f32.mxu0 0.0
    %256 = vmatmul.mubr.f32.gmra.mrb[0].mxu0 %v55
    %v257 = vpop.f32.mrb[0].mxu0
    %v258 = vadd.f32 0.0, %v257
    %v259 = vpop.f32.mrb[0].mxu0
    %v260 = vadd.f32 0.0, %v259
    %261 = vmatprep.mubr.f32.mxu0 0.0
    %262 = vmatmul.mubr.f32.gmra.mrb[0].mxu0 %v58
    %v263 = vpop.f32.mrb[0].mxu0
    %v264 = vadd.f32 0.0, %v263
    %v265 = vpop.f32.mrb[0].mxu0
    %v266 = vadd.f32 0.0, %v265
    %267 = vmatprep.mubr.f32.mxu0 0.0
    %268 = vmatmul.mubr.f32.gmra.mrb[0].mxu0 %v61
    %v269 = vpop.f32.mrb[0].mxu0
    %v270 = vadd.f32 0.0, %v269
    %v271 = vpop.f32.mrb[0].mxu0
    %v272 = vadd.f32 0.0, %v271
    %273 = vmatprep.mubr.f32.mxu0 0.0
    %274 = vmatmul.mubr.f32.gmra.mrb[0].mxu0 %v64
    %v275 = vpop.f32.mrb[0].mxu0
    %v276 = vadd.f32 0.0, %v275
    %v277 = vpop.f32.mrb[0].mxu0
    %v278 = vadd.f32 0.0, %v277
    %279 = vmatprep.mubr.f32.mxu0 0.0
    %280 = vmatmul.mubr.f32.gmra.mrb[0].mxu0 %v67
    %v281 = vpop.f32.mrb[0].mxu0
    %v282 = vadd.f32 0.0, %v281
    %v283 = vpop.f32.mrb[0].mxu0
    %v284 = vadd.f32 0.0, %v283
    %285 = vmatprep.mubr.f32.mxu0 0.0
    %286 = vmatmul.mubr.f32.gmra.mrb[0].mxu0 %v70
    %v287 = vpop.f32.mrb[0].mxu0
    %v288 = vadd.f32 0.0, %v287
    %v289 = vpop.f32.mrb[0].mxu0
    %v290 = vadd.f32 0.0, %v289
    %291 = vmatprep.mubr.f32.mxu0 0.0
    %292 = vmatmul.mubr.f32.gmra.mrb[0].mxu0 %v73
    %v293 = vpop.f32.mrb[0].mxu0
    %v294 = vadd.f32 0.0, %v293
    %v295 = vpop.f32.mrb[0].mxu0
    %v296 = vadd.f32 0.0, %v295
    %297 = vmatprep.mubr.f32.mxu0 0.0
    %298 = vmatmul.mubr.f32.gmra.mrb[0].mxu0 %v76
    %v299 = vpop.f32.mrb[0].mxu0
    %v300 = vadd.f32 0.0, %v299
    %v301 = vpop.f32.mrb[0].mxu0
    %v302 = vadd.f32 0.0, %v301
    %303 = vdwg.mxu0
    %304 = vst [vmem:[#allocation2] sm:$0xff] %v145
    %305 = vst [vmem:[#allocation2 + $0x8] sm:$0xff] %v147
    %306 = vst [vmem:[#allocation2 + $0x10] sm:$0xff] %v258
    %307 = vst [vmem:[#allocation2 + $0x18] sm:$0xff] %v260
    %308 = vst [vmem:[#allocation2 + $0x20] sm:$0xff] %v151
    %309 = vst [vmem:[#allocation2 + $0x28] sm:$0xff] %v153
    %310 = vst [vmem:[#allocation2 + $0x30] sm:$0xff] %v264
    %311 = vst [vmem:[#allocation2 + $0x38] sm:$0xff] %v266
    %312 = vst [vmem:[#allocation2 + $0x40] sm:$0xff] %v157
    %313 = vst [vmem:[#allocation2 + $0x48] sm:$0xff] %v159
    %314 = vst [vmem:[#allocation2 + $0x50] sm:$0xff] %v270
    %315 = vst [vmem:[#allocation2 + $0x58] sm:$0xff] %v272
    %316 = vst [vmem:[#allocation2 + $0x60] sm:$0xff] %v163
    %317 = vst [vmem:[#allocation2 + $0x68] sm:$0xff] %v165
    %318 = vst [vmem:[#allocation2 + $0x70] sm:$0xff] %v276
    %319 = vst [vmem:[#allocation2 + $0x78] sm:$0xff] %v278
    %320 = vst [vmem:[#allocation2 + $0x80] sm:$0xff] %v169
    %321 = vst [vmem:[#allocation2 + $0x88] sm:$0xff] %v171
    %322 = vst [vmem:[#allocation2 + $0x90] sm:$0xff] %v282
    %323 = vst [vmem:[#allocation2 + $0x98] sm:$0xff] %v284
    %324 = vst [vmem:[#allocation2 + $0xa0] sm:$0xff] %v175
    %325 = vst [vmem:[#allocation2 + $0xa8] sm:$0xff] %v177
    %326 = vst [vmem:[#allocation2 + $0xb0] sm:$0xff] %v288
    %327 = vst [vmem:[#allocation2 + $0xb8] sm:$0xff] %v290
    %328 = vst [vmem:[#allocation2 + $0xc0] sm:$0xff] %v181
    %329 = vst [vmem:[#allocation2 + $0xc8] sm:$0xff] %v183
    %330 = vst [vmem:[#allocation2 + $0xd0] sm:$0xff] %v294
    %331 = vst [vmem:[#allocation2 + $0xd8] sm:$0xff] %v296
    %332 = vst [vmem:[#allocation2 + $0xe0] sm:$0xff] %v187
    %333 = vst [vmem:[#allocation2 + $0xe8] sm:$0xff] %v189
    %334 = vst [vmem:[#allocation2 + $0xf0] sm:$0xff] %v300
    %335 = vst [vmem:[#allocation2 + $0xf8] sm:$0xff] %v302
    %v336 = vld [vmem:[#allocation3] sm:$0xff]
    %v337 = vld [vmem:[#allocation3 + $0x8] sm:$0xff]
    %v338 = vld [vmem:[#allocation3 + $0x10] sm:$0xff]
    %v339 = vld [vmem:[#allocation3 + $0x18] sm:$0xff]
    %v340 = vld [vmem:[#allocation3 + $0x20] sm:$0xff]
    %v341 = vld [vmem:[#allocation3 + $0x28] sm:$0xff]
    %v342 = vld [vmem:[#allocation3 + $0x30] sm:$0xff]
    %v343 = vld [vmem:[#allocation3 + $0x38] sm:$0xff]
    %v344 = vld [vmem:[#allocation3 + $0x40] sm:$0xff]
    %v345 = vld [vmem:[#allocation3 + $0x48] sm:$0xff]
    %v346 = vld [vmem:[#allocation3 + $0x50] sm:$0xff]
    %v347 = vld [vmem:[#allocation3 + $0x58] sm:$0xff]
    %v348 = vld [vmem:[#allocation3 + $0x60] sm:$0xff]
    %v349 = vld [vmem:[#allocation3 + $0x68] sm:$0xff]
    %v350 = vld [vmem:[#allocation3 + $0x70] sm:$0xff]
    %v351 = vld [vmem:[#allocation3 + $0x78] sm:$0xff]
    %v352 = vld [vmem:[#allocation3 + $0x80] sm:$0xff]
    %v353 = vld [vmem:[#allocation3 + $0x88] sm:$0xff]
    %v354 = vld [vmem:[#allocation3 + $0x90] sm:$0xff]
    %v355 = vld [vmem:[#allocation3 + $0x98] sm:$0xff]
    %v356 = vld [vmem:[#allocation3 + $0xa0] sm:$0xff]
    %v357 = vld [vmem:[#allocation3 + $0xa8] sm:$0xff]
    %v358 = vld [vmem:[#allocation3 + $0xb0] sm:$0xff]
    %v359 = vld [vmem:[#allocation3 + $0xb8] sm:$0xff]
    %v360 = vld [vmem:[#allocation3 + $0xc0] sm:$0xff]
    %v361 = vld [vmem:[#allocation3 + $0xc8] sm:$0xff]
    %v362 = vld [vmem:[#allocation3 + $0xd0] sm:$0xff]
    %v363 = vld [vmem:[#allocation3 + $0xd8] sm:$0xff]
    %v364 = vld [vmem:[#allocation3 + $0xe0] sm:$0xff]
    %v365 = vld [vmem:[#allocation3 + $0xe8] sm:$0xff]
    %v366 = vld [vmem:[#allocation3 + $0xf0] sm:$0xff]
    %v367 = vld [vmem:[#allocation3 + $0xf8] sm:$0xff]
    %v368 = vld [vmem:[#allocation3 + $0x100] sm:$0xff]
    %v369 = vld [vmem:[#allocation3 + $0x108] sm:$0xff]
    %v370 = vld [vmem:[#allocation3 + $0x110] sm:$0xff]
    %v371 = vld [vmem:[#allocation3 + $0x118] sm:$0xff]
    %v372 = vld [vmem:[#allocation3 + $0x120] sm:$0xff]
    %v373 = vld [vmem:[#allocation3 + $0x128] sm:$0xff]
    %v374 = vld [vmem:[#allocation3 + $0x130] sm:$0xff]
    %v375 = vld [vmem:[#allocation3 + $0x138] sm:$0xff]
    %v376 = vld [vmem:[#allocation3 + $0x140] sm:$0xff]
    %v377 = vld [vmem:[#allocation3 + $0x148] sm:$0xff]
    %v378 = vld [vmem:[#allocation3 + $0x150] sm:$0xff]
    %v379 = vld [vmem:[#allocation3 + $0x158] sm:$0xff]
    %v380 = vld [vmem:[#allocation3 + $0x160] sm:$0xff]
    %v381 = vld [vmem:[#allocation3 + $0x168] sm:$0xff]
    %v382 = vld [vmem:[#allocation3 + $0x170] sm:$0xff]
    %v383 = vld [vmem:[#allocation3 + $0x178] sm:$0xff]
    %v384 = vld [vmem:[#allocation3 + $0x180] sm:$0xff]
    %v385 = vld [vmem:[#allocation3 + $0x188] sm:$0xff]
    %v386 = vld [vmem:[#allocation3 + $0x190] sm:$0xff]
    %v387 = vld [vmem:[#allocation3 + $0x198] sm:$0xff]
    %v388 = vld [vmem:[#allocation3 + $0x1a0] sm:$0xff]
    %v389 = vld [vmem:[#allocation3 + $0x1a8] sm:$0xff]
    %v390 = vld [vmem:[#allocation3 + $0x1b0] sm:$0xff]
    %v391 = vld [vmem:[#allocation3 + $0x1b8] sm:$0xff]
    %v392 = vld [vmem:[#allocation3 + $0x1c0] sm:$0xff]
    %v393 = vld [vmem:[#allocation3 + $0x1c8] sm:$0xff]
    %v394 = vld [vmem:[#allocation3 + $0x1d0] sm:$0xff]
    %v395 = vld [vmem:[#allocation3 + $0x1d8] sm:$0xff]
    %v396 = vld [vmem:[#allocation3 + $0x1e0] sm:$0xff]
    %v397 = vld [vmem:[#allocation3 + $0x1e8] sm:$0xff]
    %v398 = vld [vmem:[#allocation3 + $0x1f0] sm:$0xff]
    %v399 = vld [vmem:[#allocation3 + $0x1f8] sm:$0xff]
    %v400 = vld [vmem:[#allocation3 + $0x200] sm:$0xff]
    %v401 = vld [vmem:[#allocation3 + $0x208] sm:$0xff]
    %v402 = vld [vmem:[#allocation3 + $0x210] sm:$0xff]
    %v403 = vld [vmem:[#allocation3 + $0x218] sm:$0xff]
    %v404 = vld [vmem:[#allocation3 + $0x220] sm:$0xff]
    %v405 = vld [vmem:[#allocation3 + $0x228] sm:$0xff]
    %v406 = vld [vmem:[#allocation3 + $0x230] sm:$0xff]
    %v407 = vld [vmem:[#allocation3 + $0x238] sm:$0xff]
    %v408 = vld [vmem:[#allocation3 + $0x240] sm:$0xff]
    %v409 = vld [vmem:[#allocation3 + $0x248] sm:$0xff]
    %v410 = vld [vmem:[#allocation3 + $0x250] sm:$0xff]
    %v411 = vld [vmem:[#allocation3 + $0x258] sm:$0xff]
    %v412 = vld [vmem:[#allocation3 + $0x260] sm:$0xff]
    %v413 = vld [vmem:[#allocation3 + $0x268] sm:$0xff]
    %v414 = vld [vmem:[#allocation3 + $0x270] sm:$0xff]
    %v415 = vld [vmem:[#allocation3 + $0x278] sm:$0xff]
    %v416 = vld [vmem:[#allocation3 + $0x280] sm:$0xff]
    %v417 = vld [vmem:[#allocation3 + $0x288] sm:$0xff]
    %v418 = vld [vmem:[#allocation3 + $0x290] sm:$0xff]
    %v419 = vld [vmem:[#allocation3 + $0x298] sm:$0xff]
    %v420 = vld [vmem:[#allocation3 + $0x2a0] sm:$0xff]
    %v421 = vld [vmem:[#allocation3 + $0x2a8] sm:$0xff]
    %v422 = vld [vmem:[#allocation3 + $0x2b0] sm:$0xff]
    %v423 = vld [vmem:[#allocation3 + $0x2b8] sm:$0xff]
    %v424 = vld [vmem:[#allocation3 + $0x2c0] sm:$0xff]
    %v425 = vld [vmem:[#allocation3 + $0x2c8] sm:$0xff]
    %v426 = vld [vmem:[#allocation3 + $0x2d0] sm:$0xff]
    %v427 = vld [vmem:[#allocation3 + $0x2d8] sm:$0xff]
    %v428 = vld [vmem:[#allocation3 + $0x2e0] sm:$0xff]
    %v429 = vld [vmem:[#allocation3 + $0x2e8] sm:$0xff]
    %v430 = vld [vmem:[#allocation3 + $0x2f0] sm:$0xff]
    %v431 = vld [vmem:[#allocation3 + $0x2f8] sm:$0xff]
    %v432 = vld [vmem:[#allocation3 + $0x300] sm:$0xff]
    %v433 = vld [vmem:[#allocation3 + $0x308] sm:$0xff]
    %v434 = vld [vmem:[#allocation3 + $0x310] sm:$0xff]
    %v435 = vld [vmem:[#allocation3 + $0x318] sm:$0xff]
    %v436 = vld [vmem:[#allocation3 + $0x320] sm:$0xff]
    %v437 = vld [vmem:[#allocation3 + $0x328] sm:$0xff]
    %v438 = vld [vmem:[#allocation3 + $0x330] sm:$0xff]
    %v439 = vld [vmem:[#allocation3 + $0x338] sm:$0xff]
    %v440 = vld [vmem:[#allocation3 + $0x340] sm:$0xff]
    %v441 = vld [vmem:[#allocation3 + $0x348] sm:$0xff]
    %v442 = vld [vmem:[#allocation3 + $0x350] sm:$0xff]
    %v443 = vld [vmem:[#allocation3 + $0x358] sm:$0xff]
    %v444 = vld [vmem:[#allocation3 + $0x360] sm:$0xff]
    %v445 = vld [vmem:[#allocation3 + $0x368] sm:$0xff]
    %v446 = vld [vmem:[#allocation3 + $0x370] sm:$0xff]
    %v447 = vld [vmem:[#allocation3 + $0x378] sm:$0xff]
    %v448 = vld [vmem:[#allocation3 + $0x380] sm:$0xff]
    %v449 = vld [vmem:[#allocation3 + $0x388] sm:$0xff]
    %v450 = vld [vmem:[#allocation3 + $0x390] sm:$0xff]
    %v451 = vld [vmem:[#allocation3 + $0x398] sm:$0xff]
    %v452 = vld [vmem:[#allocation3 + $0x3a0] sm:$0xff]
    %v453 = vld [vmem:[#allocation3 + $0x3a8] sm:$0xff]
    %v454 = vld [vmem:[#allocation3 + $0x3b0] sm:$0xff]
    %v455 = vld [vmem:[#allocation3 + $0x3b8] sm:$0xff]
    %v456 = vld [vmem:[#allocation3 + $0x3c0] sm:$0xff]
    %v457 = vld [vmem:[#allocation3 + $0x3c8] sm:$0xff]
    %v458 = vld [vmem:[#allocation3 + $0x3d0] sm:$0xff]
    %v459 = vld [vmem:[#allocation3 + $0x3d8] sm:$0xff]
    %v460 = vld [vmem:[#allocation3 + $0x3e0] sm:$0xff]
    %v461 = vld [vmem:[#allocation3 + $0x3e8] sm:$0xff]
    %v462 = vld [vmem:[#allocation3 + $0x3f0] sm:$0xff]
    %v463 = vld [vmem:[#allocation3 + $0x3f8] sm:$0xff]
    %v464 = vld [vmem:[#allocation3 + $0x400] sm:$0xff]
    %v465 = vld [vmem:[#allocation3 + $0x408] sm:$0xff]
    %v466 = vld [vmem:[#allocation3 + $0x410] sm:$0xff]
    %v467 = vld [vmem:[#allocation3 + $0x418] sm:$0xff]
    %v468 = vld [vmem:[#allocation3 + $0x420] sm:$0xff]
    %v469 = vld [vmem:[#allocation3 + $0x428] sm:$0xff]
    %v470 = vld [vmem:[#allocation3 + $0x430] sm:$0xff]
    %v471 = vld [vmem:[#allocation3 + $0x438] sm:$0xff]
    %v472 = vld [vmem:[#allocation3 + $0x440] sm:$0xff]
    %v473 = vld [vmem:[#allocation3 + $0x448] sm:$0xff]
    %v474 = vld [vmem:[#allocation3 + $0x450] sm:$0xff]
    %v475 = vld [vmem:[#allocation3 + $0x458] sm:$0xff]
    %v476 = vld [vmem:[#allocation3 + $0x460] sm:$0xff]
    %v477 = vld [vmem:[#allocation3 + $0x468] sm:$0xff]
    %v478 = vld [vmem:[#allocation3 + $0x470] sm:$0xff]
    %v479 = vld [vmem:[#allocation3 + $0x478] sm:$0xff]
    %v480 = vld [vmem:[#allocation3 + $0x480] sm:$0xff]
    %v481 = vld [vmem:[#allocation3 + $0x488] sm:$0xff]
    %v482 = vld [vmem:[#allocation3 + $0x490] sm:$0xff]
    %v483 = vld [vmem:[#allocation3 + $0x498] sm:$0xff]
    %v484 = vld [vmem:[#allocation3 + $0x4a0] sm:$0xff]
    %v485 = vld [vmem:[#allocation3 + $0x4a8] sm:$0xff]
    %v486 = vld [vmem:[#allocation3 + $0x4b0] sm:$0xff]
    %v487 = vld [vmem:[#allocation3 + $0x4b8] sm:$0xff]
    %v488 = vld [vmem:[#allocation3 + $0x4c0] sm:$0xff]
    %v489 = vld [vmem:[#allocation3 + $0x4c8] sm:$0xff]
    %v490 = vld [vmem:[#allocation3 + $0x4d0] sm:$0xff]
    %v491 = vld [vmem:[#allocation3 + $0x4d8] sm:$0xff]
    %v492 = vld [vmem:[#allocation3 + $0x4e0] sm:$0xff]
    %v493 = vld [vmem:[#allocation3 + $0x4e8] sm:$0xff]
    %v494 = vld [vmem:[#allocation3 + $0x4f0] sm:$0xff]
    %v495 = vld [vmem:[#allocation3 + $0x4f8] sm:$0xff]
    %v496 = vld [vmem:[#allocation3 + $0x500] sm:$0xff]
    %v497 = vld [vmem:[#allocation3 + $0x508] sm:$0xff]
    %v498 = vld [vmem:[#allocation3 + $0x510] sm:$0xff]
    %v499 = vld [vmem:[#allocation3 + $0x518] sm:$0xff]
    %v500 = vld [vmem:[#allocation3 + $0x520] sm:$0xff]
    %v501 = vld [vmem:[#allocation3 + $0x528] sm:$0xff]
    %v502 = vld [vmem:[#allocation3 + $0x530] sm:$0xff]
    %v503 = vld [vmem:[#allocation3 + $0x538] sm:$0xff]
    %v504 = vld [vmem:[#allocation3 + $0x540] sm:$0xff]
    %v505 = vld [vmem:[#allocation3 + $0x548] sm:$0xff]
    %v506 = vld [vmem:[#allocation3 + $0x550] sm:$0xff]
    %v507 = vld [vmem:[#allocation3 + $0x558] sm:$0xff]
    %v508 = vld [vmem:[#allocation3 + $0x560] sm:$0xff]
    %v509 = vld [vmem:[#allocation3 + $0x568] sm:$0xff]
    %v510 = vld [vmem:[#allocation3 + $0x570] sm:$0xff]
    %v511 = vld [vmem:[#allocation3 + $0x578] sm:$0xff]
    %v512 = vld [vmem:[#allocation3 + $0x580] sm:$0xff]
    %v513 = vld [vmem:[#allocation3 + $0x588] sm:$0xff]
    %v514 = vld [vmem:[#allocation3 + $0x590] sm:$0xff]
    %v515 = vld [vmem:[#allocation3 + $0x598] sm:$0xff]
    %v516 = vld [vmem:[#allocation3 + $0x5a0] sm:$0xff]
    %v517 = vld [vmem:[#allocation3 + $0x5a8] sm:$0xff]
    %v518 = vld [vmem:[#allocation3 + $0x5b0] sm:$0xff]
    %v519 = vld [vmem:[#allocation3 + $0x5b8] sm:$0xff]
    %v520 = vld [vmem:[#allocation3 + $0x5c0] sm:$0xff]
    %v521 = vld [vmem:[#allocation3 + $0x5c8] sm:$0xff]
    %v522 = vld [vmem:[#allocation3 + $0x5d0] sm:$0xff]
    %v523 = vld [vmem:[#allocation3 + $0x5d8] sm:$0xff]
    %v524 = vld [vmem:[#allocation3 + $0x5e0] sm:$0xff]
    %v525 = vld [vmem:[#allocation3 + $0x5e8] sm:$0xff]
    %v526 = vld [vmem:[#allocation3 + $0x5f0] sm:$0xff]
    %v527 = vld [vmem:[#allocation3 + $0x5f8] sm:$0xff]
    %v528 = vld [vmem:[#allocation3 + $0x600] sm:$0xff]
    %v529 = vld [vmem:[#allocation3 + $0x608] sm:$0xff]
    %v530 = vld [vmem:[#allocation3 + $0x610] sm:$0xff]
    %v531 = vld [vmem:[#allocation3 + $0x618] sm:$0xff]
    %v532 = vld [vmem:[#allocation3 + $0x620] sm:$0xff]
    %v533 = vld [vmem:[#allocation3 + $0x628] sm:$0xff]
    %v534 = vld [vmem:[#allocation3 + $0x630] sm:$0xff]
    %v535 = vld [vmem:[#allocation3 + $0x638] sm:$0xff]
    %v536 = vld [vmem:[#allocation3 + $0x640] sm:$0xff]
    %v537 = vld [vmem:[#allocation3 + $0x648] sm:$0xff]
    %v538 = vld [vmem:[#allocation3 + $0x650] sm:$0xff]
    %v539 = vld [vmem:[#allocation3 + $0x658] sm:$0xff]
    %v540 = vld [vmem:[#allocation3 + $0x660] sm:$0xff]
    %v541 = vld [vmem:[#allocation3 + $0x668] sm:$0xff]
    %v542 = vld [vmem:[#allocation3 + $0x670] sm:$0xff]
    %v543 = vld [vmem:[#allocation3 + $0x678] sm:$0xff]
    %v544 = vld [vmem:[#allocation3 + $0x680] sm:$0xff]
    %v545 = vld [vmem:[#allocation3 + $0x688] sm:$0xff]
    %v546 = vld [vmem:[#allocation3 + $0x690] sm:$0xff]
    %v547 = vld [vmem:[#allocation3 + $0x698] sm:$0xff]
    %v548 = vld [vmem:[#allocation3 + $0x6a0] sm:$0xff]
    %v549 = vld [vmem:[#allocation3 + $0x6a8] sm:$0xff]
    %v550 = vld [vmem:[#allocation3 + $0x6b0] sm:$0xff]
    %v551 = vld [vmem:[#allocation3 + $0x6b8] sm:$0xff]
    %v552 = vld [vmem:[#allocation3 + $0x6c0] sm:$0xff]
    %v553 = vld [vmem:[#allocation3 + $0x6c8] sm:$0xff]
    %v554 = vld [vmem:[#allocation3 + $0x6d0] sm:$0xff]
    %v555 = vld [vmem:[#allocation3 + $0x6d8] sm:$0xff]
    %v556 = vld [vmem:[#allocation3 + $0x6e0] sm:$0xff]
    %v557 = vld [vmem:[#allocation3 + $0x6e8] sm:$0xff]
    %v558 = vld [vmem:[#allocation3 + $0x6f0] sm:$0xff]
    %v559 = vld [vmem:[#allocation3 + $0x6f8] sm:$0xff]
    %v560 = vld [vmem:[#allocation3 + $0x700] sm:$0xff]
    %v561 = vld [vmem:[#allocation3 + $0x708] sm:$0xff]
    %v562 = vld [vmem:[#allocation3 + $0x710] sm:$0xff]
    %v563 = vld [vmem:[#allocation3 + $0x718] sm:$0xff]
    %v564 = vld [vmem:[#allocation3 + $0x720] sm:$0xff]
    %v565 = vld [vmem:[#allocation3 + $0x728] sm:$0xff]
    %v566 = vld [vmem:[#allocation3 + $0x730] sm:$0xff]
    %v567 = vld [vmem:[#allocation3 + $0x738] sm:$0xff]
    %v568 = vld [vmem:[#allocation3 + $0x740] sm:$0xff]
    %v569 = vld [vmem:[#allocation3 + $0x748] sm:$0xff]
    %v570 = vld [vmem:[#allocation3 + $0x750] sm:$0xff]
    %v571 = vld [vmem:[#allocation3 + $0x758] sm:$0xff]
    %v572 = vld [vmem:[#allocation3 + $0x760] sm:$0xff]
    %v573 = vld [vmem:[#allocation3 + $0x768] sm:$0xff]
    %v574 = vld [vmem:[#allocation3 + $0x770] sm:$0xff]
    %v575 = vld [vmem:[#allocation3 + $0x778] sm:$0xff]
    %v576 = vld [vmem:[#allocation3 + $0x780] sm:$0xff]
    %v577 = vld [vmem:[#allocation3 + $0x788] sm:$0xff]
    %v578 = vld [vmem:[#allocation3 + $0x790] sm:$0xff]
    %v579 = vld [vmem:[#allocation3 + $0x798] sm:$0xff]
    %v580 = vld [vmem:[#allocation3 + $0x7a0] sm:$0xff]
    %v581 = vld [vmem:[#allocation3 + $0x7a8] sm:$0xff]
    %v582 = vld [vmem:[#allocation3 + $0x7b0] sm:$0xff]
    %v583 = vld [vmem:[#allocation3 + $0x7b8] sm:$0xff]
    %v584 = vld [vmem:[#allocation3 + $0x7c0] sm:$0xff]
    %v585 = vld [vmem:[#allocation3 + $0x7c8] sm:$0xff]
    %v586 = vld [vmem:[#allocation3 + $0x7d0] sm:$0xff]
    %v587 = vld [vmem:[#allocation3 + $0x7d8] sm:$0xff]
    %v588 = vld [vmem:[#allocation3 + $0x7e0] sm:$0xff]
    %v589 = vld [vmem:[#allocation3 + $0x7e8] sm:$0xff]
    %v590 = vld [vmem:[#allocation3 + $0x7f0] sm:$0xff]
    %v591 = vld [vmem:[#allocation3 + $0x7f8] sm:$0xff]
    %v592 = vld [vmem:[%s3] sm:$0xf]
    %v593 = vlaneseq
    %v594 = vand.u32 %v593, 127
    %v595 = vadd.s32 %v594, 128
    %v596 = vadd.s32 %v594, 256
    %v597 = vadd.s32 %v594, 384
    %vm598 = vcmp.lt.s32.totalorder %v594, 32
    %vm599 = vcmp.lt.s32.totalorder %v595, 32
    %vm600 = vcmp.lt.s32.totalorder %v596, 32
    %vm601 = vcmp.lt.s32.totalorder %v597, 32
    %v603 = vlaneseq
    %v604 = vshrl.u32 %v603, 7
    %v605 = vsub.s32 0, %v604
    %v606 = vrot.slane %v592, %v605
    %v607 = vlaneseq
    %v608 = vshrl.u32 %v607, 7
    %v609 = vsub.s32 1, %v608
    %v610 = vrot.slane %v592, %v609
    %v611 = vlaneseq
    %v612 = vshrl.u32 %v611, 7
    %v613 = vsub.s32 2, %v612
    %v614 = vrot.slane %v592, %v613
    %v615 = vlaneseq
    %v616 = vshrl.u32 %v615, 7
    %v617 = vsub.s32 3, %v616
    %v618 = vrot.slane %v592, %v617
    %v623 = vsel %vm598, %v606, 0.0
    %v624 = vsel %vm599, %v610, 0.0
    %v625 = vsel %vm600, %v614, 0.0
    %v626 = vsel %vm601, %v618, 0.0
    %v627 = vlaneseq
    %v628 = vshrl.u32 %v627, 7
    %v629 = vsub.s32 0, %v628
    %v630 = vrot.slane %v623, %v629
    %v631 = vlaneseq
    %v632 = vshrl.u32 %v631, 7
    %v633 = vsub.s32 0, %v632
    %v634 = vrot.slane %v624, %v633
    %v635 = vlaneseq
    %v636 = vshrl.u32 %v635, 7
    %v637 = vsub.s32 0, %v636
    %v638 = vrot.slane %v625, %v637
    %v639 = vlaneseq
    %v640 = vshrl.u32 %v639, 7
    %v641 = vsub.s32 0, %v640
    %v642 = vrot.slane %v626, %v641
    %643 = vmatprep.subr.mxu0 %v337
    %644 = vmatpush1.msra.mxu0 %v336
    %645 = vmatprep.subr.mxu0 %v341
    %646 = vmatpush1.msra.mxu0 %v340
    %647 = vmatprep.subr.mxu0 %v345
    %648 = vmatpush1.msra.mxu0 %v344
    %649 = vmatprep.subr.mxu0 %v349
    %650 = vmatpush1.msra.mxu0 %v348
    %651 = vmatprep.subr.mxu0 %v353
    %652 = vmatpush1.msra.mxu0 %v352
    %653 = vmatprep.subr.mxu0 %v357
    %654 = vmatpush1.msra.mxu0 %v356
    %655 = vmatprep.subr.mxu0 %v361
    %656 = vmatpush1.msra.mxu0 %v360
    %657 = vmatprep.subr.mxu0 %v365
    %658 = vmatpush1.msra.mxu0 %v364
    %659 = vmatprep.subr.mxu0 %v369
    %660 = vmatpush1.msra.mxu0 %v368
    %661 = vmatprep.subr.mxu0 %v373
    %662 = vmatpush1.msra.mxu0 %v372
    %663 = vmatprep.subr.mxu0 %v377
    %664 = vmatpush1.msra.mxu0 %v376
    %665 = vmatprep.subr.mxu0 %v381
    %666 = vmatpush1.msra.mxu0 %v380
    %667 = vmatprep.subr.mxu0 %v385
    %668 = vmatpush1.msra.mxu0 %v384
    %669 = vmatprep.subr.mxu0 %v389
    %670 = vmatpush1.msra.mxu0 %v388
    %671 = vmatprep.subr.mxu0 %v393
    %672 = vmatpush1.msra.mxu0 %v392
    %673 = vmatprep.subr.mxu0 %v397
    %674 = vmatpush1.msra.mxu0 %v396
    %675 = vmatprep.subr.mxu0 %v401
    %676 = vmatpush1.msra.mxu0 %v400
    %677 = vmatprep.subr.mxu0 %v405
    %678 = vmatpush1.msra.mxu0 %v404
    %679 = vmatprep.subr.mxu0 %v409
    %680 = vmatpush1.msra.mxu0 %v408
    %681 = vmatprep.subr.mxu0 %v413
    %682 = vmatpush1.msra.mxu0 %v412
    %683 = vmatprep.subr.mxu0 %v417
    %684 = vmatpush1.msra.mxu0 %v416
    %685 = vmatprep.subr.mxu0 %v421
    %686 = vmatpush1.msra.mxu0 %v420
    %687 = vmatprep.subr.mxu0 %v425
    %688 = vmatpush1.msra.mxu0 %v424
    %689 = vmatprep.subr.mxu0 %v429
    %690 = vmatpush1.msra.mxu0 %v428
    %691 = vmatprep.subr.mxu0 %v433
    %692 = vmatpush1.msra.mxu0 %v432
    %693 = vmatprep.subr.mxu0 %v437
    %694 = vmatpush1.msra.mxu0 %v436
    %695 = vmatprep.subr.mxu0 %v441
    %696 = vmatpush1.msra.mxu0 %v440
    %697 = vmatprep.subr.mxu0 %v445
    %698 = vmatpush1.msra.mxu0 %v444
    %699 = vmatprep.subr.mxu0 %v449
    %700 = vmatpush1.msra.mxu0 %v448
    %701 = vmatprep.subr.mxu0 %v453
    %702 = vmatpush1.msra.mxu0 %v452
    %703 = vmatprep.subr.mxu0 %v457
    %704 = vmatpush1.msra.mxu0 %v456
    %705 = vmatprep.subr.mxu0 %v461
    %706 = vmatpush1.msra.mxu0 %v460
    %707 = vmatprep.mubr.f32.mxu0 0.0
    %708 = vmatmul.mubr.f32.gmra.mrb[0].mxu0 0.0
    %v709 = vpop.f32.mrb[0].mxu0
    %v710 = vadd.f32 %v630, %v709
    %v711 = vpop.f32.mrb[0].mxu0
    %v712 = vadd.f32 %v634, %v711
    %713 = vdwg.mxu0
    %714 = vmatprep.subr.mxu0 %v465
    %715 = vmatpush1.msra.mxu0 %v464
    %716 = vmatprep.subr.mxu0 %v469
    %717 = vmatpush1.msra.mxu0 %v468
    %718 = vmatprep.subr.mxu0 %v473
    %719 = vmatpush1.msra.mxu0 %v472
    %720 = vmatprep.subr.mxu0 %v477
    %721 = vmatpush1.msra.mxu0 %v476
    %722 = vmatprep.subr.mxu0 %v481
    %723 = vmatpush1.msra.mxu0 %v480
    %724 = vmatprep.subr.mxu0 %v485
    %725 = vmatpush1.msra.mxu0 %v484
    %726 = vmatprep.subr.mxu0 %v489
    %727 = vmatpush1.msra.mxu0 %v488
    %728 = vmatprep.subr.mxu0 %v493
    %729 = vmatpush1.msra.mxu0 %v492
    %730 = vmatprep.subr.mxu0 %v497
    %731 = vmatpush1.msra.mxu0 %v496
    %732 = vmatprep.subr.mxu0 %v501
    %733 = vmatpush1.msra.mxu0 %v500
    %734 = vmatprep.subr.mxu0 %v505
    %735 = vmatpush1.msra.mxu0 %v504
    %736 = vmatprep.subr.mxu0 %v509
    %737 = vmatpush1.msra.mxu0 %v508
    %738 = vmatprep.subr.mxu0 %v513
    %739 = vmatpush1.msra.mxu0 %v512
    %740 = vmatprep.subr.mxu0 %v517
    %741 = vmatpush1.msra.mxu0 %v516
    %742 = vmatprep.subr.mxu0 %v521
    %743 = vmatpush1.msra.mxu0 %v520
    %744 = vmatprep.subr.mxu0 %v525
    %745 = vmatpush1.msra.mxu0 %v524
    %746 = vmatprep.subr.mxu0 %v529
    %747 = vmatpush1.msra.mxu0 %v528
    %748 = vmatprep.subr.mxu0 %v533
    %749 = vmatpush1.msra.mxu0 %v532
    %750 = vmatprep.subr.mxu0 %v537
    %751 = vmatpush1.msra.mxu0 %v536
    %752 = vmatprep.subr.mxu0 %v541
    %753 = vmatpush1.msra.mxu0 %v540
    %754 = vmatprep.subr.mxu0 %v545
    %755 = vmatpush1.msra.mxu0 %v544
    %756 = vmatprep.subr.mxu0 %v549
    %757 = vmatpush1.msra.mxu0 %v548
    %758 = vmatprep.subr.mxu0 %v553
    %759 = vmatpush1.msra.mxu0 %v552
    %760 = vmatprep.subr.mxu0 %v557
    %761 = vmatpush1.msra.mxu0 %v556
    %762 = vmatprep.subr.mxu0 %v561
    %763 = vmatpush1.msra.mxu0 %v560
    %764 = vmatprep.subr.mxu0 %v565
    %765 = vmatpush1.msra.mxu0 %v564
    %766 = vmatprep.subr.mxu0 %v569
    %767 = vmatpush1.msra.mxu0 %v568
    %768 = vmatprep.subr.mxu0 %v573
    %769 = vmatpush1.msra.mxu0 %v572
    %770 = vmatprep.subr.mxu0 %v577
    %771 = vmatpush1.msra.mxu0 %v576
    %772 = vmatprep.subr.mxu0 %v581
    %773 = vmatpush1.msra.mxu0 %v580
    %774 = vmatprep.subr.mxu0 %v585
    %775 = vmatpush1.msra.mxu0 %v584
    %776 = vmatprep.subr.mxu0 %v589
    %777 = vmatpush1.msra.mxu0 %v588
    %778 = vmatprep.mubr.f32.mxu0 0.0
    %779 = vmatmul.mubr.f32.gmra.mrb[0].mxu0 0.0
    %v780 = vpop.f32.mrb[0].mxu0
    %v781 = vadd.f32 %v710, %v780
    %v782 = vpop.f32.mrb[0].mxu0
    %v783 = vadd.f32 %v712, %v782
    %784 = vdwg.mxu0
    %785 = vmatprep.subr.mxu0 %v339
    %786 = vmatpush1.msra.mxu0 %v338
    %787 = vmatprep.subr.mxu0 %v343
    %788 = vmatpush1.msra.mxu0 %v342
    %789 = vmatprep.subr.mxu0 %v347
    %790 = vmatpush1.msra.mxu0 %v346
    %791 = vmatprep.subr.mxu0 %v351
    %792 = vmatpush1.msra.mxu0 %v350
    %793 = vmatprep.subr.mxu0 %v355
    %794 = vmatpush1.msra.mxu0 %v354
    %795 = vmatprep.subr.mxu0 %v359
    %796 = vmatpush1.msra.mxu0 %v358
    %797 = vmatprep.subr.mxu0 %v363
    %798 = vmatpush1.msra.mxu0 %v362
    %799 = vmatprep.subr.mxu0 %v367
    %800 = vmatpush1.msra.mxu0 %v366
    %801 = vmatprep.subr.mxu0 %v371
    %802 = vmatpush1.msra.mxu0 %v370
    %803 = vmatprep.subr.mxu0 %v375
    %804 = vmatpush1.msra.mxu0 %v374
    %805 = vmatprep.subr.mxu0 %v379
    %806 = vmatpush1.msra.mxu0 %v378
    %807 = vmatprep.subr.mxu0 %v383
    %808 = vmatpush1.msra.mxu0 %v382
    %809 = vmatprep.subr.mxu0 %v387
    %810 = vmatpush1.msra.mxu0 %v386
    %811 = vmatprep.subr.mxu0 %v391
    %812 = vmatpush1.msra.mxu0 %v390
    %813 = vmatprep.subr.mxu0 %v395
    %814 = vmatpush1.msra.mxu0 %v394
    %815 = vmatprep.subr.mxu0 %v399
    %816 = vmatpush1.msra.mxu0 %v398
    %817 = vmatprep.subr.mxu0 %v403
    %818 = vmatpush1.msra.mxu0 %v402
    %819 = vmatprep.subr.mxu0 %v407
    %820 = vmatpush1.msra.mxu0 %v406
    %821 = vmatprep.subr.mxu0 %v411
    %822 = vmatpush1.msra.mxu0 %v410
    %823 = vmatprep.subr.mxu0 %v415
    %824 = vmatpush1.msra.mxu0 %v414
    %825 = vmatprep.subr.mxu0 %v419
    %826 = vmatpush1.msra.mxu0 %v418
    %827 = vmatprep.subr.mxu0 %v423
    %828 = vmatpush1.msra.mxu0 %v422
    %829 = vmatprep.subr.mxu0 %v427
    %830 = vmatpush1.msra.mxu0 %v426
    %831 = vmatprep.subr.mxu0 %v431
    %832 = vmatpush1.msra.mxu0 %v430
    %833 = vmatprep.subr.mxu0 %v435
    %834 = vmatpush1.msra.mxu0 %v434
    %835 = vmatprep.subr.mxu0 %v439
    %836 = vmatpush1.msra.mxu0 %v438
    %837 = vmatprep.subr.mxu0 %v443
    %838 = vmatpush1.msra.mxu0 %v442
    %839 = vmatprep.subr.mxu0 %v447
    %840 = vmatpush1.msra.mxu0 %v446
    %841 = vmatprep.subr.mxu0 %v451
    %842 = vmatpush1.msra.mxu0 %v450
    %843 = vmatprep.subr.mxu0 %v455
    %844 = vmatpush1.msra.mxu0 %v454
    %845 = vmatprep.subr.mxu0 %v459
    %846 = vmatpush1.msra.mxu0 %v458
    %847 = vmatprep.subr.mxu0 %v463
    %848 = vmatpush1.msra.mxu0 %v462
    %849 = vmatprep.mubr.f32.mxu0 0.0
    %850 = vmatmul.mubr.f32.gmra.mrb[0].mxu0 0.0
    %v851 = vpop.f32.mrb[0].mxu0
    %v852 = vadd.f32 %v638, %v851
    %v853 = vpop.f32.mrb[0].mxu0
    %v854 = vadd.f32 %v642, %v853
    %855 = vdwg.mxu0
    %856 = vmatprep.subr.mxu0 %v467
    %857 = vmatpush1.msra.mxu0 %v466
    %858 = vmatprep.subr.mxu0 %v471
    %859 = vmatpush1.msra.mxu0 %v470
    %860 = vmatprep.subr.mxu0 %v475
    %861 = vmatpush1.msra.mxu0 %v474
    %862 = vmatprep.subr.mxu0 %v479
    %863 = vmatpush1.msra.mxu0 %v478
    %864 = vmatprep.subr.mxu0 %v483
    %865 = vmatpush1.msra.mxu0 %v482
    %866 = vmatprep.subr.mxu0 %v487
    %867 = vmatpush1.msra.mxu0 %v486
    %868 = vmatprep.subr.mxu0 %v491
    %869 = vmatpush1.msra.mxu0 %v490
    %870 = vmatprep.subr.mxu0 %v495
    %871 = vmatpush1.msra.mxu0 %v494
    %872 = vmatprep.subr.mxu0 %v499
    %873 = vmatpush1.msra.mxu0 %v498
    %874 = vmatprep.subr.mxu0 %v503
    %875 = vmatpush1.msra.mxu0 %v502
    %876 = vmatprep.subr.mxu0 %v507
    %877 = vmatpush1.msra.mxu0 %v506
    %878 = vmatprep.subr.mxu0 %v511
    %879 = vmatpush1.msra.mxu0 %v510
    %880 = vmatprep.subr.mxu0 %v515
    %881 = vmatpush1.msra.mxu0 %v514
    %882 = vmatprep.subr.mxu0 %v519
    %883 = vmatpush1.msra.mxu0 %v518
    %884 = vmatprep.subr.mxu0 %v523
    %885 = vmatpush1.msra.mxu0 %v522
    %886 = vmatprep.subr.mxu0 %v527
    %887 = vmatpush1.msra.mxu0 %v526
    %888 = vmatprep.subr.mxu0 %v531
    %889 = vmatpush1.msra.mxu0 %v530
    %890 = vmatprep.subr.mxu0 %v535
    %891 = vmatpush1.msra.mxu0 %v534
    %892 = vmatprep.subr.mxu0 %v539
    %893 = vmatpush1.msra.mxu0 %v538
    %894 = vmatprep.subr.mxu0 %v543
    %895 = vmatpush1.msra.mxu0 %v542
    %896 = vmatprep.subr.mxu0 %v547
    %897 = vmatpush1.msra.mxu0 %v546
    %898 = vmatprep.subr.mxu0 %v551
    %899 = vmatpush1.msra.mxu0 %v550
    %900 = vmatprep.subr.mxu0 %v555
    %901 = vmatpush1.msra.mxu0 %v554
    %902 = vmatprep.subr.mxu0 %v559
    %903 = vmatpush1.msra.mxu0 %v558
    %904 = vmatprep.subr.mxu0 %v563
    %905 = vmatpush1.msra.mxu0 %v562
    %906 = vmatprep.subr.mxu0 %v567
    %907 = vmatpush1.msra.mxu0 %v566
    %908 = vmatprep.subr.mxu0 %v571
    %909 = vmatpush1.msra.mxu0 %v570
    %910 = vmatprep.subr.mxu0 %v575
    %911 = vmatpush1.msra.mxu0 %v574
    %912 = vmatprep.subr.mxu0 %v579
    %913 = vmatpush1.msra.mxu0 %v578
    %914 = vmatprep.subr.mxu0 %v583
    %915 = vmatpush1.msra.mxu0 %v582
    %916 = vmatprep.subr.mxu0 %v587
    %917 = vmatpush1.msra.mxu0 %v586
    %918 = vmatprep.subr.mxu0 %v591
    %919 = vmatpush1.msra.mxu0 %v590
    %920 = vmatprep.mubr.f32.mxu0 0.0
    %921 = vmatmul.mubr.f32.gmra.mrb[0].mxu0 0.0
    %v922 = vpop.f32.mrb[0].mxu0
    %v923 = vadd.f32 %v852, %v922
    %v924 = vpop.f32.mrb[0].mxu0
    %v925 = vadd.f32 %v854, %v924
    %926 = vdwg.mxu0
    %v927 = vld [vmem:[#allocation2] sm:$0xff]
    %v928 = vld [vmem:[#allocation2 + $0x8] sm:$0xff]
    %v929 = vld [vmem:[#allocation2 + $0x10] sm:$0xff]
    %v930 = vld [vmem:[#allocation2 + $0x18] sm:$0xff]
    %v931 = vadd.f32 %v781, %v927
    %v932 = vadd.f32 %v783, %v928
    %v933 = vadd.f32 %v923, %v929
    %v934 = vadd.f32 %v925, %v930
    %v935 = vtanh.pop %v931
    %v936 = vtanh.pop %v932
    %v937 = vtanh.pop %v933
    %v938 = vtanh.pop %v934
    %vm939 = vcmp.lt.s32.totalorder %v594, 64
    %vm940 = vcmp.lt.s32.totalorder %v595, 64
    %vm941 = vcmp.lt.s32.totalorder %v596, 64
    %vm942 = vcmp.lt.s32.totalorder %v597, 64
    %v943 = vsel %vm939, %v606, 0.0
    %v944 = vsel %vm940, %v610, 0.0
    %v945 = vsel %vm941, %v614, 0.0
    %v946 = vsel %vm942, %v618, 0.0
    %v947 = vlaneseq
    %v948 = vshrl.u32 %v947, 7
    %v949 = vsub.s32 0, %v948
    %v950 = vrot.slane %v943, %v949
    %v951 = vlaneseq
    %v952 = vshrl.u32 %v951, 7
    %v953 = vsub.s32 0, %v952
    %v954 = vrot.slane %v944, %v953
    %v955 = vlaneseq
    %v956 = vshrl.u32 %v955, 7
    %v957 = vsub.s32 0, %v956
    %v958 = vrot.slane %v945, %v957
    %v959 = vlaneseq
    %v960 = vshrl.u32 %v959, 7
    %v961 = vsub.s32 0, %v960
    %v962 = vrot.slane %v946, %v961
    %963 = vmatprep.subr.mxu0 %v337
    %964 = vmatpush1.msra.mxu0 %v336
    %965 = vmatprep.subr.mxu0 %v341
    %966 = vmatpush1.msra.mxu0 %v340
    %967 = vmatprep.subr.mxu0 %v345
    %968 = vmatpush1.msra.mxu0 %v344
    %969 = vmatprep.subr.mxu0 %v349
    %970 = vmatpush1.msra.mxu0 %v348
    %971 = vmatprep.subr.mxu0 %v353
    %972 = vmatpush1.msra.mxu0 %v352
    %973 = vmatprep.subr.mxu0 %v357
    %974 = vmatpush1.msra.mxu0 %v356
    %975 = vmatprep.subr.mxu0 %v361
    %976 = vmatpush1.msra.mxu0 %v360
    %977 = vmatprep.subr.mxu0 %v365
    %978 = vmatpush1.msra.mxu0 %v364
    %979 = vmatprep.subr.mxu0 %v369
    %980 = vmatpush1.msra.mxu0 %v368
    %981 = vmatprep.subr.mxu0 %v373
    %982 = vmatpush1.msra.mxu0 %v372
    %983 = vmatprep.subr.mxu0 %v377
    %984 = vmatpush1.msra.mxu0 %v376
    %985 = vmatprep.subr.mxu0 %v381
    %986 = vmatpush1.msra.mxu0 %v380
    %987 = vmatprep.subr.mxu0 %v385
    %988 = vmatpush1.msra.mxu0 %v384
    %989 = vmatprep.subr.mxu0 %v389
    %990 = vmatpush1.msra.mxu0 %v388
    %991 = vmatprep.subr.mxu0 %v393
    %992 = vmatpush1.msra.mxu0 %v392
    %993 = vmatprep.subr.mxu0 %v397
    %994 = vmatpush1.msra.mxu0 %v396
    %995 = vmatprep.subr.mxu0 %v401
    %996 = vmatpush1.msra.mxu0 %v400
    %997 = vmatprep.subr.mxu0 %v405
    %998 = vmatpush1.msra.mxu0 %v404
    %999 = vmatprep.subr.mxu0 %v409
    %1000 = vmatpush1.msra.mxu0 %v408
    %1001 = vmatprep.subr.mxu0 %v413
    %1002 = vmatpush1.msra.mxu0 %v412
    %1003 = vmatprep.subr.mxu0 %v417
    %1004 = vmatpush1.msra.mxu0 %v416
    %1005 = vmatprep.subr.mxu0 %v421
    %1006 = vmatpush1.msra.mxu0 %v420
    %1007 = vmatprep.subr.mxu0 %v425
    %1008 = vmatpush1.msra.mxu0 %v424
    %1009 = vmatprep.subr.mxu0 %v429
    %1010 = vmatpush1.msra.mxu0 %v428
    %1011 = vmatprep.subr.mxu0 %v433
    %1012 = vmatpush1.msra.mxu0 %v432
    %1013 = vmatprep.subr.mxu0 %v437
    %1014 = vmatpush1.msra.mxu0 %v436
    %1015 = vmatprep.subr.mxu0 %v441
    %1016 = vmatpush1.msra.mxu0 %v440
    %1017 = vmatprep.subr.mxu0 %v445
    %1018 = vmatpush1.msra.mxu0 %v444
    %1019 = vmatprep.subr.mxu0 %v449
    %1020 = vmatpush1.msra.mxu0 %v448
    %1021 = vmatprep.subr.mxu0 %v453
    %1022 = vmatpush1.msra.mxu0 %v452
    %1023 = vmatprep.subr.mxu0 %v457
    %1024 = vmatpush1.msra.mxu0 %v456
    %1025 = vmatprep.subr.mxu0 %v461
    %1026 = vmatpush1.msra.mxu0 %v460
    %1027 = vmatprep.mubr.f32.mxu0 %v936
    %1028 = vmatmul.mubr.f32.gmra.mrb[0].mxu0 %v935
    %v1029 = vpop.f32.mrb[0].mxu0
    %v1030 = vadd.f32 %v950, %v1029
    %v1031 = vpop.f32.mrb[0].mxu0
    %v1032 = vadd.f32 %v954, %v1031
    %1033 = vdwg.mxu0
    %1034 = vmatprep.subr.mxu0 %v465
    %1035 = vmatpush1.msra.mxu0 %v464
    %1036 = vmatprep.subr.mxu0 %v469
    %1037 = vmatpush1.msra.mxu0 %v468
    %1038 = vmatprep.subr.mxu0 %v473
    %1039 = vmatpush1.msra.mxu0 %v472
    %1040 = vmatprep.subr.mxu0 %v477
    %1041 = vmatpush1.msra.mxu0 %v476
    %1042 = vmatprep.subr.mxu0 %v481
    %1043 = vmatpush1.msra.mxu0 %v480
    %1044 = vmatprep.subr.mxu0 %v485
    %1045 = vmatpush1.msra.mxu0 %v484
    %1046 = vmatprep.subr.mxu0 %v489
    %1047 = vmatpush1.msra.mxu0 %v488
    %1048 = vmatprep.subr.mxu0 %v493
    %1049 = vmatpush1.msra.mxu0 %v492
    %1050 = vmatprep.subr.mxu0 %v497
    %1051 = vmatpush1.msra.mxu0 %v496
    %1052 = vmatprep.subr.mxu0 %v501
    %1053 = vmatpush1.msra.mxu0 %v500
    %1054 = vmatprep.subr.mxu0 %v505
    %1055 = vmatpush1.msra.mxu0 %v504
    %1056 = vmatprep.subr.mxu0 %v509
    %1057 = vmatpush1.msra.mxu0 %v508
    %1058 = vmatprep.subr.mxu0 %v513
    %1059 = vmatpush1.msra.mxu0 %v512
    %1060 = vmatprep.subr.mxu0 %v517
    %1061 = vmatpush1.msra.mxu0 %v516
    %1062 = vmatprep.subr.mxu0 %v521
    %1063 = vmatpush1.msra.mxu0 %v520
    %1064 = vmatprep.subr.mxu0 %v525
    %1065 = vmatpush1.msra.mxu0 %v524
    %1066 = vmatprep.subr.mxu0 %v529
    %1067 = vmatpush1.msra.mxu0 %v528
    %1068 = vmatprep.subr.mxu0 %v533
    %1069 = vmatpush1.msra.mxu0 %v532
    %1070 = vmatprep.subr.mxu0 %v537
    %1071 = vmatpush1.msra.mxu0 %v536
    %1072 = vmatprep.subr.mxu0 %v541
    %1073 = vmatpush1.msra.mxu0 %v540
    %1074 = vmatprep.subr.mxu0 %v545
    %1075 = vmatpush1.msra.mxu0 %v544
    %1076 = vmatprep.subr.mxu0 %v549
    %1077 = vmatpush1.msra.mxu0 %v548
    %1078 = vmatprep.subr.mxu0 %v553
    %1079 = vmatpush1.msra.mxu0 %v552
    %1080 = vmatprep.subr.mxu0 %v557
    %1081 = vmatpush1.msra.mxu0 %v556
    %1082 = vmatprep.subr.mxu0 %v561
    %1083 = vmatpush1.msra.mxu0 %v560
    %1084 = vmatprep.subr.mxu0 %v565
    %1085 = vmatpush1.msra.mxu0 %v564
    %1086 = vmatprep.subr.mxu0 %v569
    %1087 = vmatpush1.msra.mxu0 %v568
    %1088 = vmatprep.subr.mxu0 %v573
    %1089 = vmatpush1.msra.mxu0 %v572
    %1090 = vmatprep.subr.mxu0 %v577
    %1091 = vmatpush1.msra.mxu0 %v576
    %1092 = vmatprep.subr.mxu0 %v581
    %1093 = vmatpush1.msra.mxu0 %v580
    %1094 = vmatprep.subr.mxu0 %v585
    %1095 = vmatpush1.msra.mxu0 %v584
    %1096 = vmatprep.subr.mxu0 %v589
    %1097 = vmatpush1.msra.mxu0 %v588
    %1098 = vmatprep.mubr.f32.mxu0 %v938
    %1099 = vmatmul.mubr.f32.gmra.mrb[0].mxu0 %v937
    %v1100 = vpop.f32.mrb[0].mxu0
    %v1101 = vadd.f32 %v1030, %v1100
    %v1102 = vpop.f32.mrb[0].mxu0
    %v1103 = vadd.f32 %v1032, %v1102
    %1104 = vdwg.mxu0
    %1105 = vmatprep.subr.mxu0 %v339
    %1106 = vmatpush1.msra.mxu0 %v338
    %1107 = vmatprep.subr.mxu0 %v343
    %1108 = vmatpush1.msra.mxu0 %v342
    %1109 = vmatprep.subr.mxu0 %v347
    %1110 = vmatpush1.msra.mxu0 %v346
    %1111 = vmatprep.subr.mxu0 %v351
    %1112 = vmatpush1.msra.mxu0 %v350
    %1113 = vmatprep.subr.mxu0 %v355
    %1114 = vmatpush1.msra.mxu0 %v354
    %1115 = vmatprep.subr.mxu0 %v359
    %1116 = vmatpush1.msra.mxu0 %v358
    %1117 = vmatprep.subr.mxu0 %v363
    %1118 = vmatpush1.msra.mxu0 %v362
    %1119 = vmatprep.subr.mxu0 %v367
    %1120 = vmatpush1.msra.mxu0 %v366
    %1121 = vmatprep.subr.mxu0 %v371
    %1122 = vmatpush1.msra.mxu0 %v370
    %1123 = vmatprep.subr.mxu0 %v375
    %1124 = vmatpush1.msra.mxu0 %v374
    %1125 = vmatprep.subr.mxu0 %v379
    %1126 = vmatpush1.msra.mxu0 %v378
    %1127 = vmatprep.subr.mxu0 %v383
    %1128 = vmatpush1.msra.mxu0 %v382
    %1129 = vmatprep.subr.mxu0 %v387
    %1130 = vmatpush1.msra.mxu0 %v386
    %1131 = vmatprep.subr.mxu0 %v391
    %1132 = vmatpush1.msra.mxu0 %v390
    %1133 = vmatprep.subr.mxu0 %v395
    %1134 = vmatpush1.msra.mxu0 %v394
    %1135 = vmatprep.subr.mxu0 %v399
    %1136 = vmatpush1.msra.mxu0 %v398
    %1137 = vmatprep.subr.mxu0 %v403
    %1138 = vmatpush1.msra.mxu0 %v402
    %1139 = vmatprep.subr.mxu0 %v407
    %1140 = vmatpush1.msra.mxu0 %v406
    %1141 = vmatprep.subr.mxu0 %v411
    %1142 = vmatpush1.msra.mxu0 %v410
    %1143 = vmatprep.subr.mxu0 %v415
    %1144 = vmatpush1.msra.mxu0 %v414
    %1145 = vmatprep.subr.mxu0 %v419
    %1146 = vmatpush1.msra.mxu0 %v418
    %1147 = vmatprep.subr.mxu0 %v423
    %1148 = vmatpush1.msra.mxu0 %v422
    %1149 = vmatprep.subr.mxu0 %v427
    %1150 = vmatpush1.msra.mxu0 %v426
    %1151 = vmatprep.subr.mxu0 %v431
    %1152 = vmatpush1.msra.mxu0 %v430
    %1153 = vmatprep.subr.mxu0 %v435
    %1154 = vmatpush1.msra.mxu0 %v434
    %1155 = vmatprep.subr.mxu0 %v439
    %1156 = vmatpush1.msra.mxu0 %v438
    %1157 = vmatprep.subr.mxu0 %v443
    %1158 = vmatpush1.msra.mxu0 %v442
    %1159 = vmatprep.subr.mxu0 %v447
    %1160 = vmatpush1.msra.mxu0 %v446
    %1161 = vmatprep.subr.mxu0 %v451
    %1162 = vmatpush1.msra.mxu0 %v450
    %1163 = vmatprep.subr.mxu0 %v455
    %1164 = vmatpush1.msra.mxu0 %v454
    %1165 = vmatprep.subr.mxu0 %v459
    %1166 = vmatpush1.msra.mxu0 %v458
    %1167 = vmatprep.subr.mxu0 %v463
    %1168 = vmatpush1.msra.mxu0 %v462
    %1169 = vmatprep.mubr.f32.mxu0 %v936
    %1170 = vmatmul.mubr.f32.gmra.mrb[0].mxu0 %v935
    %v1171 = vpop.f32.mrb[0].mxu0
    %v1172 = vadd.f32 %v958, %v1171
    %v1173 = vpop.f32.mrb[0].mxu0
    %v1174 = vadd.f32 %v962, %v1173
    %1175 = vdwg.mxu0
    %1176 = vmatprep.subr.mxu0 %v467
    %1177 = vmatpush1.msra.mxu0 %v466
    %1178 = vmatprep.subr.mxu0 %v471
    %1179 = vmatpush1.msra.mxu0 %v470
    %1180 = vmatprep.subr.mxu0 %v475
    %1181 = vmatpush1.msra.mxu0 %v474
    %1182 = vmatprep.subr.mxu0 %v479
    %1183 = vmatpush1.msra.mxu0 %v478
    %1184 = vmatprep.subr.mxu0 %v483
    %1185 = vmatpush1.msra.mxu0 %v482
    %1186 = vmatprep.subr.mxu0 %v487
    %1187 = vmatpush1.msra.mxu0 %v486
    %1188 = vmatprep.subr.mxu0 %v491
    %1189 = vmatpush1.msra.mxu0 %v490
    %1190 = vmatprep.subr.mxu0 %v495
    %1191 = vmatpush1.msra.mxu0 %v494
    %1192 = vmatprep.subr.mxu0 %v499
    %1193 = vmatpush1.msra.mxu0 %v498
    %1194 = vmatprep.subr.mxu0 %v503
    %1195 = vmatpush1.msra.mxu0 %v502
    %1196 = vmatprep.subr.mxu0 %v507
    %1197 = vmatpush1.msra.mxu0 %v506
    %1198 = vmatprep.subr.mxu0 %v511
    %1199 = vmatpush1.msra.mxu0 %v510
    %1200 = vmatprep.subr.mxu0 %v515
    %1201 = vmatpush1.msra.mxu0 %v514
    %1202 = vmatprep.subr.mxu0 %v519
    %1203 = vmatpush1.msra.mxu0 %v518
    %1204 = vmatprep.subr.mxu0 %v523
    %1205 = vmatpush1.msra.mxu0 %v522
    %1206 = vmatprep.subr.mxu0 %v527
    %1207 = vmatpush1.msra.mxu0 %v526
    %1208 = vmatprep.subr.mxu0 %v531
    %1209 = vmatpush1.msra.mxu0 %v530
    %1210 = vmatprep.subr.mxu0 %v535
    %1211 = vmatpush1.msra.mxu0 %v534
    %1212 = vmatprep.subr.mxu0 %v539
    %1213 = vmatpush1.msra.mxu0 %v538
    %1214 = vmatprep.subr.mxu0 %v543
    %1215 = vmatpush1.msra.mxu0 %v542
    %1216 = vmatprep.subr.mxu0 %v547
    %1217 = vmatpush1.msra.mxu0 %v546
    %1218 = vmatprep.subr.mxu0 %v551
    %1219 = vmatpush1.msra.mxu0 %v550
    %1220 = vmatprep.subr.mxu0 %v555
    %1221 = vmatpush1.msra.mxu0 %v554
    %1222 = vmatprep.subr.mxu0 %v559
    %1223 = vmatpush1.msra.mxu0 %v558
    %1224 = vmatprep.subr.mxu0 %v563
    %1225 = vmatpush1.msra.mxu0 %v562
    %1226 = vmatprep.subr.mxu0 %v567
    %1227 = vmatpush1.msra.mxu0 %v566
    %1228 = vmatprep.subr.mxu0 %v571
    %1229 = vmatpush1.msra.mxu0 %v570
    %1230 = vmatprep.subr.mxu0 %v575
    %1231 = vmatpush1.msra.mxu0 %v574
    %1232 = vmatprep.subr.mxu0 %v579
    %1233 = vmatpush1.msra.mxu0 %v578
    %1234 = vmatprep.subr.mxu0 %v583
    %1235 = vmatpush1.msra.mxu0 %v582
    %1236 = vmatprep.subr.mxu0 %v587
    %1237 = vmatpush1.msra.mxu0 %v586
    %1238 = vmatprep.subr.mxu0 %v591
    %1239 = vmatpush1.msra.mxu0 %v590
    %1240 = vmatprep.mubr.f32.mxu0 %v938
    %1241 = vmatmul.mubr.f32.gmra.mrb[0].mxu0 %v937
    %v1242 = vpop.f32.mrb[0].mxu0
    %v1243 = vadd.f32 %v1172, %v1242
    %v1244 = vpop.f32.mrb[0].mxu0
    %v1245 = vadd.f32 %v1174, %v1244
    %1246 = vdwg.mxu0
    %v1247 = vld [vmem:[#allocation2 + $0x20] sm:$0xff]
    %v1248 = vld [vmem:[#allocation2 + $0x28] sm:$0xff]
    %v1249 = vld [vmem:[#allocation2 + $0x30] sm:$0xff]
    %v1250 = vld [vmem:[#allocation2 + $0x38] sm:$0xff]
    %v1251 = vadd.f32 %v1101, %v1247
    %v1252 = vadd.f32 %v1103, %v1248
    %v1253 = vadd.f32 %v1243, %v1249
    %v1254 = vadd.f32 %v1245, %v1250
    %v1255 = vtanh.pop %v1251
    %v1256 = vtanh.pop %v1252
    %v1257 = vtanh.pop %v1253
    %v1258 = vtanh.pop %v1254
    %vm1259 = vcmp.lt.s32.totalorder %v594, 96
    %vm1260 = vcmp.lt.s32.totalorder %v595, 96
    %vm1261 = vcmp.lt.s32.totalorder %v596, 96
    %vm1262 = vcmp.lt.s32.totalorder %v597, 96
    %v1263 = vsel %vm1259, %v606, 0.0
    %v1264 = vsel %vm1260, %v610, 0.0
    %v1265 = vsel %vm1261, %v614, 0.0
    %v1266 = vsel %vm1262, %v618, 0.0
    %v1267 = vlaneseq
    %v1268 = vshrl.u32 %v1267, 7
    %v1269 = vsub.s32 0, %v1268
    %v1270 = vrot.slane %v1263, %v1269
    %v1271 = vlaneseq
    %v1272 = vshrl.u32 %v1271, 7
    %v1273 = vsub.s32 0, %v1272
    %v1274 = vrot.slane %v1264, %v1273
    %v1275 = vlaneseq
    %v1276 = vshrl.u32 %v1275, 7
    %v1277 = vsub.s32 0, %v1276
    %v1278 = vrot.slane %v1265, %v1277
    %v1279 = vlaneseq
    %v1280 = vshrl.u32 %v1279, 7
    %v1281 = vsub.s32 0, %v1280
    %v1282 = vrot.slane %v1266, %v1281
    %1283 = vmatprep.subr.mxu0 %v337
    %1284 = vmatpush1.msra.mxu0 %v336
    %1285 = vmatprep.subr.mxu0 %v341
    %1286 = vmatpush1.msra.mxu0 %v340
    %1287 = vmatprep.subr.mxu0 %v345
    %1288 = vmatpush1.msra.mxu0 %v344
    %1289 = vmatprep.subr.mxu0 %v349
    %1290 = vmatpush1.msra.mxu0 %v348
    %1291 = vmatprep.subr.mxu0 %v353
    %1292 = vmatpush1.msra.mxu0 %v352
    %1293 = vmatprep.subr.mxu0 %v357
    %1294 = vmatpush1.msra.mxu0 %v356
    %1295 = vmatprep.subr.mxu0 %v361
    %1296 = vmatpush1.msra.mxu0 %v360
    %1297 = vmatprep.subr.mxu0 %v365
    %1298 = vmatpush1.msra.mxu0 %v364
    %1299 = vmatprep.subr.mxu0 %v369
    %1300 = vmatpush1.msra.mxu0 %v368
    %1301 = vmatprep.subr.mxu0 %v373
    %1302 = vmatpush1.msra.mxu0 %v372
    %1303 = vmatprep.subr.mxu0 %v377
    %1304 = vmatpush1.msra.mxu0 %v376
    %1305 = vmatprep.subr.mxu0 %v381
    %1306 = vmatpush1.msra.mxu0 %v380
    %1307 = vmatprep.subr.mxu0 %v385
    %1308 = vmatpush1.msra.mxu0 %v384
    %1309 = vmatprep.subr.mxu0 %v389
    %1310 = vmatpush1.msra.mxu0 %v388
    %1311 = vmatprep.subr.mxu0 %v393
    %1312 = vmatpush1.msra.mxu0 %v392
    %1313 = vmatprep.subr.mxu0 %v397
    %1314 = vmatpush1.msra.mxu0 %v396
    %1315 = vmatprep.subr.mxu0 %v401
    %1316 = vmatpush1.msra.mxu0 %v400
    %1317 = vmatprep.subr.mxu0 %v405
    %1318 = vmatpush1.msra.mxu0 %v404
    %1319 = vmatprep.subr.mxu0 %v409
    %1320 = vmatpush1.msra.mxu0 %v408
    %1321 = vmatprep.subr.mxu0 %v413
    %1322 = vmatpush1.msra.mxu0 %v412
    %1323 = vmatprep.subr.mxu0 %v417
    %1324 = vmatpush1.msra.mxu0 %v416
    %1325 = vmatprep.subr.mxu0 %v421
    %1326 = vmatpush1.msra.mxu0 %v420
    %1327 = vmatprep.subr.mxu0 %v425
    %1328 = vmatpush1.msra.mxu0 %v424
    %1329 = vmatprep.subr.mxu0 %v429
    %1330 = vmatpush1.msra.mxu0 %v428
    %1331 = vmatprep.subr.mxu0 %v433
    %1332 = vmatpush1.msra.mxu0 %v432
    %1333 = vmatprep.subr.mxu0 %v437
    %1334 = vmatpush1.msra.mxu0 %v436
    %1335 = vmatprep.subr.mxu0 %v441
    %1336 = vmatpush1.msra.mxu0 %v440
    %1337 = vmatprep.subr.mxu0 %v445
    %1338 = vmatpush1.msra.mxu0 %v444
    %1339 = vmatprep.subr.mxu0 %v449
    %1340 = vmatpush1.msra.mxu0 %v448
    %1341 = vmatprep.subr.mxu0 %v453
    %1342 = vmatpush1.msra.mxu0 %v452
    %1343 = vmatprep.subr.mxu0 %v457
    %1344 = vmatpush1.msra.mxu0 %v456
    %1345 = vmatprep.subr.mxu0 %v461
    %1346 = vmatpush1.msra.mxu0 %v460
    %1347 = vmatprep.mubr.f32.mxu0 %v1256
    %1348 = vmatmul.mubr.f32.gmra.mrb[0].mxu0 %v1255
    %v1349 = vpop.f32.mrb[0].mxu0
    %v1350 = vadd.f32 %v1270, %v1349
    %v1351 = vpop.f32.mrb[0].mxu0
    %v1352 = vadd.f32 %v1274, %v1351
    %1353 = vdwg.mxu0
    %1354 = vmatprep.subr.mxu0 %v465
    %1355 = vmatpush1.msra.mxu0 %v464
    %1356 = vmatprep.subr.mxu0 %v469
    %1357 = vmatpush1.msra.mxu0 %v468
    %1358 = vmatprep.subr.mxu0 %v473
    %1359 = vmatpush1.msra.mxu0 %v472
    %1360 = vmatprep.subr.mxu0 %v477
    %1361 = vmatpush1.msra.mxu0 %v476
    %1362 = vmatprep.subr.mxu0 %v481
    %1363 = vmatpush1.msra.mxu0 %v480
    %1364 = vmatprep.subr.mxu0 %v485
    %1365 = vmatpush1.msra.mxu0 %v484
    %1366 = vmatprep.subr.mxu0 %v489
    %1367 = vmatpush1.msra.mxu0 %v488
    %1368 = vmatprep.subr.mxu0 %v493
    %1369 = vmatpush1.msra.mxu0 %v492
    %1370 = vmatprep.subr.mxu0 %v497
    %1371 = vmatpush1.msra.mxu0 %v496
    %1372 = vmatprep.subr.mxu0 %v501
    %1373 = vmatpush1.msra.mxu0 %v500
    %1374 = vmatprep.subr.mxu0 %v505
    %1375 = vmatpush1.msra.mxu0 %v504
    %1376 = vmatprep.subr.mxu0 %v509
    %1377 = vmatpush1.msra.mxu0 %v508
    %1378 = vmatprep.subr.mxu0 %v513
    %1379 = vmatpush1.msra.mxu0 %v512
    %1380 = vmatprep.subr.mxu0 %v517
    %1381 = vmatpush1.msra.mxu0 %v516
    %1382 = vmatprep.subr.mxu0 %v521
    %1383 = vmatpush1.msra.mxu0 %v520
    %1384 = vmatprep.subr.mxu0 %v525
    %1385 = vmatpush1.msra.mxu0 %v524
    %1386 = vmatprep.subr.mxu0 %v529
    %1387 = vmatpush1.msra.mxu0 %v528
    %1388 = vmatprep.subr.mxu0 %v533
    %1389 = vmatpush1.msra.mxu0 %v532
    %1390 = vmatprep.subr.mxu0 %v537
    %1391 = vmatpush1.msra.mxu0 %v536
    %1392 = vmatprep.subr.mxu0 %v541
    %1393 = vmatpush1.msra.mxu0 %v540
    %1394 = vmatprep.subr.mxu0 %v545
    %1395 = vmatpush1.msra.mxu0 %v544
    %1396 = vmatprep.subr.mxu0 %v549
    %1397 = vmatpush1.msra.mxu0 %v548
    %1398 = vmatprep.subr.mxu0 %v553
    %1399 = vmatpush1.msra.mxu0 %v552
    %1400 = vmatprep.subr.mxu0 %v557
    %1401 = vmatpush1.msra.mxu0 %v556
    %1402 = vmatprep.subr.mxu0 %v561
    %1403 = vmatpush1.msra.mxu0 %v560
    %1404 = vmatprep.subr.mxu0 %v565
    %1405 = vmatpush1.msra.mxu0 %v564
    %1406 = vmatprep.subr.mxu0 %v569
    %1407 = vmatpush1.msra.mxu0 %v568
    %1408 = vmatprep.subr.mxu0 %v573
    %1409 = vmatpush1.msra.mxu0 %v572
    %1410 = vmatprep.subr.mxu0 %v577
    %1411 = vmatpush1.msra.mxu0 %v576
    %1412 = vmatprep.subr.mxu0 %v581
    %1413 = vmatpush1.msra.mxu0 %v580
    %1414 = vmatprep.subr.mxu0 %v585
    %1415 = vmatpush1.msra.mxu0 %v584
    %1416 = vmatprep.subr.mxu0 %v589
    %1417 = vmatpush1.msra.mxu0 %v588
    %1418 = vmatprep.mubr.f32.mxu0 %v1258
    %1419 = vmatmul.mubr.f32.gmra.mrb[0].mxu0 %v1257
    %v1420 = vpop.f32.mrb[0].mxu0
    %v1421 = vadd.f32 %v1350, %v1420
    %v1422 = vpop.f32.mrb[0].mxu0
    %v1423 = vadd.f32 %v1352, %v1422
    %1424 = vdwg.mxu0
    %1425 = vmatprep.subr.mxu0 %v339
    %1426 = vmatpush1.msra.mxu0 %v338
    %1427 = vmatprep.subr.mxu0 %v343
    %1428 = vmatpush1.msra.mxu0 %v342
    %1429 = vmatprep.subr.mxu0 %v347
    %1430 = vmatpush1.msra.mxu0 %v346
    %1431 = vmatprep.subr.mxu0 %v351
    %1432 = vmatpush1.msra.mxu0 %v350
    %1433 = vmatprep.subr.mxu0 %v355
    %1434 = vmatpush1.msra.mxu0 %v354
    %1435 = vmatprep.subr.mxu0 %v359
    %1436 = vmatpush1.msra.mxu0 %v358
    %1437 = vmatprep.subr.mxu0 %v363
    %1438 = vmatpush1.msra.mxu0 %v362
    %1439 = vmatprep.subr.mxu0 %v367
    %1440 = vmatpush1.msra.mxu0 %v366
    %1441 = vmatprep.subr.mxu0 %v371
    %1442 = vmatpush1.msra.mxu0 %v370
    %1443 = vmatprep.subr.mxu0 %v375
    %1444 = vmatpush1.msra.mxu0 %v374
    %1445 = vmatprep.subr.mxu0 %v379
    %1446 = vmatpush1.msra.mxu0 %v378
    %1447 = vmatprep.subr.mxu0 %v383
    %1448 = vmatpush1.msra.mxu0 %v382
    %1449 = vmatprep.subr.mxu0 %v387
    %1450 = vmatpush1.msra.mxu0 %v386
    %1451 = vmatprep.subr.mxu0 %v391
    %1452 = vmatpush1.msra.mxu0 %v390
    %1453 = vmatprep.subr.mxu0 %v395
    %1454 = vmatpush1.msra.mxu0 %v394
    %1455 = vmatprep.subr.mxu0 %v399
    %1456 = vmatpush1.msra.mxu0 %v398
    %1457 = vmatprep.subr.mxu0 %v403
    %1458 = vmatpush1.msra.mxu0 %v402
    %1459 = vmatprep.subr.mxu0 %v407
    %1460 = vmatpush1.msra.mxu0 %v406
    %1461 = vmatprep.subr.mxu0 %v411
    %1462 = vmatpush1.msra.mxu0 %v410
    %1463 = vmatprep.subr.mxu0 %v415
    %1464 = vmatpush1.msra.mxu0 %v414
    %1465 = vmatprep.subr.mxu0 %v419
    %1466 = vmatpush1.msra.mxu0 %v418
    %1467 = vmatprep.subr.mxu0 %v423
    %1468 = vmatpush1.msra.mxu0 %v422
    %1469 = vmatprep.subr.mxu0 %v427
    %1470 = vmatpush1.msra.mxu0 %v426
    %1471 = vmatprep.subr.mxu0 %v431
    %1472 = vmatpush1.msra.mxu0 %v430
    %1473 = vmatprep.subr.mxu0 %v435
    %1474 = vmatpush1.msra.mxu0 %v434
    %1475 = vmatprep.subr.mxu0 %v439
    %1476 = vmatpush1.msra.mxu0 %v438
    %1477 = vmatprep.subr.mxu0 %v443
    %1478 = vmatpush1.msra.mxu0 %v442
    %1479 = vmatprep.subr.mxu0 %v447
    %1480 = vmatpush1.msra.mxu0 %v446
    %1481 = vmatprep.subr.mxu0 %v451
    %1482 = vmatpush1.msra.mxu0 %v450
    %1483 = vmatprep.subr.mxu0 %v455
    %1484 = vmatpush1.msra.mxu0 %v454
    %1485 = vmatprep.subr.mxu0 %v459
    %1486 = vmatpush1.msra.mxu0 %v458
    %1487 = vmatprep.subr.mxu0 %v463
    %1488 = vmatpush1.msra.mxu0 %v462
    %1489 = vmatprep.mubr.f32.mxu0 %v1256
    %1490 = vmatmul.mubr.f32.gmra.mrb[0].mxu0 %v1255
    %v1491 = vpop.f32.mrb[0].mxu0
    %v1492 = vadd.f32 %v1278, %v1491
    %v1493 = vpop.f32.mrb[0].mxu0
    %v1494 = vadd.f32 %v1282, %v1493
    %1495 = vdwg.mxu0
    %1496 = vmatprep.subr.mxu0 %v467
    %1497 = vmatpush1.msra.mxu0 %v466
    %1498 = vmatprep.subr.mxu0 %v471
    %1499 = vmatpush1.msra.mxu0 %v470
    %1500 = vmatprep.subr.mxu0 %v475
    %1501 = vmatpush1.msra.mxu0 %v474
    %1502 = vmatprep.subr.mxu0 %v479
    %1503 = vmatpush1.msra.mxu0 %v478
    %1504 = vmatprep.subr.mxu0 %v483
    %1505 = vmatpush1.msra.mxu0 %v482
    %1506 = vmatprep.subr.mxu0 %v487
    %1507 = vmatpush1.msra.mxu0 %v486
    %1508 = vmatprep.subr.mxu0 %v491
    %1509 = vmatpush1.msra.mxu0 %v490
    %1510 = vmatprep.subr.mxu0 %v495
    %1511 = vmatpush1.msra.mxu0 %v494
    %1512 = vmatprep.subr.mxu0 %v499
    %1513 = vmatpush1.msra.mxu0 %v498
    %1514 = vmatprep.subr.mxu0 %v503
    %1515 = vmatpush1.msra.mxu0 %v502
    %1516 = vmatprep.subr.mxu0 %v507
    %1517 = vmatpush1.msra.mxu0 %v506
    %1518 = vmatprep.subr.mxu0 %v511
    %1519 = vmatpush1.msra.mxu0 %v510
    %1520 = vmatprep.subr.mxu0 %v515
    %1521 = vmatpush1.msra.mxu0 %v514
    %1522 = vmatprep.subr.mxu0 %v519
    %1523 = vmatpush1.msra.mxu0 %v518
    %1524 = vmatprep.subr.mxu0 %v523
    %1525 = vmatpush1.msra.mxu0 %v522
    %1526 = vmatprep.subr.mxu0 %v527
    %1527 = vmatpush1.msra.mxu0 %v526
    %1528 = vmatprep.subr.mxu0 %v531
    %1529 = vmatpush1.msra.mxu0 %v530
    %1530 = vmatprep.subr.mxu0 %v535
    %1531 = vmatpush1.msra.mxu0 %v534
    %1532 = vmatprep.subr.mxu0 %v539
    %1533 = vmatpush1.msra.mxu0 %v538
    %1534 = vmatprep.subr.mxu0 %v543
    %1535 = vmatpush1.msra.mxu0 %v542
    %1536 = vmatprep.subr.mxu0 %v547
    %1537 = vmatpush1.msra.mxu0 %v546
    %1538 = vmatprep.subr.mxu0 %v551
    %1539 = vmatpush1.msra.mxu0 %v550
    %1540 = vmatprep.subr.mxu0 %v555
    %1541 = vmatpush1.msra.mxu0 %v554
    %1542 = vmatprep.subr.mxu0 %v559
    %1543 = vmatpush1.msra.mxu0 %v558
    %1544 = vmatprep.subr.mxu0 %v563
    %1545 = vmatpush1.msra.mxu0 %v562
    %1546 = vmatprep.subr.mxu0 %v567
    %1547 = vmatpush1.msra.mxu0 %v566
    %1548 = vmatprep.subr.mxu0 %v571
    %1549 = vmatpush1.msra.mxu0 %v570
    %1550 = vmatprep.subr.mxu0 %v575
    %1551 = vmatpush1.msra.mxu0 %v574
    %1552 = vmatprep.subr.mxu0 %v579
    %1553 = vmatpush1.msra.mxu0 %v578
    %1554 = vmatprep.subr.mxu0 %v583
    %1555 = vmatpush1.msra.mxu0 %v582
    %1556 = vmatprep.subr.mxu0 %v587
    %1557 = vmatpush1.msra.mxu0 %v586
    %1558 = vmatprep.subr.mxu0 %v591
    %1559 = vmatpush1.msra.mxu0 %v590
    %1560 = vmatprep.mubr.f32.mxu0 %v1258
    %1561 = vmatmul.mubr.f32.gmra.mrb[0].mxu0 %v1257
    %v1562 = vpop.f32.mrb[0].mxu0
    %v1563 = vadd.f32 %v1492, %v1562
    %v1564 = vpop.f32.mrb[0].mxu0
    %v1565 = vadd.f32 %v1494, %v1564
    %1566 = vdwg.mxu0
    %v1567 = vld [vmem:[#allocation2 + $0x40] sm:$0xff]
    %v1568 = vld [vmem:[#allocation2 + $0x48] sm:$0xff]
    %v1569 = vld [vmem:[#allocation2 + $0x50] sm:$0xff]
    %v1570 = vld [vmem:[#allocation2 + $0x58] sm:$0xff]
    %v1571 = vadd.f32 %v1421, %v1567
    %v1572 = vadd.f32 %v1423, %v1568
    %v1573 = vadd.f32 %v1563, %v1569
    %v1574 = vadd.f32 %v1565, %v1570
    %v1575 = vtanh.pop %v1571
    %v1576 = vtanh.pop %v1572
    %v1577 = vtanh.pop %v1573
    %v1578 = vtanh.pop %v1574
    %vm1579 = vcmp.lt.s32.totalorder %v594, 128
    %vm1580 = vcmp.lt.s32.totalorder %v595, 128
    %vm1581 = vcmp.lt.s32.totalorder %v596, 128
    %vm1582 = vcmp.lt.s32.totalorder %v597, 128
    %v1583 = vsel %vm1579, %v606, 0.0
    %v1584 = vsel %vm1580, %v610, 0.0
    %v1585 = vsel %vm1581, %v614, 0.0
    %v1586 = vsel %vm1582, %v618, 0.0
    %v1587 = vlaneseq
    %v1588 = vshrl.u32 %v1587, 7
    %v1589 = vsub.s32 0, %v1588
    %v1590 = vrot.slane %v1583, %v1589
    %v1591 = vlaneseq
    %v1592 = vshrl.u32 %v1591, 7
    %v1593 = vsub.s32 0, %v1592
    %v1594 = vrot.slane %v1584, %v1593
    %v1595 = vlaneseq
    %v1596 = vshrl.u32 %v1595, 7
    %v1597 = vsub.s32 0, %v1596
    %v1598 = vrot.slane %v1585, %v1597
    %v1599 = vlaneseq
    %v1600 = vshrl.u32 %v1599, 7
    %v1601 = vsub.s32 0, %v1600
    %v1602 = vrot.slane %v1586, %v1601
    %1603 = vmatprep.subr.mxu0 %v337
    %1604 = vmatpush1.msra.mxu0 %v336
    %1605 = vmatprep.subr.mxu0 %v341
    %1606 = vmatpush1.msra.mxu0 %v340
    %1607 = vmatprep.subr.mxu0 %v345
    %1608 = vmatpush1.msra.mxu0 %v344
    %1609 = vmatprep.subr.mxu0 %v349
    %1610 = vmatpush1.msra.mxu0 %v348
    %1611 = vmatprep.subr.mxu0 %v353
    %1612 = vmatpush1.msra.mxu0 %v352
    %1613 = vmatprep.subr.mxu0 %v357
    %1614 = vmatpush1.msra.mxu0 %v356
    %1615 = vmatprep.subr.mxu0 %v361
    %1616 = vmatpush1.msra.mxu0 %v360
    %1617 = vmatprep.subr.mxu0 %v365
    %1618 = vmatpush1.msra.mxu0 %v364
    %1619 = vmatprep.subr.mxu0 %v369
    %1620 = vmatpush1.msra.mxu0 %v368
    %1621 = vmatprep.subr.mxu0 %v373
    %1622 = vmatpush1.msra.mxu0 %v372
    %1623 = vmatprep.subr.mxu0 %v377
    %1624 = vmatpush1.msra.mxu0 %v376
    %1625 = vmatprep.subr.mxu0 %v381
    %1626 = vmatpush1.msra.mxu0 %v380
    %1627 = vmatprep.subr.mxu0 %v385
    %1628 = vmatpush1.msra.mxu0 %v384
    %1629 = vmatprep.subr.mxu0 %v389
    %1630 = vmatpush1.msra.mxu0 %v388
    %1631 = vmatprep.subr.mxu0 %v393
    %1632 = vmatpush1.msra.mxu0 %v392
    %1633 = vmatprep.subr.mxu0 %v397
    %1634 = vmatpush1.msra.mxu0 %v396
    %1635 = vmatprep.subr.mxu0 %v401
    %1636 = vmatpush1.msra.mxu0 %v400
    %1637 = vmatprep.subr.mxu0 %v405
    %1638 = vmatpush1.msra.mxu0 %v404
    %1639 = vmatprep.subr.mxu0 %v409
    %1640 = vmatpush1.msra.mxu0 %v408
    %1641 = vmatprep.subr.mxu0 %v413
    %1642 = vmatpush1.msra.mxu0 %v412
    %1643 = vmatprep.subr.mxu0 %v417
    %1644 = vmatpush1.msra.mxu0 %v416
    %1645 = vmatprep.subr.mxu0 %v421
    %1646 = vmatpush1.msra.mxu0 %v420
    %1647 = vmatprep.subr.mxu0 %v425
    %1648 = vmatpush1.msra.mxu0 %v424
    %1649 = vmatprep.subr.mxu0 %v429
    %1650 = vmatpush1.msra.mxu0 %v428
    %1651 = vmatprep.subr.mxu0 %v433
    %1652 = vmatpush1.msra.mxu0 %v432
    %1653 = vmatprep.subr.mxu0 %v437
    %1654 = vmatpush1.msra.mxu0 %v436
    %1655 = vmatprep.subr.mxu0 %v441
    %1656 = vmatpush1.msra.mxu0 %v440
    %1657 = vmatprep.subr.mxu0 %v445
    %1658 = vmatpush1.msra.mxu0 %v444
    %1659 = vmatprep.subr.mxu0 %v449
    %1660 = vmatpush1.msra.mxu0 %v448
    %1661 = vmatprep.subr.mxu0 %v453
    %1662 = vmatpush1.msra.mxu0 %v452
    %1663 = vmatprep.subr.mxu0 %v457
    %1664 = vmatpush1.msra.mxu0 %v456
    %1665 = vmatprep.subr.mxu0 %v461
    %1666 = vmatpush1.msra.mxu0 %v460
    %1667 = vmatprep.mubr.f32.mxu0 %v1576
    %1668 = vmatmul.mubr.f32.gmra.mrb[0].mxu0 %v1575
    %v1669 = vpop.f32.mrb[0].mxu0
    %v1670 = vadd.f32 %v1590, %v1669
    %v1671 = vpop.f32.mrb[0].mxu0
    %v1672 = vadd.f32 %v1594, %v1671
    %1673 = vdwg.mxu0
    %1674 = vmatprep.subr.mxu0 %v465
    %1675 = vmatpush1.msra.mxu0 %v464
    %1676 = vmatprep.subr.mxu0 %v469
    %1677 = vmatpush1.msra.mxu0 %v468
    %1678 = vmatprep.subr.mxu0 %v473
    %1679 = vmatpush1.msra.mxu0 %v472
    %1680 = vmatprep.subr.mxu0 %v477
    %1681 = vmatpush1.msra.mxu0 %v476
    %1682 = vmatprep.subr.mxu0 %v481
    %1683 = vmatpush1.msra.mxu0 %v480
    %1684 = vmatprep.subr.mxu0 %v485
    %1685 = vmatpush1.msra.mxu0 %v484
    %1686 = vmatprep.subr.mxu0 %v489
    %1687 = vmatpush1.msra.mxu0 %v488
    %1688 = vmatprep.subr.mxu0 %v493
    %1689 = vmatpush1.msra.mxu0 %v492
    %1690 = vmatprep.subr.mxu0 %v497
    %1691 = vmatpush1.msra.mxu0 %v496
    %1692 = vmatprep.subr.mxu0 %v501
    %1693 = vmatpush1.msra.mxu0 %v500
    %1694 = vmatprep.subr.mxu0 %v505
    %1695 = vmatpush1.msra.mxu0 %v504
    %1696 = vmatprep.subr.mxu0 %v509
    %1697 = vmatpush1.msra.mxu0 %v508
    %1698 = vmatprep.subr.mxu0 %v513
    %1699 = vmatpush1.msra.mxu0 %v512
    %1700 = vmatprep.subr.mxu0 %v517
    %1701 = vmatpush1.msra.mxu0 %v516
    %1702 = vmatprep.subr.mxu0 %v521
    %1703 = vmatpush1.msra.mxu0 %v520
    %1704 = vmatprep.subr.mxu0 %v525
    %1705 = vmatpush1.msra.mxu0 %v524
    %1706 = vmatprep.subr.mxu0 %v529
    %1707 = vmatpush1.msra.mxu0 %v528
    %1708 = vmatprep.subr.mxu0 %v533
    %1709 = vmatpush1.msra.mxu0 %v532
    %1710 = vmatprep.subr.mxu0 %v537
    %1711 = vmatpush1.msra.mxu0 %v536
    %1712 = vmatprep.subr.mxu0 %v541
    %1713 = vmatpush1.msra.mxu0 %v540
    %1714 = vmatprep.subr.mxu0 %v545
    %1715 = vmatpush1.msra.mxu0 %v544
    %1716 = vmatprep.subr.mxu0 %v549
    %1717 = vmatpush1.msra.mxu0 %v548
    %1718 = vmatprep.subr.mxu0 %v553
    %1719 = vmatpush1.msra.mxu0 %v552
    %1720 = vmatprep.subr.mxu0 %v557
    %1721 = vmatpush1.msra.mxu0 %v556
    %1722 = vmatprep.subr.mxu0 %v561
    %1723 = vmatpush1.msra.mxu0 %v560
    %1724 = vmatprep.subr.mxu0 %v565
    %1725 = vmatpush1.msra.mxu0 %v564
    %1726 = vmatprep.subr.mxu0 %v569
    %1727 = vmatpush1.msra.mxu0 %v568
    %1728 = vmatprep.subr.mxu0 %v573
    %1729 = vmatpush1.msra.mxu0 %v572
    %1730 = vmatprep.subr.mxu0 %v577
    %1731 = vmatpush1.msra.mxu0 %v576
    %1732 = vmatprep.subr.mxu0 %v581
    %1733 = vmatpush1.msra.mxu0 %v580
    %1734 = vmatprep.subr.mxu0 %v585
    %1735 = vmatpush1.msra.mxu0 %v584
    %1736 = vmatprep.subr.mxu0 %v589
    %1737 = vmatpush1.msra.mxu0 %v588
    %1738 = vmatprep.mubr.f32.mxu0 %v1578
    %1739 = vmatmul.mubr.f32.gmra.mrb[0].mxu0 %v1577
    %v1740 = vpop.f32.mrb[0].mxu0
    %v1741 = vadd.f32 %v1670, %v1740
    %v1742 = vpop.f32.mrb[0].mxu0
    %v1743 = vadd.f32 %v1672, %v1742
    %1744 = vdwg.mxu0
    %1745 = vmatprep.subr.mxu0 %v339
    %1746 = vmatpush1.msra.mxu0 %v338
    %1747 = vmatprep.subr.mxu0 %v343
    %1748 = vmatpush1.msra.mxu0 %v342
    %1749 = vmatprep.subr.mxu0 %v347
    %1750 = vmatpush1.msra.mxu0 %v346
    %1751 = vmatprep.subr.mxu0 %v351
    %1752 = vmatpush1.msra.mxu0 %v350
    %1753 = vmatprep.subr.mxu0 %v355
    %1754 = vmatpush1.msra.mxu0 %v354
    %1755 = vmatprep.subr.mxu0 %v359
    %1756 = vmatpush1.msra.mxu0 %v358
    %1757 = vmatprep.subr.mxu0 %v363
    %1758 = vmatpush1.msra.mxu0 %v362
    %1759 = vmatprep.subr.mxu0 %v367
    %1760 = vmatpush1.msra.mxu0 %v366
    %1761 = vmatprep.subr.mxu0 %v371
    %1762 = vmatpush1.msra.mxu0 %v370
    %1763 = vmatprep.subr.mxu0 %v375
    %1764 = vmatpush1.msra.mxu0 %v374
    %1765 = vmatprep.subr.mxu0 %v379
    %1766 = vmatpush1.msra.mxu0 %v378
    %1767 = vmatprep.subr.mxu0 %v383
    %1768 = vmatpush1.msra.mxu0 %v382
    %1769 = vmatprep.subr.mxu0 %v387
    %1770 = vmatpush1.msra.mxu0 %v386
    %1771 = vmatprep.subr.mxu0 %v391
    %1772 = vmatpush1.msra.mxu0 %v390
    %1773 = vmatprep.subr.mxu0 %v395
    %1774 = vmatpush1.msra.mxu0 %v394
    %1775 = vmatprep.subr.mxu0 %v399
    %1776 = vmatpush1.msra.mxu0 %v398
    %1777 = vmatprep.subr.mxu0 %v403
    %1778 = vmatpush1.msra.mxu0 %v402
    %1779 = vmatprep.subr.mxu0 %v407
    %1780 = vmatpush1.msra.mxu0 %v406
    %1781 = vmatprep.subr.mxu0 %v411
    %1782 = vmatpush1.msra.mxu0 %v410
    %1783 = vmatprep.subr.mxu0 %v415
    %1784 = vmatpush1.msra.mxu0 %v414
    %1785 = vmatprep.subr.mxu0 %v419
    %1786 = vmatpush1.msra.mxu0 %v418
    %1787 = vmatprep.subr.mxu0 %v423
    %1788 = vmatpush1.msra.mxu0 %v422
    %1789 = vmatprep.subr.mxu0 %v427
    %1790 = vmatpush1.msra.mxu0 %v426
    %1791 = vmatprep.subr.mxu0 %v431
    %1792 = vmatpush1.msra.mxu0 %v430
    %1793 = vmatprep.subr.mxu0 %v435
    %1794 = vmatpush1.msra.mxu0 %v434
    %1795 = vmatprep.subr.mxu0 %v439
    %1796 = vmatpush1.msra.mxu0 %v438
    %1797 = vmatprep.subr.mxu0 %v443
    %1798 = vmatpush1.msra.mxu0 %v442
    %1799 = vmatprep.subr.mxu0 %v447
    %1800 = vmatpush1.msra.mxu0 %v446
    %1801 = vmatprep.subr.mxu0 %v451
    %1802 = vmatpush1.msra.mxu0 %v450
    %1803 = vmatprep.subr.mxu0 %v455
    %1804 = vmatpush1.msra.mxu0 %v454
    %1805 = vmatprep.subr.mxu0 %v459
    %1806 = vmatpush1.msra.mxu0 %v458
    %1807 = vmatprep.subr.mxu0 %v463
    %1808 = vmatpush1.msra.mxu0 %v462
    %1809 = vmatprep.mubr.f32.mxu0 %v1576
    %1810 = vmatmul.mubr.f32.gmra.mrb[0].mxu0 %v1575
    %v1811 = vpop.f32.mrb[0].mxu0
    %v1812 = vadd.f32 %v1598, %v1811
    %v1813 = vpop.f32.mrb[0].mxu0
    %v1814 = vadd.f32 %v1602, %v1813
    %1815 = vdwg.mxu0
    %1816 = vmatprep.subr.mxu0 %v467
    %1817 = vmatpush1.msra.mxu0 %v466
    %1818 = vmatprep.subr.mxu0 %v471
    %1819 = vmatpush1.msra.mxu0 %v470
    %1820 = vmatprep.subr.mxu0 %v475
    %1821 = vmatpush1.msra.mxu0 %v474
    %1822 = vmatprep.subr.mxu0 %v479
    %1823 = vmatpush1.msra.mxu0 %v478
    %1824 = vmatprep.subr.mxu0 %v483
    %1825 = vmatpush1.msra.mxu0 %v482
    %1826 = vmatprep.subr.mxu0 %v487
    %1827 = vmatpush1.msra.mxu0 %v486
    %1828 = vmatprep.subr.mxu0 %v491
    %1829 = vmatpush1.msra.mxu0 %v490
    %1830 = vmatprep.subr.mxu0 %v495
    %1831 = vmatpush1.msra.mxu0 %v494
    %1832 = vmatprep.subr.mxu0 %v499
    %1833 = vmatpush1.msra.mxu0 %v498
    %1834 = vmatprep.subr.mxu0 %v503
    %1835 = vmatpush1.msra.mxu0 %v502
    %1836 = vmatprep.subr.mxu0 %v507
    %1837 = vmatpush1.msra.mxu0 %v506
    %1838 = vmatprep.subr.mxu0 %v511
    %1839 = vmatpush1.msra.mxu0 %v510
    %1840 = vmatprep.subr.mxu0 %v515
    %1841 = vmatpush1.msra.mxu0 %v514
    %1842 = vmatprep.subr.mxu0 %v519
    %1843 = vmatpush1.msra.mxu0 %v518
    %1844 = vmatprep.subr.mxu0 %v523
    %1845 = vmatpush1.msra.mxu0 %v522
    %1846 = vmatprep.subr.mxu0 %v527
    %1847 = vmatpush1.msra.mxu0 %v526
    %1848 = vmatprep.subr.mxu0 %v531
    %1849 = vmatpush1.msra.mxu0 %v530
    %1850 = vmatprep.subr.mxu0 %v535
    %1851 = vmatpush1.msra.mxu0 %v534
    %1852 = vmatprep.subr.mxu0 %v539
    %1853 = vmatpush1.msra.mxu0 %v538
    %1854 = vmatprep.subr.mxu0 %v543
    %1855 = vmatpush1.msra.mxu0 %v542
    %1856 = vmatprep.subr.mxu0 %v547
    %1857 = vmatpush1.msra.mxu0 %v546
    %1858 = vmatprep.subr.mxu0 %v551
    %1859 = vmatpush1.msra.mxu0 %v550
    %1860 = vmatprep.subr.mxu0 %v555
    %1861 = vmatpush1.msra.mxu0 %v554
    %1862 = vmatprep.subr.mxu0 %v559
    %1863 = vmatpush1.msra.mxu0 %v558
    %1864 = vmatprep.subr.mxu0 %v563
    %1865 = vmatpush1.msra.mxu0 %v562
    %1866 = vmatprep.subr.mxu0 %v567
    %1867 = vmatpush1.msra.mxu0 %v566
    %1868 = vmatprep.subr.mxu0 %v571
    %1869 = vmatpush1.msra.mxu0 %v570
    %1870 = vmatprep.subr.mxu0 %v575
    %1871 = vmatpush1.msra.mxu0 %v574
    %1872 = vmatprep.subr.mxu0 %v579
    %1873 = vmatpush1.msra.mxu0 %v578
    %1874 = vmatprep.subr.mxu0 %v583
    %1875 = vmatpush1.msra.mxu0 %v582
    %1876 = vmatprep.subr.mxu0 %v587
    %1877 = vmatpush1.msra.mxu0 %v586
    %1878 = vmatprep.subr.mxu0 %v591
    %1879 = vmatpush1.msra.mxu0 %v590
    %1880 = vmatprep.mubr.f32.mxu0 %v1578
    %1881 = vmatmul.mubr.f32.gmra.mrb[0].mxu0 %v1577
    %v1882 = vpop.f32.mrb[0].mxu0
    %v1883 = vadd.f32 %v1812, %v1882
    %v1884 = vpop.f32.mrb[0].mxu0
    %v1885 = vadd.f32 %v1814, %v1884
    %1886 = vdwg.mxu0
    %v1887 = vld [vmem:[#allocation2 + $0x60] sm:$0xff]
    %v1888 = vld [vmem:[#allocation2 + $0x68] sm:$0xff]
    %v1889 = vld [vmem:[#allocation2 + $0x70] sm:$0xff]
    %v1890 = vld [vmem:[#allocation2 + $0x78] sm:$0xff]
    %v1891 = vadd.f32 %v1741, %v1887
    %v1892 = vadd.f32 %v1743, %v1888
    %v1893 = vadd.f32 %v1883, %v1889
    %v1894 = vadd.f32 %v1885, %v1890
    %v1895 = vtanh.pop %v1891
    %v1896 = vtanh.pop %v1892
    %v1897 = vtanh.pop %v1893
    %v1898 = vtanh.pop %v1894
    %vm1899 = vcmp.lt.s32.totalorder %v594, 160
    %vm1900 = vcmp.lt.s32.totalorder %v595, 160
    %vm1901 = vcmp.lt.s32.totalorder %v596, 160
    %vm1902 = vcmp.lt.s32.totalorder %v597, 160
    %v1903 = vsel %vm1899, %v606, 0.0
    %v1904 = vsel %vm1900, %v610, 0.0
    %v1905 = vsel %vm1901, %v614, 0.0
    %v1906 = vsel %vm1902, %v618, 0.0
    %v1907 = vlaneseq
    %v1908 = vshrl.u32 %v1907, 7
    %v1909 = vsub.s32 0, %v1908
    %v1910 = vrot.slane %v1903, %v1909
    %v1911 = vlaneseq
    %v1912 = vshrl.u32 %v1911, 7
    %v1913 = vsub.s32 0, %v1912
    %v1914 = vrot.slane %v1904, %v1913
    %v1915 = vlaneseq
    %v1916 = vshrl.u32 %v1915, 7
    %v1917 = vsub.s32 0, %v1916
    %v1918 = vrot.slane %v1905, %v1917
    %v1919 = vlaneseq
    %v1920 = vshrl.u32 %v1919, 7
    %v1921 = vsub.s32 0, %v1920
    %v1922 = vrot.slane %v1906, %v1921
    %1923 = vmatprep.subr.mxu0 %v337
    %1924 = vmatpush1.msra.mxu0 %v336
    %1925 = vmatprep.subr.mxu0 %v341
    %1926 = vmatpush1.msra.mxu0 %v340
    %1927 = vmatprep.subr.mxu0 %v345
    %1928 = vmatpush1.msra.mxu0 %v344
    %1929 = vmatprep.subr.mxu0 %v349
    %1930 = vmatpush1.msra.mxu0 %v348
    %1931 = vmatprep.subr.mxu0 %v353
    %1932 = vmatpush1.msra.mxu0 %v352
    %1933 = vmatprep.subr.mxu0 %v357
    %1934 = vmatpush1.msra.mxu0 %v356
    %1935 = vmatprep.subr.mxu0 %v361
    %1936 = vmatpush1.msra.mxu0 %v360
    %1937 = vmatprep.subr.mxu0 %v365
    %1938 = vmatpush1.msra.mxu0 %v364
    %1939 = vmatprep.subr.mxu0 %v369
    %1940 = vmatpush1.msra.mxu0 %v368
    %1941 = vmatprep.subr.mxu0 %v373
    %1942 = vmatpush1.msra.mxu0 %v372
    %1943 = vmatprep.subr.mxu0 %v377
    %1944 = vmatpush1.msra.mxu0 %v376
    %1945 = vmatprep.subr.mxu0 %v381
    %1946 = vmatpush1.msra.mxu0 %v380
    %1947 = vmatprep.subr.mxu0 %v385
    %1948 = vmatpush1.msra.mxu0 %v384
    %1949 = vmatprep.subr.mxu0 %v389
    %1950 = vmatpush1.msra.mxu0 %v388
    %1951 = vmatprep.subr.mxu0 %v393
    %1952 = vmatpush1.msra.mxu0 %v392
    %1953 = vmatprep.subr.mxu0 %v397
    %1954 = vmatpush1.msra.mxu0 %v396
    %1955 = vmatprep.subr.mxu0 %v401
    %1956 = vmatpush1.msra.mxu0 %v400
    %1957 = vmatprep.subr.mxu0 %v405
    %1958 = vmatpush1.msra.mxu0 %v404
    %1959 = vmatprep.subr.mxu0 %v409
    %1960 = vmatpush1.msra.mxu0 %v408
    %1961 = vmatprep.subr.mxu0 %v413
    %1962 = vmatpush1.msra.mxu0 %v412
    %1963 = vmatprep.subr.mxu0 %v417
    %1964 = vmatpush1.msra.mxu0 %v416
    %1965 = vmatprep.subr.mxu0 %v421
    %1966 = vmatpush1.msra.mxu0 %v420
    %1967 = vmatprep.subr.mxu0 %v425
    %1968 = vmatpush1.msra.mxu0 %v424
    %1969 = vmatprep.subr.mxu0 %v429
    %1970 = vmatpush1.msra.mxu0 %v428
    %1971 = vmatprep.subr.mxu0 %v433
    %1972 = vmatpush1.msra.mxu0 %v432
    %1973 = vmatprep.subr.mxu0 %v437
    %1974 = vmatpush1.msra.mxu0 %v436
    %1975 = vmatprep.subr.mxu0 %v441
    %1976 = vmatpush1.msra.mxu0 %v440
    %1977 = vmatprep.subr.mxu0 %v445
    %1978 = vmatpush1.msra.mxu0 %v444
    %1979 = vmatprep.subr.mxu0 %v449
    %1980 = vmatpush1.msra.mxu0 %v448
    %1981 = vmatprep.subr.mxu0 %v453
    %1982 = vmatpush1.msra.mxu0 %v452
    %1983 = vmatprep.subr.mxu0 %v457
    %1984 = vmatpush1.msra.mxu0 %v456
    %1985 = vmatprep.subr.mxu0 %v461
    %1986 = vmatpush1.msra.mxu0 %v460
    %1987 = vmatprep.mubr.f32.mxu0 %v1896
    %1988 = vmatmul.mubr.f32.gmra.mrb[0].mxu0 %v1895
    %v1989 = vpop.f32.mrb[0].mxu0
    %v1990 = vadd.f32 %v1910, %v1989
    %v1991 = vpop.f32.mrb[0].mxu0
    %v1992 = vadd.f32 %v1914, %v1991
    %1993 = vdwg.mxu0
    %1994 = vmatprep.subr.mxu0 %v465
    %1995 = vmatpush1.msra.mxu0 %v464
    %1996 = vmatprep.subr.mxu0 %v469
    %1997 = vmatpush1.msra.mxu0 %v468
    %1998 = vmatprep.subr.mxu0 %v473
    %1999 = vmatpush1.msra.mxu0 %v472
    %2000 = vmatprep.subr.mxu0 %v477
    %2001 = vmatpush1.msra.mxu0 %v476
    %2002 = vmatprep.subr.mxu0 %v481
    %2003 = vmatpush1.msra.mxu0 %v480
    %2004 = vmatprep.subr.mxu0 %v485
    %2005 = vmatpush1.msra.mxu0 %v484
    %2006 = vmatprep.subr.mxu0 %v489
    %2007 = vmatpush1.msra.mxu0 %v488
    %2008 = vmatprep.subr.mxu0 %v493
    %2009 = vmatpush1.msra.mxu0 %v492
    %2010 = vmatprep.subr.mxu0 %v497
    %2011 = vmatpush1.msra.mxu0 %v496
    %2012 = vmatprep.subr.mxu0 %v501
    %2013 = vmatpush1.msra.mxu0 %v500
    %2014 = vmatprep.subr.mxu0 %v505
    %2015 = vmatpush1.msra.mxu0 %v504
    %2016 = vmatprep.subr.mxu0 %v509
    %2017 = vmatpush1.msra.mxu0 %v508
    %2018 = vmatprep.subr.mxu0 %v513
    %2019 = vmatpush1.msra.mxu0 %v512
    %2020 = vmatprep.subr.mxu0 %v517
    %2021 = vmatpush1.msra.mxu0 %v516
    %2022 = vmatprep.subr.mxu0 %v521
    %2023 = vmatpush1.msra.mxu0 %v520
    %2024 = vmatprep.subr.mxu0 %v525
    %2025 = vmatpush1.msra.mxu0 %v524
    %2026 = vmatprep.subr.mxu0 %v529
    %2027 = vmatpush1.msra.mxu0 %v528
    %2028 = vmatprep.subr.mxu0 %v533
    %2029 = vmatpush1.msra.mxu0 %v532
    %2030 = vmatprep.subr.mxu0 %v537
    %2031 = vmatpush1.msra.mxu0 %v536
    %2032 = vmatprep.subr.mxu0 %v541
    %2033 = vmatpush1.msra.mxu0 %v540
    %2034 = vmatprep.subr.mxu0 %v545
    %2035 = vmatpush1.msra.mxu0 %v544
    %2036 = vmatprep.subr.mxu0 %v549
    %2037 = vmatpush1.msra.mxu0 %v548
    %2038 = vmatprep.subr.mxu0 %v553
    %2039 = vmatpush1.msra.mxu0 %v552
    %2040 = vmatprep.subr.mxu0 %v557
    %2041 = vmatpush1.msra.mxu0 %v556
    %2042 = vmatprep.subr.mxu0 %v561
    %2043 = vmatpush1.msra.mxu0 %v560
    %2044 = vmatprep.subr.mxu0 %v565
    %2045 = vmatpush1.msra.mxu0 %v564
    %2046 = vmatprep.subr.mxu0 %v569
    %2047 = vmatpush1.msra.mxu0 %v568
    %2048 = vmatprep.subr.mxu0 %v573
    %2049 = vmatpush1.msra.mxu0 %v572
    %2050 = vmatprep.subr.mxu0 %v577
    %2051 = vmatpush1.msra.mxu0 %v576
    %2052 = vmatprep.subr.mxu0 %v581
    %2053 = vmatpush1.msra.mxu0 %v580
    %2054 = vmatprep.subr.mxu0 %v585
    %2055 = vmatpush1.msra.mxu0 %v584
    %2056 = vmatprep.subr.mxu0 %v589
    %2057 = vmatpush1.msra.mxu0 %v588
    %2058 = vmatprep.mubr.f32.mxu0 %v1898
    %2059 = vmatmul.mubr.f32.gmra.mrb[0].mxu0 %v1897
    %v2060 = vpop.f32.mrb[0].mxu0
    %v2061 = vadd.f32 %v1990, %v2060
    %v2062 = vpop.f32.mrb[0].mxu0
    %v2063 = vadd.f32 %v1992, %v2062
    %2064 = vdwg.mxu0
    %2065 = vmatprep.subr.mxu0 %v339
    %2066 = vmatpush1.msra.mxu0 %v338
    %2067 = vmatprep.subr.mxu0 %v343
    %2068 = vmatpush1.msra.mxu0 %v342
    %2069 = vmatprep.subr.mxu0 %v347
    %2070 = vmatpush1.msra.mxu0 %v346
    %2071 = vmatprep.subr.mxu0 %v351
    %2072 = vmatpush1.msra.mxu0 %v350
    %2073 = vmatprep.subr.mxu0 %v355
    %2074 = vmatpush1.msra.mxu0 %v354
    %2075 = vmatprep.subr.mxu0 %v359
    %2076 = vmatpush1.msra.mxu0 %v358
    %2077 = vmatprep.subr.mxu0 %v363
    %2078 = vmatpush1.msra.mxu0 %v362
    %2079 = vmatprep.subr.mxu0 %v367
    %2080 = vmatpush1.msra.mxu0 %v366
    %2081 = vmatprep.subr.mxu0 %v371
    %2082 = vmatpush1.msra.mxu0 %v370
    %2083 = vmatprep.subr.mxu0 %v375
    %2084 = vmatpush1.msra.mxu0 %v374
    %2085 = vmatprep.subr.mxu0 %v379
    %2086 = vmatpush1.msra.mxu0 %v378
    %2087 = vmatprep.subr.mxu0 %v383
    %2088 = vmatpush1.msra.mxu0 %v382
    %2089 = vmatprep.subr.mxu0 %v387
    %2090 = vmatpush1.msra.mxu0 %v386
    %2091 = vmatprep.subr.mxu0 %v391
    %2092 = vmatpush1.msra.mxu0 %v390
    %2093 = vmatprep.subr.mxu0 %v395
    %2094 = vmatpush1.msra.mxu0 %v394
    %2095 = vmatprep.subr.mxu0 %v399
    %2096 = vmatpush1.msra.mxu0 %v398
    %2097 = vmatprep.subr.mxu0 %v403
    %2098 = vmatpush1.msra.mxu0 %v402
    %2099 = vmatprep.subr.mxu0 %v407
    %2100 = vmatpush1.msra.mxu0 %v406
    %2101 = vmatprep.subr.mxu0 %v411
    %2102 = vmatpush1.msra.mxu0 %v410
    %2103 = vmatprep.subr.mxu0 %v415
    %2104 = vmatpush1.msra.mxu0 %v414
    %2105 = vmatprep.subr.mxu0 %v419
    %2106 = vmatpush1.msra.mxu0 %v418
    %2107 = vmatprep.subr.mxu0 %v423
    %2108 = vmatpush1.msra.mxu0 %v422
    %2109 = vmatprep.subr.mxu0 %v427
    %2110 = vmatpush1.msra.mxu0 %v426
    %2111 = vmatprep.subr.mxu0 %v431
    %2112 = vmatpush1.msra.mxu0 %v430
    %2113 = vmatprep.subr.mxu0 %v435
    %2114 = vmatpush1.msra.mxu0 %v434
    %2115 = vmatprep.subr.mxu0 %v439
    %2116 = vmatpush1.msra.mxu0 %v438
    %2117 = vmatprep.subr.mxu0 %v443
    %2118 = vmatpush1.msra.mxu0 %v442
    %2119 = vmatprep.subr.mxu0 %v447
    %2120 = vmatpush1.msra.mxu0 %v446
    %2121 = vmatprep.subr.mxu0 %v451
    %2122 = vmatpush1.msra.mxu0 %v450
    %2123 = vmatprep.subr.mxu0 %v455
    %2124 = vmatpush1.msra.mxu0 %v454
    %2125 = vmatprep.subr.mxu0 %v459
    %2126 = vmatpush1.msra.mxu0 %v458
    %2127 = vmatprep.subr.mxu0 %v463
    %2128 = vmatpush1.msra.mxu0 %v462
    %2129 = vmatprep.mubr.f32.mxu0 %v1896
    %2130 = vmatmul.mubr.f32.gmra.mrb[0].mxu0 %v1895
    %v2131 = vpop.f32.mrb[0].mxu0
    %v2132 = vadd.f32 %v1918, %v2131
    %v2133 = vpop.f32.mrb[0].mxu0
    %v2134 = vadd.f32 %v1922, %v2133
    %2135 = vdwg.mxu0
    %2136 = vmatprep.subr.mxu0 %v467
    %2137 = vmatpush1.msra.mxu0 %v466
    %2138 = vmatprep.subr.mxu0 %v471
    %2139 = vmatpush1.msra.mxu0 %v470
    %2140 = vmatprep.subr.mxu0 %v475
    %2141 = vmatpush1.msra.mxu0 %v474
    %2142 = vmatprep.subr.mxu0 %v479
    %2143 = vmatpush1.msra.mxu0 %v478
    %2144 = vmatprep.subr.mxu0 %v483
    %2145 = vmatpush1.msra.mxu0 %v482
    %2146 = vmatprep.subr.mxu0 %v487
    %2147 = vmatpush1.msra.mxu0 %v486
    %2148 = vmatprep.subr.mxu0 %v491
    %2149 = vmatpush1.msra.mxu0 %v490
    %2150 = vmatprep.subr.mxu0 %v495
    %2151 = vmatpush1.msra.mxu0 %v494
    %2152 = vmatprep.subr.mxu0 %v499
    %2153 = vmatpush1.msra.mxu0 %v498
    %2154 = vmatprep.subr.mxu0 %v503
    %2155 = vmatpush1.msra.mxu0 %v502
    %2156 = vmatprep.subr.mxu0 %v507
    %2157 = vmatpush1.msra.mxu0 %v506
    %2158 = vmatprep.subr.mxu0 %v511
    %2159 = vmatpush1.msra.mxu0 %v510
    %2160 = vmatprep.subr.mxu0 %v515
    %2161 = vmatpush1.msra.mxu0 %v514
    %2162 = vmatprep.subr.mxu0 %v519
    %2163 = vmatpush1.msra.mxu0 %v518
    %2164 = vmatprep.subr.mxu0 %v523
    %2165 = vmatpush1.msra.mxu0 %v522
    %2166 = vmatprep.subr.mxu0 %v527
    %2167 = vmatpush1.msra.mxu0 %v526
    %2168 = vmatprep.subr.mxu0 %v531
    %2169 = vmatpush1.msra.mxu0 %v530
    %2170 = vmatprep.subr.mxu0 %v535
    %2171 = vmatpush1.msra.mxu0 %v534
    %2172 = vmatprep.subr.mxu0 %v539
    %2173 = vmatpush1.msra.mxu0 %v538
    %2174 = vmatprep.subr.mxu0 %v543
    %2175 = vmatpush1.msra.mxu0 %v542
    %2176 = vmatprep.subr.mxu0 %v547
    %2177 = vmatpush1.msra.mxu0 %v546
    %2178 = vmatprep.subr.mxu0 %v551
    %2179 = vmatpush1.msra.mxu0 %v550
    %2180 = vmatprep.subr.mxu0 %v555
    %2181 = vmatpush1.msra.mxu0 %v554
    %2182 = vmatprep.subr.mxu0 %v559
    %2183 = vmatpush1.msra.mxu0 %v558
    %2184 = vmatprep.subr.mxu0 %v563
    %2185 = vmatpush1.msra.mxu0 %v562
    %2186 = vmatprep.subr.mxu0 %v567
    %2187 = vmatpush1.msra.mxu0 %v566
    %2188 = vmatprep.subr.mxu0 %v571
    %2189 = vmatpush1.msra.mxu0 %v570
    %2190 = vmatprep.subr.mxu0 %v575
    %2191 = vmatpush1.msra.mxu0 %v574
    %2192 = vmatprep.subr.mxu0 %v579
    %2193 = vmatpush1.msra.mxu0 %v578
    %2194 = vmatprep.subr.mxu0 %v583
    %2195 = vmatpush1.msra.mxu0 %v582
    %2196 = vmatprep.subr.mxu0 %v587
    %2197 = vmatpush1.msra.mxu0 %v586
    %2198 = vmatprep.subr.mxu0 %v591
    %2199 = vmatpush1.msra.mxu0 %v590
    %2200 = vmatprep.mubr.f32.mxu0 %v1898
    %2201 = vmatmul.mubr.f32.gmra.mrb[0].mxu0 %v1897
    %v2202 = vpop.f32.mrb[0].mxu0
    %v2203 = vadd.f32 %v2132, %v2202
    %v2204 = vpop.f32.mrb[0].mxu0
    %v2205 = vadd.f32 %v2134, %v2204
    %2206 = vdwg.mxu0
    %v2207 = vld [vmem:[#allocation2 + $0x80] sm:$0xff]
    %v2208 = vld [vmem:[#allocation2 + $0x88] sm:$0xff]
    %v2209 = vld [vmem:[#allocation2 + $0x90] sm:$0xff]
    %v2210 = vld [vmem:[#allocation2 + $0x98] sm:$0xff]
    %v2211 = vadd.f32 %v2061, %v2207
    %v2212 = vadd.f32 %v2063, %v2208
    %v2213 = vadd.f32 %v2203, %v2209
    %v2214 = vadd.f32 %v2205, %v2210
    %v2215 = vtanh.pop %v2211
    %v2216 = vtanh.pop %v2212
    %v2217 = vtanh.pop %v2213
    %v2218 = vtanh.pop %v2214
    %vm2219 = vcmp.lt.s32.totalorder %v594, 192
    %vm2220 = vcmp.lt.s32.totalorder %v595, 192
    %vm2221 = vcmp.lt.s32.totalorder %v596, 192
    %vm2222 = vcmp.lt.s32.totalorder %v597, 192
    %v2223 = vsel %vm2219, %v606, 0.0
    %v2224 = vsel %vm2220, %v610, 0.0
    %v2225 = vsel %vm2221, %v614, 0.0
    %v2226 = vsel %vm2222, %v618, 0.0
    %v2227 = vlaneseq
    %v2228 = vshrl.u32 %v2227, 7
    %v2229 = vsub.s32 0, %v2228
    %v2230 = vrot.slane %v2223, %v2229
    %v2231 = vlaneseq
    %v2232 = vshrl.u32 %v2231, 7
    %v2233 = vsub.s32 0, %v2232
    %v2234 = vrot.slane %v2224, %v2233
    %v2235 = vlaneseq
    %v2236 = vshrl.u32 %v2235, 7
    %v2237 = vsub.s32 0, %v2236
    %v2238 = vrot.slane %v2225, %v2237
    %v2239 = vlaneseq
    %v2240 = vshrl.u32 %v2239, 7
    %v2241 = vsub.s32 0, %v2240
    %v2242 = vrot.slane %v2226, %v2241
    %2243 = vmatprep.subr.mxu0 %v337
    %2244 = vmatpush1.msra.mxu0 %v336
    %2245 = vmatprep.subr.mxu0 %v341
    %2246 = vmatpush1.msra.mxu0 %v340
    %2247 = vmatprep.subr.mxu0 %v345
    %2248 = vmatpush1.msra.mxu0 %v344
    %2249 = vmatprep.subr.mxu0 %v349
    %2250 = vmatpush1.msra.mxu0 %v348
    %2251 = vmatprep.subr.mxu0 %v353
    %2252 = vmatpush1.msra.mxu0 %v352
    %2253 = vmatprep.subr.mxu0 %v357
    %2254 = vmatpush1.msra.mxu0 %v356
    %2255 = vmatprep.subr.mxu0 %v361
    %2256 = vmatpush1.msra.mxu0 %v360
    %2257 = vmatprep.subr.mxu0 %v365
    %2258 = vmatpush1.msra.mxu0 %v364
    %2259 = vmatprep.subr.mxu0 %v369
    %2260 = vmatpush1.msra.mxu0 %v368
    %2261 = vmatprep.subr.mxu0 %v373
    %2262 = vmatpush1.msra.mxu0 %v372
    %2263 = vmatprep.subr.mxu0 %v377
    %2264 = vmatpush1.msra.mxu0 %v376
    %2265 = vmatprep.subr.mxu0 %v381
    %2266 = vmatpush1.msra.mxu0 %v380
    %2267 = vmatprep.subr.mxu0 %v385
    %2268 = vmatpush1.msra.mxu0 %v384
    %2269 = vmatprep.subr.mxu0 %v389
    %2270 = vmatpush1.msra.mxu0 %v388
    %2271 = vmatprep.subr.mxu0 %v393
    %2272 = vmatpush1.msra.mxu0 %v392
    %2273 = vmatprep.subr.mxu0 %v397
    %2274 = vmatpush1.msra.mxu0 %v396
    %2275 = vmatprep.subr.mxu0 %v401
    %2276 = vmatpush1.msra.mxu0 %v400
    %2277 = vmatprep.subr.mxu0 %v405
    %2278 = vmatpush1.msra.mxu0 %v404
    %2279 = vmatprep.subr.mxu0 %v409
    %2280 = vmatpush1.msra.mxu0 %v408
    %2281 = vmatprep.subr.mxu0 %v413
    %2282 = vmatpush1.msra.mxu0 %v412
    %2283 = vmatprep.subr.mxu0 %v417
    %2284 = vmatpush1.msra.mxu0 %v416
    %2285 = vmatprep.subr.mxu0 %v421
    %2286 = vmatpush1.msra.mxu0 %v420
    %2287 = vmatprep.subr.mxu0 %v425
    %2288 = vmatpush1.msra.mxu0 %v424
    %2289 = vmatprep.subr.mxu0 %v429
    %2290 = vmatpush1.msra.mxu0 %v428
    %2291 = vmatprep.subr.mxu0 %v433
    %2292 = vmatpush1.msra.mxu0 %v432
    %2293 = vmatprep.subr.mxu0 %v437
    %2294 = vmatpush1.msra.mxu0 %v436
    %2295 = vmatprep.subr.mxu0 %v441
    %2296 = vmatpush1.msra.mxu0 %v440
    %2297 = vmatprep.subr.mxu0 %v445
    %2298 = vmatpush1.msra.mxu0 %v444
    %2299 = vmatprep.subr.mxu0 %v449
    %2300 = vmatpush1.msra.mxu0 %v448
    %2301 = vmatprep.subr.mxu0 %v453
    %2302 = vmatpush1.msra.mxu0 %v452
    %2303 = vmatprep.subr.mxu0 %v457
    %2304 = vmatpush1.msra.mxu0 %v456
    %2305 = vmatprep.subr.mxu0 %v461
    %2306 = vmatpush1.msra.mxu0 %v460
    %2307 = vmatprep.mubr.f32.mxu0 %v2216
    %2308 = vmatmul.mubr.f32.gmra.mrb[0].mxu0 %v2215
    %v2309 = vpop.f32.mrb[0].mxu0
    %v2310 = vadd.f32 %v2230, %v2309
    %v2311 = vpop.f32.mrb[0].mxu0
    %v2312 = vadd.f32 %v2234, %v2311
    %2313 = vdwg.mxu0
    %2314 = vmatprep.subr.mxu0 %v465
    %2315 = vmatpush1.msra.mxu0 %v464
    %2316 = vmatprep.subr.mxu0 %v469
    %2317 = vmatpush1.msra.mxu0 %v468
    %2318 = vmatprep.subr.mxu0 %v473
    %2319 = vmatpush1.msra.mxu0 %v472
    %2320 = vmatprep.subr.mxu0 %v477
    %2321 = vmatpush1.msra.mxu0 %v476
    %2322 = vmatprep.subr.mxu0 %v481
    %2323 = vmatpush1.msra.mxu0 %v480
    %2324 = vmatprep.subr.mxu0 %v485
    %2325 = vmatpush1.msra.mxu0 %v484
    %2326 = vmatprep.subr.mxu0 %v489
    %2327 = vmatpush1.msra.mxu0 %v488
    %2328 = vmatprep.subr.mxu0 %v493
    %2329 = vmatpush1.msra.mxu0 %v492
    %2330 = vmatprep.subr.mxu0 %v497
    %2331 = vmatpush1.msra.mxu0 %v496
    %2332 = vmatprep.subr.mxu0 %v501
    %2333 = vmatpush1.msra.mxu0 %v500
    %2334 = vmatprep.subr.mxu0 %v505
    %2335 = vmatpush1.msra.mxu0 %v504
    %2336 = vmatprep.subr.mxu0 %v509
    %2337 = vmatpush1.msra.mxu0 %v508
    %2338 = vmatprep.subr.mxu0 %v513
    %2339 = vmatpush1.msra.mxu0 %v512
    %2340 = vmatprep.subr.mxu0 %v517
    %2341 = vmatpush1.msra.mxu0 %v516
    %2342 = vmatprep.subr.mxu0 %v521
    %2343 = vmatpush1.msra.mxu0 %v520
    %2344 = vmatprep.subr.mxu0 %v525
    %2345 = vmatpush1.msra.mxu0 %v524
    %2346 = vmatprep.subr.mxu0 %v529
    %2347 = vmatpush1.msra.mxu0 %v528
    %2348 = vmatprep.subr.mxu0 %v533
    %2349 = vmatpush1.msra.mxu0 %v532
    %2350 = vmatprep.subr.mxu0 %v537
    %2351 = vmatpush1.msra.mxu0 %v536
    %2352 = vmatprep.subr.mxu0 %v541
    %2353 = vmatpush1.msra.mxu0 %v540
    %2354 = vmatprep.subr.mxu0 %v545
    %2355 = vmatpush1.msra.mxu0 %v544
    %2356 = vmatprep.subr.mxu0 %v549
    %2357 = vmatpush1.msra.mxu0 %v548
    %2358 = vmatprep.subr.mxu0 %v553
    %2359 = vmatpush1.msra.mxu0 %v552
    %2360 = vmatprep.subr.mxu0 %v557
    %2361 = vmatpush1.msra.mxu0 %v556
    %2362 = vmatprep.subr.mxu0 %v561
    %2363 = vmatpush1.msra.mxu0 %v560
    %2364 = vmatprep.subr.mxu0 %v565
    %2365 = vmatpush1.msra.mxu0 %v564
    %2366 = vmatprep.subr.mxu0 %v569
    %2367 = vmatpush1.msra.mxu0 %v568
    %2368 = vmatprep.subr.mxu0 %v573
    %2369 = vmatpush1.msra.mxu0 %v572
    %2370 = vmatprep.subr.mxu0 %v577
    %2371 = vmatpush1.msra.mxu0 %v576
    %2372 = vmatprep.subr.mxu0 %v581
    %2373 = vmatpush1.msra.mxu0 %v580
    %2374 = vmatprep.subr.mxu0 %v585
    %2375 = vmatpush1.msra.mxu0 %v584
    %2376 = vmatprep.subr.mxu0 %v589
    %2377 = vmatpush1.msra.mxu0 %v588
    %2378 = vmatprep.mubr.f32.mxu0 %v2218
    %2379 = vmatmul.mubr.f32.gmra.mrb[0].mxu0 %v2217
    %v2380 = vpop.f32.mrb[0].mxu0
    %v2381 = vadd.f32 %v2310, %v2380
    %v2382 = vpop.f32.mrb[0].mxu0
    %v2383 = vadd.f32 %v2312, %v2382
    %2384 = vdwg.mxu0
    %2385 = vmatprep.subr.mxu0 %v339
    %2386 = vmatpush1.msra.mxu0 %v338
    %2387 = vmatprep.subr.mxu0 %v343
    %2388 = vmatpush1.msra.mxu0 %v342
    %2389 = vmatprep.subr.mxu0 %v347
    %2390 = vmatpush1.msra.mxu0 %v346
    %2391 = vmatprep.subr.mxu0 %v351
    %2392 = vmatpush1.msra.mxu0 %v350
    %2393 = vmatprep.subr.mxu0 %v355
    %2394 = vmatpush1.msra.mxu0 %v354
    %2395 = vmatprep.subr.mxu0 %v359
    %2396 = vmatpush1.msra.mxu0 %v358
    %2397 = vmatprep.subr.mxu0 %v363
    %2398 = vmatpush1.msra.mxu0 %v362
    %2399 = vmatprep.subr.mxu0 %v367
    %2400 = vmatpush1.msra.mxu0 %v366
    %2401 = vmatprep.subr.mxu0 %v371
    %2402 = vmatpush1.msra.mxu0 %v370
    %2403 = vmatprep.subr.mxu0 %v375
    %2404 = vmatpush1.msra.mxu0 %v374
    %2405 = vmatprep.subr.mxu0 %v379
    %2406 = vmatpush1.msra.mxu0 %v378
    %2407 = vmatprep.subr.mxu0 %v383
    %2408 = vmatpush1.msra.mxu0 %v382
    %2409 = vmatprep.subr.mxu0 %v387
    %2410 = vmatpush1.msra.mxu0 %v386
    %2411 = vmatprep.subr.mxu0 %v391
    %2412 = vmatpush1.msra.mxu0 %v390
    %2413 = vmatprep.subr.mxu0 %v395
    %2414 = vmatpush1.msra.mxu0 %v394
    %2415 = vmatprep.subr.mxu0 %v399
    %2416 = vmatpush1.msra.mxu0 %v398
    %2417 = vmatprep.subr.mxu0 %v403
    %2418 = vmatpush1.msra.mxu0 %v402
    %2419 = vmatprep.subr.mxu0 %v407
    %2420 = vmatpush1.msra.mxu0 %v406
    %2421 = vmatprep.subr.mxu0 %v411
    %2422 = vmatpush1.msra.mxu0 %v410
    %2423 = vmatprep.subr.mxu0 %v415
    %2424 = vmatpush1.msra.mxu0 %v414
    %2425 = vmatprep.subr.mxu0 %v419
    %2426 = vmatpush1.msra.mxu0 %v418
    %2427 = vmatprep.subr.mxu0 %v423
    %2428 = vmatpush1.msra.mxu0 %v422
    %2429 = vmatprep.subr.mxu0 %v427
    %2430 = vmatpush1.msra.mxu0 %v426
    %2431 = vmatprep.subr.mxu0 %v431
    %2432 = vmatpush1.msra.mxu0 %v430
    %2433 = vmatprep.subr.mxu0 %v435
    %2434 = vmatpush1.msra.mxu0 %v434
    %2435 = vmatprep.subr.mxu0 %v439
    %2436 = vmatpush1.msra.mxu0 %v438
    %2437 = vmatprep.subr.mxu0 %v443
    %2438 = vmatpush1.msra.mxu0 %v442
    %2439 = vmatprep.subr.mxu0 %v447
    %2440 = vmatpush1.msra.mxu0 %v446
    %2441 = vmatprep.subr.mxu0 %v451
    %2442 = vmatpush1.msra.mxu0 %v450
    %2443 = vmatprep.subr.mxu0 %v455
    %2444 = vmatpush1.msra.mxu0 %v454
    %2445 = vmatprep.subr.mxu0 %v459
    %2446 = vmatpush1.msra.mxu0 %v458
    %2447 = vmatprep.subr.mxu0 %v463
    %2448 = vmatpush1.msra.mxu0 %v462
    %2449 = vmatprep.mubr.f32.mxu0 %v2216
    %2450 = vmatmul.mubr.f32.gmra.mrb[0].mxu0 %v2215
    %v2451 = vpop.f32.mrb[0].mxu0
    %v2452 = vadd.f32 %v2238, %v2451
    %v2453 = vpop.f32.mrb[0].mxu0
    %v2454 = vadd.f32 %v2242, %v2453
    %2455 = vdwg.mxu0
    %2456 = vmatprep.subr.mxu0 %v467
    %2457 = vmatpush1.msra.mxu0 %v466
    %2458 = vmatprep.subr.mxu0 %v471
    %2459 = vmatpush1.msra.mxu0 %v470
    %2460 = vmatprep.subr.mxu0 %v475
    %2461 = vmatpush1.msra.mxu0 %v474
    %2462 = vmatprep.subr.mxu0 %v479
    %2463 = vmatpush1.msra.mxu0 %v478
    %2464 = vmatprep.subr.mxu0 %v483
    %2465 = vmatpush1.msra.mxu0 %v482
    %2466 = vmatprep.subr.mxu0 %v487
    %2467 = vmatpush1.msra.mxu0 %v486
    %2468 = vmatprep.subr.mxu0 %v491
    %2469 = vmatpush1.msra.mxu0 %v490
    %2470 = vmatprep.subr.mxu0 %v495
    %2471 = vmatpush1.msra.mxu0 %v494
    %2472 = vmatprep.subr.mxu0 %v499
    %2473 = vmatpush1.msra.mxu0 %v498
    %2474 = vmatprep.subr.mxu0 %v503
    %2475 = vmatpush1.msra.mxu0 %v502
    %2476 = vmatprep.subr.mxu0 %v507
    %2477 = vmatpush1.msra.mxu0 %v506
    %2478 = vmatprep.subr.mxu0 %v511
    %2479 = vmatpush1.msra.mxu0 %v510
    %2480 = vmatprep.subr.mxu0 %v515
    %2481 = vmatpush1.msra.mxu0 %v514
    %2482 = vmatprep.subr.mxu0 %v519
    %2483 = vmatpush1.msra.mxu0 %v518
    %2484 = vmatprep.subr.mxu0 %v523
    %2485 = vmatpush1.msra.mxu0 %v522
    %2486 = vmatprep.subr.mxu0 %v527
    %2487 = vmatpush1.msra.mxu0 %v526
    %2488 = vmatprep.subr.mxu0 %v531
    %2489 = vmatpush1.msra.mxu0 %v530
    %2490 = vmatprep.subr.mxu0 %v535
    %2491 = vmatpush1.msra.mxu0 %v534
    %2492 = vmatprep.subr.mxu0 %v539
    %2493 = vmatpush1.msra.mxu0 %v538
    %2494 = vmatprep.subr.mxu0 %v543
    %2495 = vmatpush1.msra.mxu0 %v542
    %2496 = vmatprep.subr.mxu0 %v547
    %2497 = vmatpush1.msra.mxu0 %v546
    %2498 = vmatprep.subr.mxu0 %v551
    %2499 = vmatpush1.msra.mxu0 %v550
    %2500 = vmatprep.subr.mxu0 %v555
    %2501 = vmatpush1.msra.mxu0 %v554
    %2502 = vmatprep.subr.mxu0 %v559
    %2503 = vmatpush1.msra.mxu0 %v558
    %2504 = vmatprep.subr.mxu0 %v563
    %2505 = vmatpush1.msra.mxu0 %v562
    %2506 = vmatprep.subr.mxu0 %v567
    %2507 = vmatpush1.msra.mxu0 %v566
    %2508 = vmatprep.subr.mxu0 %v571
    %2509 = vmatpush1.msra.mxu0 %v570
    %2510 = vmatprep.subr.mxu0 %v575
    %2511 = vmatpush1.msra.mxu0 %v574
    %2512 = vmatprep.subr.mxu0 %v579
    %2513 = vmatpush1.msra.mxu0 %v578
    %2514 = vmatprep.subr.mxu0 %v583
    %2515 = vmatpush1.msra.mxu0 %v582
    %2516 = vmatprep.subr.mxu0 %v587
    %2517 = vmatpush1.msra.mxu0 %v586
    %2518 = vmatprep.subr.mxu0 %v591
    %2519 = vmatpush1.msra.mxu0 %v590
    %2520 = vmatprep.mubr.f32.mxu0 %v2218
    %2521 = vmatmul.mubr.f32.gmra.mrb[0].mxu0 %v2217
    %v2522 = vpop.f32.mrb[0].mxu0
    %v2523 = vadd.f32 %v2452, %v2522
    %v2524 = vpop.f32.mrb[0].mxu0
    %v2525 = vadd.f32 %v2454, %v2524
    %2526 = vdwg.mxu0
    %v2527 = vld [vmem:[#allocation2 + $0xa0] sm:$0xff]
    %v2528 = vld [vmem:[#allocation2 + $0xa8] sm:$0xff]
    %v2529 = vld [vmem:[#allocation2 + $0xb0] sm:$0xff]
    %v2530 = vld [vmem:[#allocation2 + $0xb8] sm:$0xff]
    %v2531 = vadd.f32 %v2381, %v2527
    %v2532 = vadd.f32 %v2383, %v2528
    %v2533 = vadd.f32 %v2523, %v2529
    %v2534 = vadd.f32 %v2525, %v2530
    %v2535 = vtanh.pop %v2531
    %v2536 = vtanh.pop %v2532
    %v2537 = vtanh.pop %v2533
    %v2538 = vtanh.pop %v2534
    %vm2539 = vcmp.lt.s32.totalorder %v594, 224
    %vm2540 = vcmp.lt.s32.totalorder %v595, 224
    %vm2541 = vcmp.lt.s32.totalorder %v596, 224
    %vm2542 = vcmp.lt.s32.totalorder %v597, 224
    %v2543 = vsel %vm2539, %v606, 0.0
    %v2544 = vsel %vm2540, %v610, 0.0
    %v2545 = vsel %vm2541, %v614, 0.0
    %v2546 = vsel %vm2542, %v618, 0.0
    %v2547 = vlaneseq
    %v2548 = vshrl.u32 %v2547, 7
    %v2549 = vsub.s32 0, %v2548
    %v2550 = vrot.slane %v2543, %v2549
    %v2551 = vlaneseq
    %v2552 = vshrl.u32 %v2551, 7
    %v2553 = vsub.s32 0, %v2552
    %v2554 = vrot.slane %v2544, %v2553
    %v2555 = vlaneseq
    %v2556 = vshrl.u32 %v2555, 7
    %v2557 = vsub.s32 0, %v2556
    %v2558 = vrot.slane %v2545, %v2557
    %v2559 = vlaneseq
    %v2560 = vshrl.u32 %v2559, 7
    %v2561 = vsub.s32 0, %v2560
    %v2562 = vrot.slane %v2546, %v2561
    %2563 = vmatprep.subr.mxu0 %v337
    %2564 = vmatpush1.msra.mxu0 %v336
    %2565 = vmatprep.subr.mxu0 %v341
    %2566 = vmatpush1.msra.mxu0 %v340
    %2567 = vmatprep.subr.mxu0 %v345
    %2568 = vmatpush1.msra.mxu0 %v344
    %2569 = vmatprep.subr.mxu0 %v349
    %2570 = vmatpush1.msra.mxu0 %v348
    %2571 = vmatprep.subr.mxu0 %v353
    %2572 = vmatpush1.msra.mxu0 %v352
    %2573 = vmatprep.subr.mxu0 %v357
    %2574 = vmatpush1.msra.mxu0 %v356
    %2575 = vmatprep.subr.mxu0 %v361
    %2576 = vmatpush1.msra.mxu0 %v360
    %2577 = vmatprep.subr.mxu0 %v365
    %2578 = vmatpush1.msra.mxu0 %v364
    %2579 = vmatprep.subr.mxu0 %v369
    %2580 = vmatpush1.msra.mxu0 %v368
    %2581 = vmatprep.subr.mxu0 %v373
    %2582 = vmatpush1.msra.mxu0 %v372
    %2583 = vmatprep.subr.mxu0 %v377
    %2584 = vmatpush1.msra.mxu0 %v376
    %2585 = vmatprep.subr.mxu0 %v381
    %2586 = vmatpush1.msra.mxu0 %v380
    %2587 = vmatprep.subr.mxu0 %v385
    %2588 = vmatpush1.msra.mxu0 %v384
    %2589 = vmatprep.subr.mxu0 %v389
    %2590 = vmatpush1.msra.mxu0 %v388
    %2591 = vmatprep.subr.mxu0 %v393
    %2592 = vmatpush1.msra.mxu0 %v392
    %2593 = vmatprep.subr.mxu0 %v397
    %2594 = vmatpush1.msra.mxu0 %v396
    %2595 = vmatprep.subr.mxu0 %v401
    %2596 = vmatpush1.msra.mxu0 %v400
    %2597 = vmatprep.subr.mxu0 %v405
    %2598 = vmatpush1.msra.mxu0 %v404
    %2599 = vmatprep.subr.mxu0 %v409
    %2600 = vmatpush1.msra.mxu0 %v408
    %2601 = vmatprep.subr.mxu0 %v413
    %2602 = vmatpush1.msra.mxu0 %v412
    %2603 = vmatprep.subr.mxu0 %v417
    %2604 = vmatpush1.msra.mxu0 %v416
    %2605 = vmatprep.subr.mxu0 %v421
    %2606 = vmatpush1.msra.mxu0 %v420
    %2607 = vmatprep.subr.mxu0 %v425
    %2608 = vmatpush1.msra.mxu0 %v424
    %2609 = vmatprep.subr.mxu0 %v429
    %2610 = vmatpush1.msra.mxu0 %v428
    %2611 = vmatprep.subr.mxu0 %v433
    %2612 = vmatpush1.msra.mxu0 %v432
    %2613 = vmatprep.subr.mxu0 %v437
    %2614 = vmatpush1.msra.mxu0 %v436
    %2615 = vmatprep.subr.mxu0 %v441
    %2616 = vmatpush1.msra.mxu0 %v440
    %2617 = vmatprep.subr.mxu0 %v445
    %2618 = vmatpush1.msra.mxu0 %v444
    %2619 = vmatprep.subr.mxu0 %v449
    %2620 = vmatpush1.msra.mxu0 %v448
    %2621 = vmatprep.subr.mxu0 %v453
    %2622 = vmatpush1.msra.mxu0 %v452
    %2623 = vmatprep.subr.mxu0 %v457
    %2624 = vmatpush1.msra.mxu0 %v456
    %2625 = vmatprep.subr.mxu0 %v461
    %2626 = vmatpush1.msra.mxu0 %v460
    %2627 = vmatprep.mubr.f32.mxu0 %v2536
    %2628 = vmatmul.mubr.f32.gmra.mrb[0].mxu0 %v2535
    %v2629 = vpop.f32.mrb[0].mxu0
    %v2630 = vadd.f32 %v2550, %v2629
    %v2631 = vpop.f32.mrb[0].mxu0
    %v2632 = vadd.f32 %v2554, %v2631
    %2633 = vdwg.mxu0
    %2634 = vmatprep.subr.mxu0 %v465
    %2635 = vmatpush1.msra.mxu0 %v464
    %2636 = vmatprep.subr.mxu0 %v469
    %2637 = vmatpush1.msra.mxu0 %v468
    %2638 = vmatprep.subr.mxu0 %v473
    %2639 = vmatpush1.msra.mxu0 %v472
    %2640 = vmatprep.subr.mxu0 %v477
    %2641 = vmatpush1.msra.mxu0 %v476
    %2642 = vmatprep.subr.mxu0 %v481
    %2643 = vmatpush1.msra.mxu0 %v480
    %2644 = vmatprep.subr.mxu0 %v485
    %2645 = vmatpush1.msra.mxu0 %v484
    %2646 = vmatprep.subr.mxu0 %v489
    %2647 = vmatpush1.msra.mxu0 %v488
    %2648 = vmatprep.subr.mxu0 %v493
    %2649 = vmatpush1.msra.mxu0 %v492
    %2650 = vmatprep.subr.mxu0 %v497
    %2651 = vmatpush1.msra.mxu0 %v496
    %2652 = vmatprep.subr.mxu0 %v501
    %2653 = vmatpush1.msra.mxu0 %v500
    %2654 = vmatprep.subr.mxu0 %v505
    %2655 = vmatpush1.msra.mxu0 %v504
    %2656 = vmatprep.subr.mxu0 %v509
    %2657 = vmatpush1.msra.mxu0 %v508
    %2658 = vmatprep.subr.mxu0 %v513
    %2659 = vmatpush1.msra.mxu0 %v512
    %2660 = vmatprep.subr.mxu0 %v517
    %2661 = vmatpush1.msra.mxu0 %v516
    %2662 = vmatprep.subr.mxu0 %v521
    %2663 = vmatpush1.msra.mxu0 %v520
    %2664 = vmatprep.subr.mxu0 %v525
    %2665 = vmatpush1.msra.mxu0 %v524
    %2666 = vmatprep.subr.mxu0 %v529
    %2667 = vmatpush1.msra.mxu0 %v528
    %2668 = vmatprep.subr.mxu0 %v533
    %2669 = vmatpush1.msra.mxu0 %v532
    %2670 = vmatprep.subr.mxu0 %v537
    %2671 = vmatpush1.msra.mxu0 %v536
    %2672 = vmatprep.subr.mxu0 %v541
    %2673 = vmatpush1.msra.mxu0 %v540
    %2674 = vmatprep.subr.mxu0 %v545
    %2675 = vmatpush1.msra.mxu0 %v544
    %2676 = vmatprep.subr.mxu0 %v549
    %2677 = vmatpush1.msra.mxu0 %v548
    %2678 = vmatprep.subr.mxu0 %v553
    %2679 = vmatpush1.msra.mxu0 %v552
    %2680 = vmatprep.subr.mxu0 %v557
    %2681 = vmatpush1.msra.mxu0 %v556
    %2682 = vmatprep.subr.mxu0 %v561
    %2683 = vmatpush1.msra.mxu0 %v560
    %2684 = vmatprep.subr.mxu0 %v565
    %2685 = vmatpush1.msra.mxu0 %v564
    %2686 = vmatprep.subr.mxu0 %v569
    %2687 = vmatpush1.msra.mxu0 %v568
    %2688 = vmatprep.subr.mxu0 %v573
    %2689 = vmatpush1.msra.mxu0 %v572
    %2690 = vmatprep.subr.mxu0 %v577
    %2691 = vmatpush1.msra.mxu0 %v576
    %2692 = vmatprep.subr.mxu0 %v581
    %2693 = vmatpush1.msra.mxu0 %v580
    %2694 = vmatprep.subr.mxu0 %v585
    %2695 = vmatpush1.msra.mxu0 %v584
    %2696 = vmatprep.subr.mxu0 %v589
    %2697 = vmatpush1.msra.mxu0 %v588
    %2698 = vmatprep.mubr.f32.mxu0 %v2538
    %2699 = vmatmul.mubr.f32.gmra.mrb[0].mxu0 %v2537
    %v2700 = vpop.f32.mrb[0].mxu0
    %v2701 = vadd.f32 %v2630, %v2700
    %v2702 = vpop.f32.mrb[0].mxu0
    %v2703 = vadd.f32 %v2632, %v2702
    %2704 = vdwg.mxu0
    %2705 = vmatprep.subr.mxu0 %v339
    %2706 = vmatpush1.msra.mxu0 %v338
    %2707 = vmatprep.subr.mxu0 %v343
    %2708 = vmatpush1.msra.mxu0 %v342
    %2709 = vmatprep.subr.mxu0 %v347
    %2710 = vmatpush1.msra.mxu0 %v346
    %2711 = vmatprep.subr.mxu0 %v351
    %2712 = vmatpush1.msra.mxu0 %v350
    %2713 = vmatprep.subr.mxu0 %v355
    %2714 = vmatpush1.msra.mxu0 %v354
    %2715 = vmatprep.subr.mxu0 %v359
    %2716 = vmatpush1.msra.mxu0 %v358
    %2717 = vmatprep.subr.mxu0 %v363
    %2718 = vmatpush1.msra.mxu0 %v362
    %2719 = vmatprep.subr.mxu0 %v367
    %2720 = vmatpush1.msra.mxu0 %v366
    %2721 = vmatprep.subr.mxu0 %v371
    %2722 = vmatpush1.msra.mxu0 %v370
    %2723 = vmatprep.subr.mxu0 %v375
    %2724 = vmatpush1.msra.mxu0 %v374
    %2725 = vmatprep.subr.mxu0 %v379
    %2726 = vmatpush1.msra.mxu0 %v378
    %2727 = vmatprep.subr.mxu0 %v383
    %2728 = vmatpush1.msra.mxu0 %v382
    %2729 = vmatprep.subr.mxu0 %v387
    %2730 = vmatpush1.msra.mxu0 %v386
    %2731 = vmatprep.subr.mxu0 %v391
    %2732 = vmatpush1.msra.mxu0 %v390
    %2733 = vmatprep.subr.mxu0 %v395
    %2734 = vmatpush1.msra.mxu0 %v394
    %2735 = vmatprep.subr.mxu0 %v399
    %2736 = vmatpush1.msra.mxu0 %v398
    %2737 = vmatprep.subr.mxu0 %v403
    %2738 = vmatpush1.msra.mxu0 %v402
    %2739 = vmatprep.subr.mxu0 %v407
    %2740 = vmatpush1.msra.mxu0 %v406
    %2741 = vmatprep.subr.mxu0 %v411
    %2742 = vmatpush1.msra.mxu0 %v410
    %2743 = vmatprep.subr.mxu0 %v415
    %2744 = vmatpush1.msra.mxu0 %v414
    %2745 = vmatprep.subr.mxu0 %v419
    %2746 = vmatpush1.msra.mxu0 %v418
    %2747 = vmatprep.subr.mxu0 %v423
    %2748 = vmatpush1.msra.mxu0 %v422
    %2749 = vmatprep.subr.mxu0 %v427
    %2750 = vmatpush1.msra.mxu0 %v426
    %2751 = vmatprep.subr.mxu0 %v431
    %2752 = vmatpush1.msra.mxu0 %v430
    %2753 = vmatprep.subr.mxu0 %v435
    %2754 = vmatpush1.msra.mxu0 %v434
    %2755 = vmatprep.subr.mxu0 %v439
    %2756 = vmatpush1.msra.mxu0 %v438
    %2757 = vmatprep.subr.mxu0 %v443
    %2758 = vmatpush1.msra.mxu0 %v442
    %2759 = vmatprep.subr.mxu0 %v447
    %2760 = vmatpush1.msra.mxu0 %v446
    %2761 = vmatprep.subr.mxu0 %v451
    %2762 = vmatpush1.msra.mxu0 %v450
    %2763 = vmatprep.subr.mxu0 %v455
    %2764 = vmatpush1.msra.mxu0 %v454
    %2765 = vmatprep.subr.mxu0 %v459
    %2766 = vmatpush1.msra.mxu0 %v458
    %2767 = vmatprep.subr.mxu0 %v463
    %2768 = vmatpush1.msra.mxu0 %v462
    %2769 = vmatprep.mubr.f32.mxu0 %v2536
    %2770 = vmatmul.mubr.f32.gmra.mrb[0].mxu0 %v2535
    %v2771 = vpop.f32.mrb[0].mxu0
    %v2772 = vadd.f32 %v2558, %v2771
    %v2773 = vpop.f32.mrb[0].mxu0
    %v2774 = vadd.f32 %v2562, %v2773
    %2775 = vdwg.mxu0
    %2776 = vmatprep.subr.mxu0 %v467
    %2777 = vmatpush1.msra.mxu0 %v466
    %2778 = vmatprep.subr.mxu0 %v471
    %2779 = vmatpush1.msra.mxu0 %v470
    %2780 = vmatprep.subr.mxu0 %v475
    %2781 = vmatpush1.msra.mxu0 %v474
    %2782 = vmatprep.subr.mxu0 %v479
    %2783 = vmatpush1.msra.mxu0 %v478
    %2784 = vmatprep.subr.mxu0 %v483
    %2785 = vmatpush1.msra.mxu0 %v482
    %2786 = vmatprep.subr.mxu0 %v487
    %2787 = vmatpush1.msra.mxu0 %v486
    %2788 = vmatprep.subr.mxu0 %v491
    %2789 = vmatpush1.msra.mxu0 %v490
    %2790 = vmatprep.subr.mxu0 %v495
    %2791 = vmatpush1.msra.mxu0 %v494
    %2792 = vmatprep.subr.mxu0 %v499
    %2793 = vmatpush1.msra.mxu0 %v498
    %2794 = vmatprep.subr.mxu0 %v503
    %2795 = vmatpush1.msra.mxu0 %v502
    %2796 = vmatprep.subr.mxu0 %v507
    %2797 = vmatpush1.msra.mxu0 %v506
    %2798 = vmatprep.subr.mxu0 %v511
    %2799 = vmatpush1.msra.mxu0 %v510
    %2800 = vmatprep.subr.mxu0 %v515
    %2801 = vmatpush1.msra.mxu0 %v514
    %2802 = vmatprep.subr.mxu0 %v519
    %2803 = vmatpush1.msra.mxu0 %v518
    %2804 = vmatprep.subr.mxu0 %v523
    %2805 = vmatpush1.msra.mxu0 %v522
    %2806 = vmatprep.subr.mxu0 %v527
    %2807 = vmatpush1.msra.mxu0 %v526
    %2808 = vmatprep.subr.mxu0 %v531
    %2809 = vmatpush1.msra.mxu0 %v530
    %2810 = vmatprep.subr.mxu0 %v535
    %2811 = vmatpush1.msra.mxu0 %v534
    %2812 = vmatprep.subr.mxu0 %v539
    %2813 = vmatpush1.msra.mxu0 %v538
    %2814 = vmatprep.subr.mxu0 %v543
    %2815 = vmatpush1.msra.mxu0 %v542
    %2816 = vmatprep.subr.mxu0 %v547
    %2817 = vmatpush1.msra.mxu0 %v546
    %2818 = vmatprep.subr.mxu0 %v551
    %2819 = vmatpush1.msra.mxu0 %v550
    %2820 = vmatprep.subr.mxu0 %v555
    %2821 = vmatpush1.msra.mxu0 %v554
    %2822 = vmatprep.subr.mxu0 %v559
    %2823 = vmatpush1.msra.mxu0 %v558
    %2824 = vmatprep.subr.mxu0 %v563
    %2825 = vmatpush1.msra.mxu0 %v562
    %2826 = vmatprep.subr.mxu0 %v567
    %2827 = vmatpush1.msra.mxu0 %v566
    %2828 = vmatprep.subr.mxu0 %v571
    %2829 = vmatpush1.msra.mxu0 %v570
    %2830 = vmatprep.subr.mxu0 %v575
    %2831 = vmatpush1.msra.mxu0 %v574
    %2832 = vmatprep.subr.mxu0 %v579
    %2833 = vmatpush1.msra.mxu0 %v578
    %2834 = vmatprep.subr.mxu0 %v583
    %2835 = vmatpush1.msra.mxu0 %v582
    %2836 = vmatprep.subr.mxu0 %v587
    %2837 = vmatpush1.msra.mxu0 %v586
    %2838 = vmatprep.subr.mxu0 %v591
    %2839 = vmatpush1.msra.mxu0 %v590
    %2840 = vmatprep.mubr.f32.mxu0 %v2538
    %2841 = vmatmul.mubr.f32.gmra.mrb[0].mxu0 %v2537
    %v2842 = vpop.f32.mrb[0].mxu0
    %v2843 = vadd.f32 %v2772, %v2842
    %v2844 = vpop.f32.mrb[0].mxu0
    %v2845 = vadd.f32 %v2774, %v2844
    %2846 = vdwg.mxu0
    %v2847 = vld [vmem:[#allocation2 + $0xc0] sm:$0xff]
    %v2848 = vld [vmem:[#allocation2 + $0xc8] sm:$0xff]
    %v2849 = vld [vmem:[#allocation2 + $0xd0] sm:$0xff]
    %v2850 = vld [vmem:[#allocation2 + $0xd8] sm:$0xff]
    %v2851 = vadd.f32 %v2701, %v2847
    %v2852 = vadd.f32 %v2703, %v2848
    %v2853 = vadd.f32 %v2843, %v2849
    %v2854 = vadd.f32 %v2845, %v2850
    %v2855 = vtanh.pop %v2851
    %v2856 = vtanh.pop %v2852
    %v2857 = vtanh.pop %v2853
    %v2858 = vtanh.pop %v2854
    %vm2859 = vcmp.lt.s32.totalorder %v594, 256
    %vm2860 = vcmp.lt.s32.totalorder %v595, 256
    %vm2861 = vcmp.lt.s32.totalorder %v596, 256
    %vm2862 = vcmp.lt.s32.totalorder %v597, 256
    %v2863 = vsel %vm2859, %v606, 0.0
    %v2864 = vsel %vm2860, %v610, 0.0
    %v2865 = vsel %vm2861, %v614, 0.0
    %v2866 = vsel %vm2862, %v618, 0.0
    %v2867 = vlaneseq
    %v2868 = vshrl.u32 %v2867, 7
    %v2869 = vsub.s32 0, %v2868
    %v2870 = vrot.slane %v2863, %v2869
    %v2871 = vlaneseq
    %v2872 = vshrl.u32 %v2871, 7
    %v2873 = vsub.s32 0, %v2872
    %v2874 = vrot.slane %v2864, %v2873
    %v2875 = vlaneseq
    %v2876 = vshrl.u32 %v2875, 7
    %v2877 = vsub.s32 0, %v2876
    %v2878 = vrot.slane %v2865, %v2877
    %v2879 = vlaneseq
    %v2880 = vshrl.u32 %v2879, 7
    %v2881 = vsub.s32 0, %v2880
    %v2882 = vrot.slane %v2866, %v2881
    %2883 = vmatprep.subr.mxu0 %v337
    %2884 = vmatpush1.msra.mxu0 %v336
    %2885 = vmatprep.subr.mxu0 %v341
    %2886 = vmatpush1.msra.mxu0 %v340
    %2887 = vmatprep.subr.mxu0 %v345
    %2888 = vmatpush1.msra.mxu0 %v344
    %2889 = vmatprep.subr.mxu0 %v349
    %2890 = vmatpush1.msra.mxu0 %v348
    %2891 = vmatprep.subr.mxu0 %v353
    %2892 = vmatpush1.msra.mxu0 %v352
    %2893 = vmatprep.subr.mxu0 %v357
    %2894 = vmatpush1.msra.mxu0 %v356
    %2895 = vmatprep.subr.mxu0 %v361
    %2896 = vmatpush1.msra.mxu0 %v360
    %2897 = vmatprep.subr.mxu0 %v365
    %2898 = vmatpush1.msra.mxu0 %v364
    %2899 = vmatprep.subr.mxu0 %v369
    %2900 = vmatpush1.msra.mxu0 %v368
    %2901 = vmatprep.subr.mxu0 %v373
    %2902 = vmatpush1.msra.mxu0 %v372
    %2903 = vmatprep.subr.mxu0 %v377
    %2904 = vmatpush1.msra.mxu0 %v376
    %2905 = vmatprep.subr.mxu0 %v381
    %2906 = vmatpush1.msra.mxu0 %v380
    %2907 = vmatprep.subr.mxu0 %v385
    %2908 = vmatpush1.msra.mxu0 %v384
    %2909 = vmatprep.subr.mxu0 %v389
    %2910 = vmatpush1.msra.mxu0 %v388
    %2911 = vmatprep.subr.mxu0 %v393
    %2912 = vmatpush1.msra.mxu0 %v392
    %2913 = vmatprep.subr.mxu0 %v397
    %2914 = vmatpush1.msra.mxu0 %v396
    %2915 = vmatprep.subr.mxu0 %v401
    %2916 = vmatpush1.msra.mxu0 %v400
    %2917 = vmatprep.subr.mxu0 %v405
    %2918 = vmatpush1.msra.mxu0 %v404
    %2919 = vmatprep.subr.mxu0 %v409
    %2920 = vmatpush1.msra.mxu0 %v408
    %2921 = vmatprep.subr.mxu0 %v413
    %2922 = vmatpush1.msra.mxu0 %v412
    %2923 = vmatprep.subr.mxu0 %v417
    %2924 = vmatpush1.msra.mxu0 %v416
    %2925 = vmatprep.subr.mxu0 %v421
    %2926 = vmatpush1.msra.mxu0 %v420
    %2927 = vmatprep.subr.mxu0 %v425
    %2928 = vmatpush1.msra.mxu0 %v424
    %2929 = vmatprep.subr.mxu0 %v429
    %2930 = vmatpush1.msra.mxu0 %v428
    %2931 = vmatprep.subr.mxu0 %v433
    %2932 = vmatpush1.msra.mxu0 %v432
    %2933 = vmatprep.subr.mxu0 %v437
    %2934 = vmatpush1.msra.mxu0 %v436
    %2935 = vmatprep.subr.mxu0 %v441
    %2936 = vmatpush1.msra.mxu0 %v440
    %2937 = vmatprep.subr.mxu0 %v445
    %2938 = vmatpush1.msra.mxu0 %v444
    %2939 = vmatprep.subr.mxu0 %v449
    %2940 = vmatpush1.msra.mxu0 %v448
    %2941 = vmatprep.subr.mxu0 %v453
    %2942 = vmatpush1.msra.mxu0 %v452
    %2943 = vmatprep.subr.mxu0 %v457
    %2944 = vmatpush1.msra.mxu0 %v456
    %2945 = vmatprep.subr.mxu0 %v461
    %2946 = vmatpush1.msra.mxu0 %v460
    %2947 = vmatprep.mubr.f32.mxu0 %v2856
    %2948 = vmatmul.mubr.f32.gmra.mrb[0].mxu0 %v2855
    %v2949 = vpop.f32.mrb[0].mxu0
    %v2950 = vadd.f32 %v2870, %v2949
    %v2951 = vpop.f32.mrb[0].mxu0
    %v2952 = vadd.f32 %v2874, %v2951
    %2953 = vdwg.mxu0
    %2954 = vmatprep.subr.mxu0 %v465
    %2955 = vmatpush1.msra.mxu0 %v464
    %2956 = vmatprep.subr.mxu0 %v469
    %2957 = vmatpush1.msra.mxu0 %v468
    %2958 = vmatprep.subr.mxu0 %v473
    %2959 = vmatpush1.msra.mxu0 %v472
    %2960 = vmatprep.subr.mxu0 %v477
    %2961 = vmatpush1.msra.mxu0 %v476
    %2962 = vmatprep.subr.mxu0 %v481
    %2963 = vmatpush1.msra.mxu0 %v480
    %2964 = vmatprep.subr.mxu0 %v485
    %2965 = vmatpush1.msra.mxu0 %v484
    %2966 = vmatprep.subr.mxu0 %v489
    %2967 = vmatpush1.msra.mxu0 %v488
    %2968 = vmatprep.subr.mxu0 %v493
    %2969 = vmatpush1.msra.mxu0 %v492
    %2970 = vmatprep.subr.mxu0 %v497
    %2971 = vmatpush1.msra.mxu0 %v496
    %2972 = vmatprep.subr.mxu0 %v501
    %2973 = vmatpush1.msra.mxu0 %v500
    %2974 = vmatprep.subr.mxu0 %v505
    %2975 = vmatpush1.msra.mxu0 %v504
    %2976 = vmatprep.subr.mxu0 %v509
    %2977 = vmatpush1.msra.mxu0 %v508
    %2978 = vmatprep.subr.mxu0 %v513
    %2979 = vmatpush1.msra.mxu0 %v512
    %2980 = vmatprep.subr.mxu0 %v517
    %2981 = vmatpush1.msra.mxu0 %v516
    %2982 = vmatprep.subr.mxu0 %v521
    %2983 = vmatpush1.msra.mxu0 %v520
    %2984 = vmatprep.subr.mxu0 %v525
    %2985 = vmatpush1.msra.mxu0 %v524
    %2986 = vmatprep.subr.mxu0 %v529
    %2987 = vmatpush1.msra.mxu0 %v528
    %2988 = vmatprep.subr.mxu0 %v533
    %2989 = vmatpush1.msra.mxu0 %v532
    %2990 = vmatprep.subr.mxu0 %v537
    %2991 = vmatpush1.msra.mxu0 %v536
    %2992 = vmatprep.subr.mxu0 %v541
    %2993 = vmatpush1.msra.mxu0 %v540
    %2994 = vmatprep.subr.mxu0 %v545
    %2995 = vmatpush1.msra.mxu0 %v544
    %2996 = vmatprep.subr.mxu0 %v549
    %2997 = vmatpush1.msra.mxu0 %v548
    %2998 = vmatprep.subr.mxu0 %v553
    %2999 = vmatpush1.msra.mxu0 %v552
    %3000 = vmatprep.subr.mxu0 %v557
    %3001 = vmatpush1.msra.mxu0 %v556
    %3002 = vmatprep.subr.mxu0 %v561
    %3003 = vmatpush1.msra.mxu0 %v560
    %3004 = vmatprep.subr.mxu0 %v565
    %3005 = vmatpush1.msra.mxu0 %v564
    %3006 = vmatprep.subr.mxu0 %v569
    %3007 = vmatpush1.msra.mxu0 %v568
    %3008 = vmatprep.subr.mxu0 %v573
    %3009 = vmatpush1.msra.mxu0 %v572
    %3010 = vmatprep.subr.mxu0 %v577
    %3011 = vmatpush1.msra.mxu0 %v576
    %3012 = vmatprep.subr.mxu0 %v581
    %3013 = vmatpush1.msra.mxu0 %v580
    %3014 = vmatprep.subr.mxu0 %v585
    %3015 = vmatpush1.msra.mxu0 %v584
    %3016 = vmatprep.subr.mxu0 %v589
    %3017 = vmatpush1.msra.mxu0 %v588
    %3018 = vmatprep.mubr.f32.mxu0 %v2858
    %3019 = vmatmul.mubr.f32.gmra.mrb[0].mxu0 %v2857
    %v3020 = vpop.f32.mrb[0].mxu0
    %v3021 = vadd.f32 %v2950, %v3020
    %v3022 = vpop.f32.mrb[0].mxu0
    %v3023 = vadd.f32 %v2952, %v3022
    %3024 = vdwg.mxu0
    %3025 = vmatprep.subr.mxu0 %v339
    %3026 = vmatpush1.msra.mxu0 %v338
    %3027 = vmatprep.subr.mxu0 %v343
    %3028 = vmatpush1.msra.mxu0 %v342
    %3029 = vmatprep.subr.mxu0 %v347
    %3030 = vmatpush1.msra.mxu0 %v346
    %3031 = vmatprep.subr.mxu0 %v351
    %3032 = vmatpush1.msra.mxu0 %v350
    %3033 = vmatprep.subr.mxu0 %v355
    %3034 = vmatpush1.msra.mxu0 %v354
    %3035 = vmatprep.subr.mxu0 %v359
    %3036 = vmatpush1.msra.mxu0 %v358
    %3037 = vmatprep.subr.mxu0 %v363
    %3038 = vmatpush1.msra.mxu0 %v362
    %3039 = vmatprep.subr.mxu0 %v367
    %3040 = vmatpush1.msra.mxu0 %v366
    %3041 = vmatprep.subr.mxu0 %v371
    %3042 = vmatpush1.msra.mxu0 %v370
    %3043 = vmatprep.subr.mxu0 %v375
    %3044 = vmatpush1.msra.mxu0 %v374
    %3045 = vmatprep.subr.mxu0 %v379
    %3046 = vmatpush1.msra.mxu0 %v378
    %3047 = vmatprep.subr.mxu0 %v383
    %3048 = vmatpush1.msra.mxu0 %v382
    %3049 = vmatprep.subr.mxu0 %v387
    %3050 = vmatpush1.msra.mxu0 %v386
    %3051 = vmatprep.subr.mxu0 %v391
    %3052 = vmatpush1.msra.mxu0 %v390
    %3053 = vmatprep.subr.mxu0 %v395
    %3054 = vmatpush1.msra.mxu0 %v394
    %3055 = vmatprep.subr.mxu0 %v399
    %3056 = vmatpush1.msra.mxu0 %v398
    %3057 = vmatprep.subr.mxu0 %v403
    %3058 = vmatpush1.msra.mxu0 %v402
    %3059 = vmatprep.subr.mxu0 %v407
    %3060 = vmatpush1.msra.mxu0 %v406
    %3061 = vmatprep.subr.mxu0 %v411
    %3062 = vmatpush1.msra.mxu0 %v410
    %3063 = vmatprep.subr.mxu0 %v415
    %3064 = vmatpush1.msra.mxu0 %v414
    %3065 = vmatprep.subr.mxu0 %v419
    %3066 = vmatpush1.msra.mxu0 %v418
    %3067 = vmatprep.subr.mxu0 %v423
    %3068 = vmatpush1.msra.mxu0 %v422
    %3069 = vmatprep.subr.mxu0 %v427
    %3070 = vmatpush1.msra.mxu0 %v426
    %3071 = vmatprep.subr.mxu0 %v431
    %3072 = vmatpush1.msra.mxu0 %v430
    %3073 = vmatprep.subr.mxu0 %v435
    %3074 = vmatpush1.msra.mxu0 %v434
    %3075 = vmatprep.subr.mxu0 %v439
    %3076 = vmatpush1.msra.mxu0 %v438
    %3077 = vmatprep.subr.mxu0 %v443
    %3078 = vmatpush1.msra.mxu0 %v442
    %3079 = vmatprep.subr.mxu0 %v447
    %3080 = vmatpush1.msra.mxu0 %v446
    %3081 = vmatprep.subr.mxu0 %v451
    %3082 = vmatpush1.msra.mxu0 %v450
    %3083 = vmatprep.subr.mxu0 %v455
    %3084 = vmatpush1.msra.mxu0 %v454
    %3085 = vmatprep.subr.mxu0 %v459
    %3086 = vmatpush1.msra.mxu0 %v458
    %3087 = vmatprep.subr.mxu0 %v463
    %3088 = vmatpush1.msra.mxu0 %v462
    %3089 = vmatprep.mubr.f32.mxu0 %v2856
    %3090 = vmatmul.mubr.f32.gmra.mrb[0].mxu0 %v2855
    %v3091 = vpop.f32.mrb[0].mxu0
    %v3092 = vadd.f32 %v2878, %v3091
    %v3093 = vpop.f32.mrb[0].mxu0
    %v3094 = vadd.f32 %v2882, %v3093
    %3095 = vdwg.mxu0
    %3096 = vmatprep.subr.mxu0 %v467
    %3097 = vmatpush1.msra.mxu0 %v466
    %3098 = vmatprep.subr.mxu0 %v471
    %3099 = vmatpush1.msra.mxu0 %v470
    %3100 = vmatprep.subr.mxu0 %v475
    %3101 = vmatpush1.msra.mxu0 %v474
    %3102 = vmatprep.subr.mxu0 %v479
    %3103 = vmatpush1.msra.mxu0 %v478
    %3104 = vmatprep.subr.mxu0 %v483
    %3105 = vmatpush1.msra.mxu0 %v482
    %3106 = vmatprep.subr.mxu0 %v487
    %3107 = vmatpush1.msra.mxu0 %v486
    %3108 = vmatprep.subr.mxu0 %v491
    %3109 = vmatpush1.msra.mxu0 %v490
    %3110 = vmatprep.subr.mxu0 %v495
    %3111 = vmatpush1.msra.mxu0 %v494
    %3112 = vmatprep.subr.mxu0 %v499
    %3113 = vmatpush1.msra.mxu0 %v498
    %3114 = vmatprep.subr.mxu0 %v503
    %3115 = vmatpush1.msra.mxu0 %v502
    %3116 = vmatprep.subr.mxu0 %v507
    %3117 = vmatpush1.msra.mxu0 %v506
    %3118 = vmatprep.subr.mxu0 %v511
    %3119 = vmatpush1.msra.mxu0 %v510
    %3120 = vmatprep.subr.mxu0 %v515
    %3121 = vmatpush1.msra.mxu0 %v514
    %3122 = vmatprep.subr.mxu0 %v519
    %3123 = vmatpush1.msra.mxu0 %v518
    %3124 = vmatprep.subr.mxu0 %v523
    %3125 = vmatpush1.msra.mxu0 %v522
    %3126 = vmatprep.subr.mxu0 %v527
    %3127 = vmatpush1.msra.mxu0 %v526
    %3128 = vmatprep.subr.mxu0 %v531
    %3129 = vmatpush1.msra.mxu0 %v530
    %3130 = vmatprep.subr.mxu0 %v535
    %3131 = vmatpush1.msra.mxu0 %v534
    %3132 = vmatprep.subr.mxu0 %v539
    %3133 = vmatpush1.msra.mxu0 %v538
    %3134 = vmatprep.subr.mxu0 %v543
    %3135 = vmatpush1.msra.mxu0 %v542
    %3136 = vmatprep.subr.mxu0 %v547
    %3137 = vmatpush1.msra.mxu0 %v546
    %3138 = vmatprep.subr.mxu0 %v551
    %3139 = vmatpush1.msra.mxu0 %v550
    %3140 = vmatprep.subr.mxu0 %v555
    %3141 = vmatpush1.msra.mxu0 %v554
    %3142 = vmatprep.subr.mxu0 %v559
    %3143 = vmatpush1.msra.mxu0 %v558
    %3144 = vmatprep.subr.mxu0 %v563
    %3145 = vmatpush1.msra.mxu0 %v562
    %3146 = vmatprep.subr.mxu0 %v567
    %3147 = vmatpush1.msra.mxu0 %v566
    %3148 = vmatprep.subr.mxu0 %v571
    %3149 = vmatpush1.msra.mxu0 %v570
    %3150 = vmatprep.subr.mxu0 %v575
    %3151 = vmatpush1.msra.mxu0 %v574
    %3152 = vmatprep.subr.mxu0 %v579
    %3153 = vmatpush1.msra.mxu0 %v578
    %3154 = vmatprep.subr.mxu0 %v583
    %3155 = vmatpush1.msra.mxu0 %v582
    %3156 = vmatprep.subr.mxu0 %v587
    %3157 = vmatpush1.msra.mxu0 %v586
    %3158 = vmatprep.subr.mxu0 %v591
    %3159 = vmatpush1.msra.mxu0 %v590
    %3160 = vmatprep.mubr.f32.mxu0 %v2858
    %3161 = vmatmul.mubr.f32.gmra.mrb[0].mxu0 %v2857
    %v3162 = vpop.f32.mrb[0].mxu0
    %v3163 = vadd.f32 %v3092, %v3162
    %v3164 = vpop.f32.mrb[0].mxu0
    %v3165 = vadd.f32 %v3094, %v3164
    %3166 = vdwg.mxu0
    %v3167 = vld [vmem:[#allocation2 + $0xe0] sm:$0xff]
    %v3168 = vld [vmem:[#allocation2 + $0xe8] sm:$0xff]
    %v3169 = vld [vmem:[#allocation2 + $0xf0] sm:$0xff]
    %v3170 = vld [vmem:[#allocation2 + $0xf8] sm:$0xff]
    %v3171 = vadd.f32 %v3021, %v3167
    %v3172 = vadd.f32 %v3023, %v3168
    %v3173 = vadd.f32 %v3163, %v3169
    %v3174 = vadd.f32 %v3165, %v3170
    %v3175 = vtanh.pop %v3171
    %v3176 = vtanh.pop %v3172
    %v3177 = vtanh.pop %v3173
    %v3178 = vtanh.pop %v3174
    %vm3179 = vcmp.lt.s32.totalorder %v594, 288
    %vm3180 = vcmp.lt.s32.totalorder %v595, 288
    %vm3181 = vcmp.lt.s32.totalorder %v596, 288
    %vm3182 = vcmp.lt.s32.totalorder %v597, 288
    %v3183 = vsel %vm3179, %v606, 0.0
    %v3184 = vsel %vm3180, %v610, 0.0
    %v3185 = vsel %vm3181, %v614, 0.0
    %v3186 = vsel %vm3182, %v618, 0.0
    %v3187 = vlaneseq
    %v3188 = vshrl.u32 %v3187, 7
    %v3189 = vsub.s32 0, %v3188
    %v3190 = vrot.slane %v3183, %v3189
    %v3191 = vlaneseq
    %v3192 = vshrl.u32 %v3191, 7
    %v3193 = vsub.s32 0, %v3192
    %v3194 = vrot.slane %v3184, %v3193
    %v3195 = vlaneseq
    %v3196 = vshrl.u32 %v3195, 7
    %v3197 = vsub.s32 0, %v3196
    %v3198 = vrot.slane %v3185, %v3197
    %v3199 = vlaneseq
    %v3200 = vshrl.u32 %v3199, 7
    %v3201 = vsub.s32 0, %v3200
    %v3202 = vrot.slane %v3186, %v3201
    %3203 = vmatprep.subr.mxu0 %v337
    %3204 = vmatpush1.msra.mxu0 %v336
    %3205 = vmatprep.subr.mxu0 %v341
    %3206 = vmatpush1.msra.mxu0 %v340
    %3207 = vmatprep.subr.mxu0 %v345
    %3208 = vmatpush1.msra.mxu0 %v344
    %3209 = vmatprep.subr.mxu0 %v349
    %3210 = vmatpush1.msra.mxu0 %v348
    %3211 = vmatprep.subr.mxu0 %v353
    %3212 = vmatpush1.msra.mxu0 %v352
    %3213 = vmatprep.subr.mxu0 %v357
    %3214 = vmatpush1.msra.mxu0 %v356
    %3215 = vmatprep.subr.mxu0 %v361
    %3216 = vmatpush1.msra.mxu0 %v360
    %3217 = vmatprep.subr.mxu0 %v365
    %3218 = vmatpush1.msra.mxu0 %v364
    %3219 = vmatprep.subr.mxu0 %v369
    %3220 = vmatpush1.msra.mxu0 %v368
    %3221 = vmatprep.subr.mxu0 %v373
    %3222 = vmatpush1.msra.mxu0 %v372
    %3223 = vmatprep.subr.mxu0 %v377
    %3224 = vmatpush1.msra.mxu0 %v376
    %3225 = vmatprep.subr.mxu0 %v381
    %3226 = vmatpush1.msra.mxu0 %v380
    %3227 = vmatprep.subr.mxu0 %v385
    %3228 = vmatpush1.msra.mxu0 %v384
    %3229 = vmatprep.subr.mxu0 %v389
    %3230 = vmatpush1.msra.mxu0 %v388
    %3231 = vmatprep.subr.mxu0 %v393
    %3232 = vmatpush1.msra.mxu0 %v392
    %3233 = vmatprep.subr.mxu0 %v397
    %3234 = vmatpush1.msra.mxu0 %v396
    %3235 = vmatprep.subr.mxu0 %v401
    %3236 = vmatpush1.msra.mxu0 %v400
    %3237 = vmatprep.subr.mxu0 %v405
    %3238 = vmatpush1.msra.mxu0 %v404
    %3239 = vmatprep.subr.mxu0 %v409
    %3240 = vmatpush1.msra.mxu0 %v408
    %3241 = vmatprep.subr.mxu0 %v413
    %3242 = vmatpush1.msra.mxu0 %v412
    %3243 = vmatprep.subr.mxu0 %v417
    %3244 = vmatpush1.msra.mxu0 %v416
    %3245 = vmatprep.subr.mxu0 %v421
    %3246 = vmatpush1.msra.mxu0 %v420
    %3247 = vmatprep.subr.mxu0 %v425
    %3248 = vmatpush1.msra.mxu0 %v424
    %3249 = vmatprep.subr.mxu0 %v429
    %3250 = vmatpush1.msra.mxu0 %v428
    %3251 = vmatprep.subr.mxu0 %v433
    %3252 = vmatpush1.msra.mxu0 %v432
    %3253 = vmatprep.subr.mxu0 %v437
    %3254 = vmatpush1.msra.mxu0 %v436
    %3255 = vmatprep.subr.mxu0 %v441
    %3256 = vmatpush1.msra.mxu0 %v440
    %3257 = vmatprep.subr.mxu0 %v445
    %3258 = vmatpush1.msra.mxu0 %v444
    %3259 = vmatprep.subr.mxu0 %v449
    %3260 = vmatpush1.msra.mxu0 %v448
    %3261 = vmatprep.subr.mxu0 %v453
    %3262 = vmatpush1.msra.mxu0 %v452
    %3263 = vmatprep.subr.mxu0 %v457
    %3264 = vmatpush1.msra.mxu0 %v456
    %3265 = vmatprep.subr.mxu0 %v461
    %3266 = vmatpush1.msra.mxu0 %v460
    %3267 = vmatprep.mubr.f32.mxu0 %v3176
    %3268 = vmatmul.mubr.f32.gmra.mrb[0].mxu0 %v3175
    %v3269 = vpop.f32.mrb[0].mxu0
    %v3270 = vadd.f32 %v3190, %v3269
    %v3271 = vpop.f32.mrb[0].mxu0
    %v3272 = vadd.f32 %v3194, %v3271
    %3273 = vdwg.mxu0
    %3274 = vmatprep.subr.mxu0 %v465
    %3275 = vmatpush1.msra.mxu0 %v464
    %3276 = vmatprep.subr.mxu0 %v469
    %3277 = vmatpush1.msra.mxu0 %v468
    %3278 = vmatprep.subr.mxu0 %v473
    %3279 = vmatpush1.msra.mxu0 %v472
    %3280 = vmatprep.subr.mxu0 %v477
    %3281 = vmatpush1.msra.mxu0 %v476
    %3282 = vmatprep.subr.mxu0 %v481
    %3283 = vmatpush1.msra.mxu0 %v480
    %3284 = vmatprep.subr.mxu0 %v485
    %3285 = vmatpush1.msra.mxu0 %v484
    %3286 = vmatprep.subr.mxu0 %v489
    %3287 = vmatpush1.msra.mxu0 %v488
    %3288 = vmatprep.subr.mxu0 %v493
    %3289 = vmatpush1.msra.mxu0 %v492
    %3290 = vmatprep.subr.mxu0 %v497
    %3291 = vmatpush1.msra.mxu0 %v496
    %3292 = vmatprep.subr.mxu0 %v501
    %3293 = vmatpush1.msra.mxu0 %v500
    %3294 = vmatprep.subr.mxu0 %v505
    %3295 = vmatpush1.msra.mxu0 %v504
    %3296 = vmatprep.subr.mxu0 %v509
    %3297 = vmatpush1.msra.mxu0 %v508
    %3298 = vmatprep.subr.mxu0 %v513
    %3299 = vmatpush1.msra.mxu0 %v512
    %3300 = vmatprep.subr.mxu0 %v517
    %3301 = vmatpush1.msra.mxu0 %v516
    %3302 = vmatprep.subr.mxu0 %v521
    %3303 = vmatpush1.msra.mxu0 %v520
    %3304 = vmatprep.subr.mxu0 %v525
    %3305 = vmatpush1.msra.mxu0 %v524
    %3306 = vmatprep.subr.mxu0 %v529
    %3307 = vmatpush1.msra.mxu0 %v528
    %3308 = vmatprep.subr.mxu0 %v533
    %3309 = vmatpush1.msra.mxu0 %v532
    %3310 = vmatprep.subr.mxu0 %v537
    %3311 = vmatpush1.msra.mxu0 %v536
    %3312 = vmatprep.subr.mxu0 %v541
    %3313 = vmatpush1.msra.mxu0 %v540
    %3314 = vmatprep.subr.mxu0 %v545
    %3315 = vmatpush1.msra.mxu0 %v544
    %3316 = vmatprep.subr.mxu0 %v549
    %3317 = vmatpush1.msra.mxu0 %v548
    %3318 = vmatprep.subr.mxu0 %v553
    %3319 = vmatpush1.msra.mxu0 %v552
    %3320 = vmatprep.subr.mxu0 %v557
    %3321 = vmatpush1.msra.mxu0 %v556
    %3322 = vmatprep.subr.mxu0 %v561
    %3323 = vmatpush1.msra.mxu0 %v560
    %3324 = vmatprep.subr.mxu0 %v565
    %3325 = vmatpush1.msra.mxu0 %v564
    %3326 = vmatprep.subr.mxu0 %v569
    %3327 = vmatpush1.msra.mxu0 %v568
    %3328 = vmatprep.subr.mxu0 %v573
    %3329 = vmatpush1.msra.mxu0 %v572
    %3330 = vmatprep.subr.mxu0 %v577
    %3331 = vmatpush1.msra.mxu0 %v576
    %3332 = vmatprep.subr.mxu0 %v581
    %3333 = vmatpush1.msra.mxu0 %v580
    %3334 = vmatprep.subr.mxu0 %v585
    %3335 = vmatpush1.msra.mxu0 %v584
    %3336 = vmatprep.subr.mxu0 %v589
    %3337 = vmatpush1.msra.mxu0 %v588
    %3338 = vmatprep.mubr.f32.mxu0 %v3178
    %3339 = vmatmul.mubr.f32.gmra.mrb[0].mxu0 %v3177
    %v3340 = vpop.f32.mrb[0].mxu0
    %v3341 = vadd.f32 %v3270, %v3340
    %v3342 = vpop.f32.mrb[0].mxu0
    %v3343 = vadd.f32 %v3272, %v3342
    %3344 = vdwg.mxu0
    %3345 = vmatprep.subr.mxu0 %v339
    %3346 = vmatpush1.msra.mxu0 %v338
    %3347 = vmatprep.subr.mxu0 %v343
    %3348 = vmatpush1.msra.mxu0 %v342
    %3349 = vmatprep.subr.mxu0 %v347
    %3350 = vmatpush1.msra.mxu0 %v346
    %3351 = vmatprep.subr.mxu0 %v351
    %3352 = vmatpush1.msra.mxu0 %v350
    %3353 = vmatprep.subr.mxu0 %v355
    %3354 = vmatpush1.msra.mxu0 %v354
    %3355 = vmatprep.subr.mxu0 %v359
    %3356 = vmatpush1.msra.mxu0 %v358
    %3357 = vmatprep.subr.mxu0 %v363
    %3358 = vmatpush1.msra.mxu0 %v362
    %3359 = vmatprep.subr.mxu0 %v367
    %3360 = vmatpush1.msra.mxu0 %v366
    %3361 = vmatprep.subr.mxu0 %v371
    %3362 = vmatpush1.msra.mxu0 %v370
    %3363 = vmatprep.subr.mxu0 %v375
    %3364 = vmatpush1.msra.mxu0 %v374
    %3365 = vmatprep.subr.mxu0 %v379
    %3366 = vmatpush1.msra.mxu0 %v378
    %3367 = vmatprep.subr.mxu0 %v383
    %3368 = vmatpush1.msra.mxu0 %v382
    %3369 = vmatprep.subr.mxu0 %v387
    %3370 = vmatpush1.msra.mxu0 %v386
    %3371 = vmatprep.subr.mxu0 %v391
    %3372 = vmatpush1.msra.mxu0 %v390
    %3373 = vmatprep.subr.mxu0 %v395
    %3374 = vmatpush1.msra.mxu0 %v394
    %3375 = vmatprep.subr.mxu0 %v399
    %3376 = vmatpush1.msra.mxu0 %v398
    %3377 = vmatprep.subr.mxu0 %v403
    %3378 = vmatpush1.msra.mxu0 %v402
    %3379 = vmatprep.subr.mxu0 %v407
    %3380 = vmatpush1.msra.mxu0 %v406
    %3381 = vmatprep.subr.mxu0 %v411
    %3382 = vmatpush1.msra.mxu0 %v410
    %3383 = vmatprep.subr.mxu0 %v415
    %3384 = vmatpush1.msra.mxu0 %v414
    %3385 = vmatprep.subr.mxu0 %v419
    %3386 = vmatpush1.msra.mxu0 %v418
    %3387 = vmatprep.subr.mxu0 %v423
    %3388 = vmatpush1.msra.mxu0 %v422
    %3389 = vmatprep.subr.mxu0 %v427
    %3390 = vmatpush1.msra.mxu0 %v426
    %3391 = vmatprep.subr.mxu0 %v431
    %3392 = vmatpush1.msra.mxu0 %v430
    %3393 = vmatprep.subr.mxu0 %v435
    %3394 = vmatpush1.msra.mxu0 %v434
    %3395 = vmatprep.subr.mxu0 %v439
    %3396 = vmatpush1.msra.mxu0 %v438
    %3397 = vmatprep.subr.mxu0 %v443
    %3398 = vmatpush1.msra.mxu0 %v442
    %3399 = vmatprep.subr.mxu0 %v447
    %3400 = vmatpush1.msra.mxu0 %v446
    %3401 = vmatprep.subr.mxu0 %v451
    %3402 = vmatpush1.msra.mxu0 %v450
    %3403 = vmatprep.subr.mxu0 %v455
    %3404 = vmatpush1.msra.mxu0 %v454
    %3405 = vmatprep.subr.mxu0 %v459
    %3406 = vmatpush1.msra.mxu0 %v458
    %3407 = vmatprep.subr.mxu0 %v463
    %3408 = vmatpush1.msra.mxu0 %v462
    %3409 = vmatprep.mubr.f32.mxu0 %v3176
    %3410 = vmatmul.mubr.f32.gmra.mrb[0].mxu0 %v3175
    %v3411 = vpop.f32.mrb[0].mxu0
    %v3412 = vadd.f32 %v3198, %v3411
    %v3413 = vpop.f32.mrb[0].mxu0
    %v3414 = vadd.f32 %v3202, %v3413
    %3415 = vdwg.mxu0
    %3416 = vmatprep.subr.mxu0 %v467
    %3417 = vmatpush1.msra.mxu0 %v466
    %3418 = vmatprep.subr.mxu0 %v471
    %3419 = vmatpush1.msra.mxu0 %v470
    %3420 = vmatprep.subr.mxu0 %v475
    %3421 = vmatpush1.msra.mxu0 %v474
    %3422 = vmatprep.subr.mxu0 %v479
    %3423 = vmatpush1.msra.mxu0 %v478
    %3424 = vmatprep.subr.mxu0 %v483
    %3425 = vmatpush1.msra.mxu0 %v482
    %3426 = vmatprep.subr.mxu0 %v487
    %3427 = vmatpush1.msra.mxu0 %v486
    %3428 = vmatprep.subr.mxu0 %v491
    %3429 = vmatpush1.msra.mxu0 %v490
    %3430 = vmatprep.subr.mxu0 %v495
    %3431 = vmatpush1.msra.mxu0 %v494
    %3432 = vmatprep.subr.mxu0 %v499
    %3433 = vmatpush1.msra.mxu0 %v498
    %3434 = vmatprep.subr.mxu0 %v503
    %3435 = vmatpush1.msra.mxu0 %v502
    %3436 = vmatprep.subr.mxu0 %v507
    %3437 = vmatpush1.msra.mxu0 %v506
    %3438 = vmatprep.subr.mxu0 %v511
    %3439 = vmatpush1.msra.mxu0 %v510
    %3440 = vmatprep.subr.mxu0 %v515
    %3441 = vmatpush1.msra.mxu0 %v514
    %3442 = vmatprep.subr.mxu0 %v519
    %3443 = vmatpush1.msra.mxu0 %v518
    %3444 = vmatprep.subr.mxu0 %v523
    %3445 = vmatpush1.msra.mxu0 %v522
    %3446 = vmatprep.subr.mxu0 %v527
    %3447 = vmatpush1.msra.mxu0 %v526
    %3448 = vmatprep.subr.mxu0 %v531
    %3449 = vmatpush1.msra.mxu0 %v530
    %3450 = vmatprep.subr.mxu0 %v535
    %3451 = vmatpush1.msra.mxu0 %v534
    %3452 = vmatprep.subr.mxu0 %v539
    %3453 = vmatpush1.msra.mxu0 %v538
    %3454 = vmatprep.subr.mxu0 %v543
    %3455 = vmatpush1.msra.mxu0 %v542
    %3456 = vmatprep.subr.mxu0 %v547
    %3457 = vmatpush1.msra.mxu0 %v546
    %3458 = vmatprep.subr.mxu0 %v551
    %3459 = vmatpush1.msra.mxu0 %v550
    %3460 = vmatprep.subr.mxu0 %v555
    %3461 = vmatpush1.msra.mxu0 %v554
    %3462 = vmatprep.subr.mxu0 %v559
    %3463 = vmatpush1.msra.mxu0 %v558
    %3464 = vmatprep.subr.mxu0 %v563
    %3465 = vmatpush1.msra.mxu0 %v562
    %3466 = vmatprep.subr.mxu0 %v567
    %3467 = vmatpush1.msra.mxu0 %v566
    %3468 = vmatprep.subr.mxu0 %v571
    %3469 = vmatpush1.msra.mxu0 %v570
    %3470 = vmatprep.subr.mxu0 %v575
    %3471 = vmatpush1.msra.mxu0 %v574
    %3472 = vmatprep.subr.mxu0 %v579
    %3473 = vmatpush1.msra.mxu0 %v578
    %3474 = vmatprep.subr.mxu0 %v583
    %3475 = vmatpush1.msra.mxu0 %v582
    %3476 = vmatprep.subr.mxu0 %v587
    %3477 = vmatpush1.msra.mxu0 %v586
    %3478 = vmatprep.subr.mxu0 %v591
    %3479 = vmatpush1.msra.mxu0 %v590
    %3480 = vmatprep.mubr.f32.mxu0 %v3178
    %3481 = vmatmul.mubr.f32.gmra.mrb[0].mxu0 %v3177
    %v3482 = vpop.f32.mrb[0].mxu0
    %v3483 = vadd.f32 %v3412, %v3482
    %v3484 = vpop.f32.mrb[0].mxu0
    %v3485 = vadd.f32 %v3414, %v3484
    %3486 = vdwg.mxu0
    %v3487 = vtanh.pop %v3341
    %v3488 = vtanh.pop %v3343
    %v3489 = vtanh.pop %v3483
    %v3490 = vtanh.pop %v3485
    %3491 = vmatprep.subr.mxu0 %v337
    %3492 = vmatpush1.msra.mxu0 %v336
    %3493 = vmatprep.subr.mxu0 %v341
    %3494 = vmatpush1.msra.mxu0 %v340
    %3495 = vmatprep.subr.mxu0 %v345
    %3496 = vmatpush1.msra.mxu0 %v344
    %3497 = vmatprep.subr.mxu0 %v349
    %3498 = vmatpush1.msra.mxu0 %v348
    %3499 = vmatprep.subr.mxu0 %v353
    %3500 = vmatpush1.msra.mxu0 %v352
    %3501 = vmatprep.subr.mxu0 %v357
    %3502 = vmatpush1.msra.mxu0 %v356
    %3503 = vmatprep.subr.mxu0 %v361
    %3504 = vmatpush1.msra.mxu0 %v360
    %3505 = vmatprep.subr.mxu0 %v365
    %3506 = vmatpush1.msra.mxu0 %v364
    %3507 = vmatprep.subr.mxu0 %v369
    %3508 = vmatpush1.msra.mxu0 %v368
    %3509 = vmatprep.subr.mxu0 %v373
    %3510 = vmatpush1.msra.mxu0 %v372
    %3511 = vmatprep.subr.mxu0 %v377
    %3512 = vmatpush1.msra.mxu0 %v376
    %3513 = vmatprep.subr.mxu0 %v381
    %3514 = vmatpush1.msra.mxu0 %v380
    %3515 = vmatprep.subr.mxu0 %v385
    %3516 = vmatpush1.msra.mxu0 %v384
    %3517 = vmatprep.subr.mxu0 %v389
    %3518 = vmatpush1.msra.mxu0 %v388
    %3519 = vmatprep.subr.mxu0 %v393
    %3520 = vmatpush1.msra.mxu0 %v392
    %3521 = vmatprep.subr.mxu0 %v397
    %3522 = vmatpush1.msra.mxu0 %v396
    %3523 = vmatprep.subr.mxu0 %v401
    %3524 = vmatpush1.msra.mxu0 %v400
    %3525 = vmatprep.subr.mxu0 %v405
    %3526 = vmatpush1.msra.mxu0 %v404
    %3527 = vmatprep.subr.mxu0 %v409
    %3528 = vmatpush1.msra.mxu0 %v408
    %3529 = vmatprep.subr.mxu0 %v413
    %3530 = vmatpush1.msra.mxu0 %v412
    %3531 = vmatprep.subr.mxu0 %v417
    %3532 = vmatpush1.msra.mxu0 %v416
    %3533 = vmatprep.subr.mxu0 %v421
    %3534 = vmatpush1.msra.mxu0 %v420
    %3535 = vmatprep.subr.mxu0 %v425
    %3536 = vmatpush1.msra.mxu0 %v424
    %3537 = vmatprep.subr.mxu0 %v429
    %3538 = vmatpush1.msra.mxu0 %v428
    %3539 = vmatprep.subr.mxu0 %v433
    %3540 = vmatpush1.msra.mxu0 %v432
    %3541 = vmatprep.subr.mxu0 %v437
    %3542 = vmatpush1.msra.mxu0 %v436
    %3543 = vmatprep.subr.mxu0 %v441
    %3544 = vmatpush1.msra.mxu0 %v440
    %3545 = vmatprep.subr.mxu0 %v445
    %3546 = vmatpush1.msra.mxu0 %v444
    %3547 = vmatprep.subr.mxu0 %v449
    %3548 = vmatpush1.msra.mxu0 %v448
    %3549 = vmatprep.subr.mxu0 %v453
    %3550 = vmatpush1.msra.mxu0 %v452
    %3551 = vmatprep.subr.mxu0 %v457
    %3552 = vmatpush1.msra.mxu0 %v456
    %3553 = vmatprep.subr.mxu0 %v461
    %3554 = vmatpush1.msra.mxu0 %v460
    %3555 = vmatprep.mubr.f32.mxu0 %v3488
    %3556 = vmatmul.mubr.f32.gmra.mrb[0].mxu0 %v3487
    %v3557 = vpop.f32.mrb[0].mxu0
    %v3558 = vadd.f32 %v606, %v3557
    %v3559 = vpop.f32.mrb[0].mxu0
    %v3560 = vadd.f32 %v610, %v3559
    %3561 = vdwg.mxu0
    %3562 = vmatprep.subr.mxu0 %v465
    %3563 = vmatpush1.msra.mxu0 %v464
    %3564 = vmatprep.subr.mxu0 %v469
    %3565 = vmatpush1.msra.mxu0 %v468
    %3566 = vmatprep.subr.mxu0 %v473
    %3567 = vmatpush1.msra.mxu0 %v472
    %3568 = vmatprep.subr.mxu0 %v477
    %3569 = vmatpush1.msra.mxu0 %v476
    %3570 = vmatprep.subr.mxu0 %v481
    %3571 = vmatpush1.msra.mxu0 %v480
    %3572 = vmatprep.subr.mxu0 %v485
    %3573 = vmatpush1.msra.mxu0 %v484
    %3574 = vmatprep.subr.mxu0 %v489
    %3575 = vmatpush1.msra.mxu0 %v488
    %3576 = vmatprep.subr.mxu0 %v493
    %3577 = vmatpush1.msra.mxu0 %v492
    %3578 = vmatprep.subr.mxu0 %v497
    %3579 = vmatpush1.msra.mxu0 %v496
    %3580 = vmatprep.subr.mxu0 %v501
    %3581 = vmatpush1.msra.mxu0 %v500
    %3582 = vmatprep.subr.mxu0 %v505
    %3583 = vmatpush1.msra.mxu0 %v504
    %3584 = vmatprep.subr.mxu0 %v509
    %3585 = vmatpush1.msra.mxu0 %v508
    %3586 = vmatprep.subr.mxu0 %v513
    %3587 = vmatpush1.msra.mxu0 %v512
    %3588 = vmatprep.subr.mxu0 %v517
    %3589 = vmatpush1.msra.mxu0 %v516
    %3590 = vmatprep.subr.mxu0 %v521
    %3591 = vmatpush1.msra.mxu0 %v520
    %3592 = vmatprep.subr.mxu0 %v525
    %3593 = vmatpush1.msra.mxu0 %v524
    %3594 = vmatprep.subr.mxu0 %v529
    %3595 = vmatpush1.msra.mxu0 %v528
    %3596 = vmatprep.subr.mxu0 %v533
    %3597 = vmatpush1.msra.mxu0 %v532
    %3598 = vmatprep.subr.mxu0 %v537
    %3599 = vmatpush1.msra.mxu0 %v536
    %3600 = vmatprep.subr.mxu0 %v541
    %3601 = vmatpush1.msra.mxu0 %v540
    %3602 = vmatprep.subr.mxu0 %v545
    %3603 = vmatpush1.msra.mxu0 %v544
    %3604 = vmatprep.subr.mxu0 %v549
    %3605 = vmatpush1.msra.mxu0 %v548
    %3606 = vmatprep.subr.mxu0 %v553
    %3607 = vmatpush1.msra.mxu0 %v552
    %3608 = vmatprep.subr.mxu0 %v557
    %3609 = vmatpush1.msra.mxu0 %v556
    %3610 = vmatprep.subr.mxu0 %v561
    %3611 = vmatpush1.msra.mxu0 %v560
    %3612 = vmatprep.subr.mxu0 %v565
    %3613 = vmatpush1.msra.mxu0 %v564
    %3614 = vmatprep.subr.mxu0 %v569
    %3615 = vmatpush1.msra.mxu0 %v568
    %3616 = vmatprep.subr.mxu0 %v573
    %3617 = vmatpush1.msra.mxu0 %v572
    %3618 = vmatprep.subr.mxu0 %v577
    %3619 = vmatpush1.msra.mxu0 %v576
    %3620 = vmatprep.subr.mxu0 %v581
    %3621 = vmatpush1.msra.mxu0 %v580
    %3622 = vmatprep.subr.mxu0 %v585
    %3623 = vmatpush1.msra.mxu0 %v584
    %3624 = vmatprep.subr.mxu0 %v589
    %3625 = vmatpush1.msra.mxu0 %v588
    %3626 = vmatprep.mubr.f32.mxu0 %v3490
    %3627 = vmatmul.mubr.f32.gmra.mrb[0].mxu0 %v3489
    %v3628 = vpop.f32.mrb[0].mxu0
    %v3629 = vadd.f32 %v3558, %v3628
    %v3630 = vpop.f32.mrb[0].mxu0
    %v3631 = vadd.f32 %v3560, %v3630
    %3632 = vdwg.mxu0
    %3633 = vmatprep.subr.mxu0 %v339
    %3634 = vmatpush1.msra.mxu0 %v338
    %3635 = vmatprep.subr.mxu0 %v343
    %3636 = vmatpush1.msra.mxu0 %v342
    %3637 = vmatprep.subr.mxu0 %v347
    %3638 = vmatpush1.msra.mxu0 %v346
    %3639 = vmatprep.subr.mxu0 %v351
    %3640 = vmatpush1.msra.mxu0 %v350
    %3641 = vmatprep.subr.mxu0 %v355
    %3642 = vmatpush1.msra.mxu0 %v354
    %3643 = vmatprep.subr.mxu0 %v359
    %3644 = vmatpush1.msra.mxu0 %v358
    %3645 = vmatprep.subr.mxu0 %v363
    %3646 = vmatpush1.msra.mxu0 %v362
    %3647 = vmatprep.subr.mxu0 %v367
    %3648 = vmatpush1.msra.mxu0 %v366
    %3649 = vmatprep.subr.mxu0 %v371
    %3650 = vmatpush1.msra.mxu0 %v370
    %3651 = vmatprep.subr.mxu0 %v375
    %3652 = vmatpush1.msra.mxu0 %v374
    %3653 = vmatprep.subr.mxu0 %v379
    %3654 = vmatpush1.msra.mxu0 %v378
    %3655 = vmatprep.subr.mxu0 %v383
    %3656 = vmatpush1.msra.mxu0 %v382
    %3657 = vmatprep.subr.mxu0 %v387
    %3658 = vmatpush1.msra.mxu0 %v386
    %3659 = vmatprep.subr.mxu0 %v391
    %3660 = vmatpush1.msra.mxu0 %v390
    %3661 = vmatprep.subr.mxu0 %v395
    %3662 = vmatpush1.msra.mxu0 %v394
    %3663 = vmatprep.subr.mxu0 %v399
    %3664 = vmatpush1.msra.mxu0 %v398
    %3665 = vmatprep.subr.mxu0 %v403
    %3666 = vmatpush1.msra.mxu0 %v402
    %3667 = vmatprep.subr.mxu0 %v407
    %3668 = vmatpush1.msra.mxu0 %v406
    %3669 = vmatprep.subr.mxu0 %v411
    %3670 = vmatpush1.msra.mxu0 %v410
    %3671 = vmatprep.subr.mxu0 %v415
    %3672 = vmatpush1.msra.mxu0 %v414
    %3673 = vmatprep.subr.mxu0 %v419
    %3674 = vmatpush1.msra.mxu0 %v418
    %3675 = vmatprep.subr.mxu0 %v423
    %3676 = vmatpush1.msra.mxu0 %v422
    %3677 = vmatprep.subr.mxu0 %v427
    %3678 = vmatpush1.msra.mxu0 %v426
    %3679 = vmatprep.subr.mxu0 %v431
    %3680 = vmatpush1.msra.mxu0 %v430
    %3681 = vmatprep.subr.mxu0 %v435
    %3682 = vmatpush1.msra.mxu0 %v434
    %3683 = vmatprep.subr.mxu0 %v439
    %3684 = vmatpush1.msra.mxu0 %v438
    %3685 = vmatprep.subr.mxu0 %v443
    %3686 = vmatpush1.msra.mxu0 %v442
    %3687 = vmatprep.subr.mxu0 %v447
    %3688 = vmatpush1.msra.mxu0 %v446
    %3689 = vmatprep.subr.mxu0 %v451
    %3690 = vmatpush1.msra.mxu0 %v450
    %3691 = vmatprep.subr.mxu0 %v455
    %3692 = vmatpush1.msra.mxu0 %v454
    %3693 = vmatprep.subr.mxu0 %v459
    %3694 = vmatpush1.msra.mxu0 %v458
    %3695 = vmatprep.subr.mxu0 %v463
    %3696 = vmatpush1.msra.mxu0 %v462
    %3697 = vmatprep.mubr.f32.mxu0 %v3488
    %3698 = vmatmul.mubr.f32.gmra.mrb[0].mxu0 %v3487
    %v3699 = vpop.f32.mrb[0].mxu0
    %v3700 = vadd.f32 %v614, %v3699
    %v3701 = vpop.f32.mrb[0].mxu0
    %v3702 = vadd.f32 %v618, %v3701
    %3703 = vdwg.mxu0
    %3704 = vmatprep.subr.mxu0 %v467
    %3705 = vmatpush1.msra.mxu0 %v466
    %3706 = vmatprep.subr.mxu0 %v471
    %3707 = vmatpush1.msra.mxu0 %v470
    %3708 = vmatprep.subr.mxu0 %v475
    %3709 = vmatpush1.msra.mxu0 %v474
    %3710 = vmatprep.subr.mxu0 %v479
    %3711 = vmatpush1.msra.mxu0 %v478
    %3712 = vmatprep.subr.mxu0 %v483
    %3713 = vmatpush1.msra.mxu0 %v482
    %3714 = vmatprep.subr.mxu0 %v487
    %3715 = vmatpush1.msra.mxu0 %v486
    %3716 = vmatprep.subr.mxu0 %v491
    %3717 = vmatpush1.msra.mxu0 %v490
    %3718 = vmatprep.subr.mxu0 %v495
    %3719 = vmatpush1.msra.mxu0 %v494
    %3720 = vmatprep.subr.mxu0 %v499
    %3721 = vmatpush1.msra.mxu0 %v498
    %3722 = vmatprep.subr.mxu0 %v503
    %3723 = vmatpush1.msra.mxu0 %v502
    %3724 = vmatprep.subr.mxu0 %v507
    %3725 = vmatpush1.msra.mxu0 %v506
    %3726 = vmatprep.subr.mxu0 %v511
    %3727 = vmatpush1.msra.mxu0 %v510
    %3728 = vmatprep.subr.mxu0 %v515
    %3729 = vmatpush1.msra.mxu0 %v514
    %3730 = vmatprep.subr.mxu0 %v519
    %3731 = vmatpush1.msra.mxu0 %v518
    %3732 = vmatprep.subr.mxu0 %v523
    %3733 = vmatpush1.msra.mxu0 %v522
    %3734 = vmatprep.subr.mxu0 %v527
    %3735 = vmatpush1.msra.mxu0 %v526
    %3736 = vmatprep.subr.mxu0 %v531
    %3737 = vmatpush1.msra.mxu0 %v530
    %3738 = vmatprep.subr.mxu0 %v535
    %3739 = vmatpush1.msra.mxu0 %v534
    %3740 = vmatprep.subr.mxu0 %v539
    %3741 = vmatpush1.msra.mxu0 %v538
    %3742 = vmatprep.subr.mxu0 %v543
    %3743 = vmatpush1.msra.mxu0 %v542
    %3744 = vmatprep.subr.mxu0 %v547
    %3745 = vmatpush1.msra.mxu0 %v546
    %3746 = vmatprep.subr.mxu0 %v551
    %3747 = vmatpush1.msra.mxu0 %v550
    %3748 = vmatprep.subr.mxu0 %v555
    %3749 = vmatpush1.msra.mxu0 %v554
    %3750 = vmatprep.subr.mxu0 %v559
    %3751 = vmatpush1.msra.mxu0 %v558
    %3752 = vmatprep.subr.mxu0 %v563
    %3753 = vmatpush1.msra.mxu0 %v562
    %3754 = vmatprep.subr.mxu0 %v567
    %3755 = vmatpush1.msra.mxu0 %v566
    %3756 = vmatprep.subr.mxu0 %v571
    %3757 = vmatpush1.msra.mxu0 %v570
    %3758 = vmatprep.subr.mxu0 %v575
    %3759 = vmatpush1.msra.mxu0 %v574
    %3760 = vmatprep.subr.mxu0 %v579
    %3761 = vmatpush1.msra.mxu0 %v578
    %3762 = vmatprep.subr.mxu0 %v583
    %3763 = vmatpush1.msra.mxu0 %v582
    %3764 = vmatprep.subr.mxu0 %v587
    %3765 = vmatpush1.msra.mxu0 %v586
    %3766 = vmatprep.subr.mxu0 %v591
    %3767 = vmatpush1.msra.mxu0 %v590
    %3768 = vmatprep.mubr.f32.mxu0 %v3490
    %3769 = vmatmul.mubr.f32.gmra.mrb[0].mxu0 %v3489
    %v3770 = vpop.f32.mrb[0].mxu0
    %v3771 = vadd.f32 %v3700, %v3770
    %v3772 = vpop.f32.mrb[0].mxu0
    %v3773 = vadd.f32 %v3702, %v3772
    %3774 = vdwg.mxu0
    %v3775 = vtanh.pop %v3629
    %v3776 = vtanh.pop %v3631
    %v3777 = vtanh.pop %v3771
    %v3778 = vtanh.pop %v3773
    %3779 = vmatprep.subr.mxu0 %v337
    %3780 = vmatpush1.msra.mxu0 %v336
    %3781 = vmatprep.subr.mxu0 %v341
    %3782 = vmatpush1.msra.mxu0 %v340
    %3783 = vmatprep.subr.mxu0 %v345
    %3784 = vmatpush1.msra.mxu0 %v344
    %3785 = vmatprep.subr.mxu0 %v349
    %3786 = vmatpush1.msra.mxu0 %v348
    %3787 = vmatprep.subr.mxu0 %v353
    %3788 = vmatpush1.msra.mxu0 %v352
    %3789 = vmatprep.subr.mxu0 %v357
    %3790 = vmatpush1.msra.mxu0 %v356
    %3791 = vmatprep.subr.mxu0 %v361
    %3792 = vmatpush1.msra.mxu0 %v360
    %3793 = vmatprep.subr.mxu0 %v365
    %3794 = vmatpush1.msra.mxu0 %v364
    %3795 = vmatprep.subr.mxu0 %v369
    %3796 = vmatpush1.msra.mxu0 %v368
    %3797 = vmatprep.subr.mxu0 %v373
    %3798 = vmatpush1.msra.mxu0 %v372
    %3799 = vmatprep.subr.mxu0 %v377
    %3800 = vmatpush1.msra.mxu0 %v376
    %3801 = vmatprep.subr.mxu0 %v381
    %3802 = vmatpush1.msra.mxu0 %v380
    %3803 = vmatprep.subr.mxu0 %v385
    %3804 = vmatpush1.msra.mxu0 %v384
    %3805 = vmatprep.subr.mxu0 %v389
    %3806 = vmatpush1.msra.mxu0 %v388
    %3807 = vmatprep.subr.mxu0 %v393
    %3808 = vmatpush1.msra.mxu0 %v392
    %3809 = vmatprep.subr.mxu0 %v397
    %3810 = vmatpush1.msra.mxu0 %v396
    %3811 = vmatprep.subr.mxu0 %v401
    %3812 = vmatpush1.msra.mxu0 %v400
    %3813 = vmatprep.subr.mxu0 %v405
    %3814 = vmatpush1.msra.mxu0 %v404
    %3815 = vmatprep.subr.mxu0 %v409
    %3816 = vmatpush1.msra.mxu0 %v408
    %3817 = vmatprep.subr.mxu0 %v413
    %3818 = vmatpush1.msra.mxu0 %v412
    %3819 = vmatprep.subr.mxu0 %v417
    %3820 = vmatpush1.msra.mxu0 %v416
    %3821 = vmatprep.subr.mxu0 %v421
    %3822 = vmatpush1.msra.mxu0 %v420
    %3823 = vmatprep.subr.mxu0 %v425
    %3824 = vmatpush1.msra.mxu0 %v424
    %3825 = vmatprep.subr.mxu0 %v429
    %3826 = vmatpush1.msra.mxu0 %v428
    %3827 = vmatprep.subr.mxu0 %v433
    %3828 = vmatpush1.msra.mxu0 %v432
    %3829 = vmatprep.subr.mxu0 %v437
    %3830 = vmatpush1.msra.mxu0 %v436
    %3831 = vmatprep.subr.mxu0 %v441
    %3832 = vmatpush1.msra.mxu0 %v440
    %3833 = vmatprep.subr.mxu0 %v445
    %3834 = vmatpush1.msra.mxu0 %v444
    %3835 = vmatprep.subr.mxu0 %v449
    %3836 = vmatpush1.msra.mxu0 %v448
    %3837 = vmatprep.subr.mxu0 %v453
    %3838 = vmatpush1.msra.mxu0 %v452
    %3839 = vmatprep.subr.mxu0 %v457
    %3840 = vmatpush1.msra.mxu0 %v456
    %3841 = vmatprep.subr.mxu0 %v461
    %3842 = vmatpush1.msra.mxu0 %v460
    %3843 = vmatprep.mubr.f32.mxu0 %v3776
    %3844 = vmatmul.mubr.f32.gmra.mrb[0].mxu0 %v3775
    %v3845 = vpop.f32.mrb[0].mxu0
    %v3846 = vadd.f32 %v606, %v3845
    %v3847 = vpop.f32.mrb[0].mxu0
    %v3848 = vadd.f32 %v610, %v3847
    %3849 = vdwg.mxu0
    %3850 = vmatprep.subr.mxu0 %v465
    %3851 = vmatpush1.msra.mxu0 %v464
    %3852 = vmatprep.subr.mxu0 %v469
    %3853 = vmatpush1.msra.mxu0 %v468
    %3854 = vmatprep.subr.mxu0 %v473
    %3855 = vmatpush1.msra.mxu0 %v472
    %3856 = vmatprep.subr.mxu0 %v477
    %3857 = vmatpush1.msra.mxu0 %v476
    %3858 = vmatprep.subr.mxu0 %v481
    %3859 = vmatpush1.msra.mxu0 %v480
    %3860 = vmatprep.subr.mxu0 %v485
    %3861 = vmatpush1.msra.mxu0 %v484
    %3862 = vmatprep.subr.mxu0 %v489
    %3863 = vmatpush1.msra.mxu0 %v488
    %3864 = vmatprep.subr.mxu0 %v493
    %3865 = vmatpush1.msra.mxu0 %v492
    %3866 = vmatprep.subr.mxu0 %v497
    %3867 = vmatpush1.msra.mxu0 %v496
    %3868 = vmatprep.subr.mxu0 %v501
    %3869 = vmatpush1.msra.mxu0 %v500
    %3870 = vmatprep.subr.mxu0 %v505
    %3871 = vmatpush1.msra.mxu0 %v504
    %3872 = vmatprep.subr.mxu0 %v509
    %3873 = vmatpush1.msra.mxu0 %v508
    %3874 = vmatprep.subr.mxu0 %v513
    %3875 = vmatpush1.msra.mxu0 %v512
    %3876 = vmatprep.subr.mxu0 %v517
    %3877 = vmatpush1.msra.mxu0 %v516
    %3878 = vmatprep.subr.mxu0 %v521
    %3879 = vmatpush1.msra.mxu0 %v520
    %3880 = vmatprep.subr.mxu0 %v525
    %3881 = vmatpush1.msra.mxu0 %v524
    %3882 = vmatprep.subr.mxu0 %v529
    %3883 = vmatpush1.msra.mxu0 %v528
    %3884 = vmatprep.subr.mxu0 %v533
    %3885 = vmatpush1.msra.mxu0 %v532
    %3886 = vmatprep.subr.mxu0 %v537
    %3887 = vmatpush1.msra.mxu0 %v536
    %3888 = vmatprep.subr.mxu0 %v541
    %3889 = vmatpush1.msra.mxu0 %v540
    %3890 = vmatprep.subr.mxu0 %v545
    %3891 = vmatpush1.msra.mxu0 %v544
    %3892 = vmatprep.subr.mxu0 %v549
    %3893 = vmatpush1.msra.mxu0 %v548
    %3894 = vmatprep.subr.mxu0 %v553
    %3895 = vmatpush1.msra.mxu0 %v552
    %3896 = vmatprep.subr.mxu0 %v557
    %3897 = vmatpush1.msra.mxu0 %v556
    %3898 = vmatprep.subr.mxu0 %v561
    %3899 = vmatpush1.msra.mxu0 %v560
    %3900 = vmatprep.subr.mxu0 %v565
    %3901 = vmatpush1.msra.mxu0 %v564
    %3902 = vmatprep.subr.mxu0 %v569
    %3903 = vmatpush1.msra.mxu0 %v568
    %3904 = vmatprep.subr.mxu0 %v573
    %3905 = vmatpush1.msra.mxu0 %v572
    %3906 = vmatprep.subr.mxu0 %v577
    %3907 = vmatpush1.msra.mxu0 %v576
    %3908 = vmatprep.subr.mxu0 %v581
    %3909 = vmatpush1.msra.mxu0 %v580
    %3910 = vmatprep.subr.mxu0 %v585
    %3911 = vmatpush1.msra.mxu0 %v584
    %3912 = vmatprep.subr.mxu0 %v589
    %3913 = vmatpush1.msra.mxu0 %v588
    %3914 = vmatprep.mubr.f32.mxu0 %v3778
    %3915 = vmatmul.mubr.f32.gmra.mrb[0].mxu0 %v3777
    %v3916 = vpop.f32.mrb[0].mxu0
    %v3917 = vadd.f32 %v3846, %v3916
    %v3918 = vpop.f32.mrb[0].mxu0
    %v3919 = vadd.f32 %v3848, %v3918
    %3920 = vdwg.mxu0
    %3921 = vmatprep.subr.mxu0 %v339
    %3922 = vmatpush1.msra.mxu0 %v338
    %3923 = vmatprep.subr.mxu0 %v343
    %3924 = vmatpush1.msra.mxu0 %v342
    %3925 = vmatprep.subr.mxu0 %v347
    %3926 = vmatpush1.msra.mxu0 %v346
    %3927 = vmatprep.subr.mxu0 %v351
    %3928 = vmatpush1.msra.mxu0 %v350
    %3929 = vmatprep.subr.mxu0 %v355
    %3930 = vmatpush1.msra.mxu0 %v354
    %3931 = vmatprep.subr.mxu0 %v359
    %3932 = vmatpush1.msra.mxu0 %v358
    %3933 = vmatprep.subr.mxu0 %v363
    %3934 = vmatpush1.msra.mxu0 %v362
    %3935 = vmatprep.subr.mxu0 %v367
    %3936 = vmatpush1.msra.mxu0 %v366
    %3937 = vmatprep.subr.mxu0 %v371
    %3938 = vmatpush1.msra.mxu0 %v370
    %3939 = vmatprep.subr.mxu0 %v375
    %3940 = vmatpush1.msra.mxu0 %v374
    %3941 = vmatprep.subr.mxu0 %v379
    %3942 = vmatpush1.msra.mxu0 %v378
    %3943 = vmatprep.subr.mxu0 %v383
    %3944 = vmatpush1.msra.mxu0 %v382
    %3945 = vmatprep.subr.mxu0 %v387
    %3946 = vmatpush1.msra.mxu0 %v386
    %3947 = vmatprep.subr.mxu0 %v391
    %3948 = vmatpush1.msra.mxu0 %v390
    %3949 = vmatprep.subr.mxu0 %v395
    %3950 = vmatpush1.msra.mxu0 %v394
    %3951 = vmatprep.subr.mxu0 %v399
    %3952 = vmatpush1.msra.mxu0 %v398
    %3953 = vmatprep.subr.mxu0 %v403
    %3954 = vmatpush1.msra.mxu0 %v402
    %3955 = vmatprep.subr.mxu0 %v407
    %3956 = vmatpush1.msra.mxu0 %v406
    %3957 = vmatprep.subr.mxu0 %v411
    %3958 = vmatpush1.msra.mxu0 %v410
    %3959 = vmatprep.subr.mxu0 %v415
    %3960 = vmatpush1.msra.mxu0 %v414
    %3961 = vmatprep.subr.mxu0 %v419
    %3962 = vmatpush1.msra.mxu0 %v418
    %3963 = vmatprep.subr.mxu0 %v423
    %3964 = vmatpush1.msra.mxu0 %v422
    %3965 = vmatprep.subr.mxu0 %v427
    %3966 = vmatpush1.msra.mxu0 %v426
    %3967 = vmatprep.subr.mxu0 %v431
    %3968 = vmatpush1.msra.mxu0 %v430
    %3969 = vmatprep.subr.mxu0 %v435
    %3970 = vmatpush1.msra.mxu0 %v434
    %3971 = vmatprep.subr.mxu0 %v439
    %3972 = vmatpush1.msra.mxu0 %v438
    %3973 = vmatprep.subr.mxu0 %v443
    %3974 = vmatpush1.msra.mxu0 %v442
    %3975 = vmatprep.subr.mxu0 %v447
    %3976 = vmatpush1.msra.mxu0 %v446
    %3977 = vmatprep.subr.mxu0 %v451
    %3978 = vmatpush1.msra.mxu0 %v450
    %3979 = vmatprep.subr.mxu0 %v455
    %3980 = vmatpush1.msra.mxu0 %v454
    %3981 = vmatprep.subr.mxu0 %v459
    %3982 = vmatpush1.msra.mxu0 %v458
    %3983 = vmatprep.subr.mxu0 %v463
    %3984 = vmatpush1.msra.mxu0 %v462
    %3985 = vmatprep.mubr.f32.mxu0 %v3776
    %3986 = vmatmul.mubr.f32.gmra.mrb[0].mxu0 %v3775
    %v3987 = vpop.f32.mrb[0].mxu0
    %v3988 = vadd.f32 %v614, %v3987
    %v3989 = vpop.f32.mrb[0].mxu0
    %v3990 = vadd.f32 %v618, %v3989
    %3991 = vdwg.mxu0
    %3992 = vmatprep.subr.mxu0 %v467
    %3993 = vmatpush1.msra.mxu0 %v466
    %3994 = vmatprep.subr.mxu0 %v471
    %3995 = vmatpush1.msra.mxu0 %v470
    %3996 = vmatprep.subr.mxu0 %v475
    %3997 = vmatpush1.msra.mxu0 %v474
    %3998 = vmatprep.subr.mxu0 %v479
    %3999 = vmatpush1.msra.mxu0 %v478
    %4000 = vmatprep.subr.mxu0 %v483
    %4001 = vmatpush1.msra.mxu0 %v482
    %4002 = vmatprep.subr.mxu0 %v487
    %4003 = vmatpush1.msra.mxu0 %v486
    %4004 = vmatprep.subr.mxu0 %v491
    %4005 = vmatpush1.msra.mxu0 %v490
    %4006 = vmatprep.subr.mxu0 %v495
    %4007 = vmatpush1.msra.mxu0 %v494
    %4008 = vmatprep.subr.mxu0 %v499
    %4009 = vmatpush1.msra.mxu0 %v498
    %4010 = vmatprep.subr.mxu0 %v503
    %4011 = vmatpush1.msra.mxu0 %v502
    %4012 = vmatprep.subr.mxu0 %v507
    %4013 = vmatpush1.msra.mxu0 %v506
    %4014 = vmatprep.subr.mxu0 %v511
    %4015 = vmatpush1.msra.mxu0 %v510
    %4016 = vmatprep.subr.mxu0 %v515
    %4017 = vmatpush1.msra.mxu0 %v514
    %4018 = vmatprep.subr.mxu0 %v519
    %4019 = vmatpush1.msra.mxu0 %v518
    %4020 = vmatprep.subr.mxu0 %v523
    %4021 = vmatpush1.msra.mxu0 %v522
    %4022 = vmatprep.subr.mxu0 %v527
    %4023 = vmatpush1.msra.mxu0 %v526
    %4024 = vmatprep.subr.mxu0 %v531
    %4025 = vmatpush1.msra.mxu0 %v530
    %4026 = vmatprep.subr.mxu0 %v535
    %4027 = vmatpush1.msra.mxu0 %v534
    %4028 = vmatprep.subr.mxu0 %v539
    %4029 = vmatpush1.msra.mxu0 %v538
    %4030 = vmatprep.subr.mxu0 %v543
    %4031 = vmatpush1.msra.mxu0 %v542
    %4032 = vmatprep.subr.mxu0 %v547
    %4033 = vmatpush1.msra.mxu0 %v546
    %4034 = vmatprep.subr.mxu0 %v551
    %4035 = vmatpush1.msra.mxu0 %v550
    %4036 = vmatprep.subr.mxu0 %v555
    %4037 = vmatpush1.msra.mxu0 %v554
    %4038 = vmatprep.subr.mxu0 %v559
    %4039 = vmatpush1.msra.mxu0 %v558
    %4040 = vmatprep.subr.mxu0 %v563
    %4041 = vmatpush1.msra.mxu0 %v562
    %4042 = vmatprep.subr.mxu0 %v567
    %4043 = vmatpush1.msra.mxu0 %v566
    %4044 = vmatprep.subr.mxu0 %v571
    %4045 = vmatpush1.msra.mxu0 %v570
    %4046 = vmatprep.subr.mxu0 %v575
    %4047 = vmatpush1.msra.mxu0 %v574
    %4048 = vmatprep.subr.mxu0 %v579
    %4049 = vmatpush1.msra.mxu0 %v578
    %4050 = vmatprep.subr.mxu0 %v583
    %4051 = vmatpush1.msra.mxu0 %v582
    %4052 = vmatprep.subr.mxu0 %v587
    %4053 = vmatpush1.msra.mxu0 %v586
    %4054 = vmatprep.subr.mxu0 %v591
    %4055 = vmatpush1.msra.mxu0 %v590
    %4056 = vmatprep.mubr.f32.mxu0 %v3778
    %4057 = vmatmul.mubr.f32.gmra.mrb[0].mxu0 %v3777
    %v4058 = vpop.f32.mrb[0].mxu0
    %v4059 = vadd.f32 %v3988, %v4058
    %v4060 = vpop.f32.mrb[0].mxu0
    %v4061 = vadd.f32 %v3990, %v4060
    %4062 = vdwg.mxu0
    %v4063 = vtanh.pop %v3917
    %v4064 = vtanh.pop %v3919
    %v4065 = vtanh.pop %v4059
    %v4066 = vtanh.pop %v4061
    %4067 = vmatprep.subr.mxu0 %v337
    %4068 = vmatpush1.msra.mxu0 %v336
    %4069 = vmatprep.subr.mxu0 %v341
    %4070 = vmatpush1.msra.mxu0 %v340
    %4071 = vmatprep.subr.mxu0 %v345
    %4072 = vmatpush1.msra.mxu0 %v344
    %4073 = vmatprep.subr.mxu0 %v349
    %4074 = vmatpush1.msra.mxu0 %v348
    %4075 = vmatprep.subr.mxu0 %v353
    %4076 = vmatpush1.msra.mxu0 %v352
    %4077 = vmatprep.subr.mxu0 %v357
    %4078 = vmatpush1.msra.mxu0 %v356
    %4079 = vmatprep.subr.mxu0 %v361
    %4080 = vmatpush1.msra.mxu0 %v360
    %4081 = vmatprep.subr.mxu0 %v365
    %4082 = vmatpush1.msra.mxu0 %v364
    %4083 = vmatprep.subr.mxu0 %v369
    %4084 = vmatpush1.msra.mxu0 %v368
    %4085 = vmatprep.subr.mxu0 %v373
    %4086 = vmatpush1.msra.mxu0 %v372
    %4087 = vmatprep.subr.mxu0 %v377
    %4088 = vmatpush1.msra.mxu0 %v376
    %4089 = vmatprep.subr.mxu0 %v381
    %4090 = vmatpush1.msra.mxu0 %v380
    %4091 = vmatprep.subr.mxu0 %v385
    %4092 = vmatpush1.msra.mxu0 %v384
    %4093 = vmatprep.subr.mxu0 %v389
    %4094 = vmatpush1.msra.mxu0 %v388
    %4095 = vmatprep.subr.mxu0 %v393
    %4096 = vmatpush1.msra.mxu0 %v392
    %4097 = vmatprep.subr.mxu0 %v397
    %4098 = vmatpush1.msra.mxu0 %v396
    %4099 = vmatprep.subr.mxu0 %v401
    %4100 = vmatpush1.msra.mxu0 %v400
    %4101 = vmatprep.subr.mxu0 %v405
    %4102 = vmatpush1.msra.mxu0 %v404
    %4103 = vmatprep.subr.mxu0 %v409
    %4104 = vmatpush1.msra.mxu0 %v408
    %4105 = vmatprep.subr.mxu0 %v413
    %4106 = vmatpush1.msra.mxu0 %v412
    %4107 = vmatprep.subr.mxu0 %v417
    %4108 = vmatpush1.msra.mxu0 %v416
    %4109 = vmatprep.subr.mxu0 %v421
    %4110 = vmatpush1.msra.mxu0 %v420
    %4111 = vmatprep.subr.mxu0 %v425
    %4112 = vmatpush1.msra.mxu0 %v424
    %4113 = vmatprep.subr.mxu0 %v429
    %4114 = vmatpush1.msra.mxu0 %v428
    %4115 = vmatprep.subr.mxu0 %v433
    %4116 = vmatpush1.msra.mxu0 %v432
    %4117 = vmatprep.subr.mxu0 %v437
    %4118 = vmatpush1.msra.mxu0 %v436
    %4119 = vmatprep.subr.mxu0 %v441
    %4120 = vmatpush1.msra.mxu0 %v440
    %4121 = vmatprep.subr.mxu0 %v445
    %4122 = vmatpush1.msra.mxu0 %v444
    %4123 = vmatprep.subr.mxu0 %v449
    %4124 = vmatpush1.msra.mxu0 %v448
    %4125 = vmatprep.subr.mxu0 %v453
    %4126 = vmatpush1.msra.mxu0 %v452
    %4127 = vmatprep.subr.mxu0 %v457
    %4128 = vmatpush1.msra.mxu0 %v456
    %4129 = vmatprep.subr.mxu0 %v461
    %4130 = vmatpush1.msra.mxu0 %v460
    %4131 = vmatprep.mubr.f32.mxu0 %v4064
    %4132 = vmatmul.mubr.f32.gmra.mrb[0].mxu0 %v4063
    %v4133 = vpop.f32.mrb[0].mxu0
    %v4134 = vadd.f32 %v606, %v4133
    %v4135 = vpop.f32.mrb[0].mxu0
    %v4136 = vadd.f32 %v610, %v4135
    %4137 = vdwg.mxu0
    %4138 = vmatprep.subr.mxu0 %v465
    %4139 = vmatpush1.msra.mxu0 %v464
    %4140 = vmatprep.subr.mxu0 %v469
    %4141 = vmatpush1.msra.mxu0 %v468
    %4142 = vmatprep.subr.mxu0 %v473
    %4143 = vmatpush1.msra.mxu0 %v472
    %4144 = vmatprep.subr.mxu0 %v477
    %4145 = vmatpush1.msra.mxu0 %v476
    %4146 = vmatprep.subr.mxu0 %v481
    %4147 = vmatpush1.msra.mxu0 %v480
    %4148 = vmatprep.subr.mxu0 %v485
    %4149 = vmatpush1.msra.mxu0 %v484
    %4150 = vmatprep.subr.mxu0 %v489
    %4151 = vmatpush1.msra.mxu0 %v488
    %4152 = vmatprep.subr.mxu0 %v493
    %4153 = vmatpush1.msra.mxu0 %v492
    %4154 = vmatprep.subr.mxu0 %v497
    %4155 = vmatpush1.msra.mxu0 %v496
    %4156 = vmatprep.subr.mxu0 %v501
    %4157 = vmatpush1.msra.mxu0 %v500
    %4158 = vmatprep.subr.mxu0 %v505
    %4159 = vmatpush1.msra.mxu0 %v504
    %4160 = vmatprep.subr.mxu0 %v509
    %4161 = vmatpush1.msra.mxu0 %v508
    %4162 = vmatprep.subr.mxu0 %v513
    %4163 = vmatpush1.msra.mxu0 %v512
    %4164 = vmatprep.subr.mxu0 %v517
    %4165 = vmatpush1.msra.mxu0 %v516
    %4166 = vmatprep.subr.mxu0 %v521
    %4167 = vmatpush1.msra.mxu0 %v520
    %4168 = vmatprep.subr.mxu0 %v525
    %4169 = vmatpush1.msra.mxu0 %v524
    %4170 = vmatprep.subr.mxu0 %v529
    %4171 = vmatpush1.msra.mxu0 %v528
    %4172 = vmatprep.subr.mxu0 %v533
    %4173 = vmatpush1.msra.mxu0 %v532
    %4174 = vmatprep.subr.mxu0 %v537
    %4175 = vmatpush1.msra.mxu0 %v536
    %4176 = vmatprep.subr.mxu0 %v541
    %4177 = vmatpush1.msra.mxu0 %v540
    %4178 = vmatprep.subr.mxu0 %v545
    %4179 = vmatpush1.msra.mxu0 %v544
    %4180 = vmatprep.subr.mxu0 %v549
    %4181 = vmatpush1.msra.mxu0 %v548
    %4182 = vmatprep.subr.mxu0 %v553
    %4183 = vmatpush1.msra.mxu0 %v552
    %4184 = vmatprep.subr.mxu0 %v557
    %4185 = vmatpush1.msra.mxu0 %v556
    %4186 = vmatprep.subr.mxu0 %v561
    %4187 = vmatpush1.msra.mxu0 %v560
    %4188 = vmatprep.subr.mxu0 %v565
    %4189 = vmatpush1.msra.mxu0 %v564
    %4190 = vmatprep.subr.mxu0 %v569
    %4191 = vmatpush1.msra.mxu0 %v568
    %4192 = vmatprep.subr.mxu0 %v573
    %4193 = vmatpush1.msra.mxu0 %v572
    %4194 = vmatprep.subr.mxu0 %v577
    %4195 = vmatpush1.msra.mxu0 %v576
    %4196 = vmatprep.subr.mxu0 %v581
    %4197 = vmatpush1.msra.mxu0 %v580
    %4198 = vmatprep.subr.mxu0 %v585
    %4199 = vmatpush1.msra.mxu0 %v584
    %4200 = vmatprep.subr.mxu0 %v589
    %4201 = vmatpush1.msra.mxu0 %v588
    %4202 = vmatprep.mubr.f32.mxu0 %v4066
    %4203 = vmatmul.mubr.f32.gmra.mrb[0].mxu0 %v4065
    %v4204 = vpop.f32.mrb[0].mxu0
    %v4205 = vadd.f32 %v4134, %v4204
    %v4206 = vpop.f32.mrb[0].mxu0
    %v4207 = vadd.f32 %v4136, %v4206
    %4208 = vdwg.mxu0
    %4209 = vmatprep.subr.mxu0 %v339
    %4210 = vmatpush1.msra.mxu0 %v338
    %4211 = vmatprep.subr.mxu0 %v343
    %4212 = vmatpush1.msra.mxu0 %v342
    %4213 = vmatprep.subr.mxu0 %v347
    %4214 = vmatpush1.msra.mxu0 %v346
    %4215 = vmatprep.subr.mxu0 %v351
    %4216 = vmatpush1.msra.mxu0 %v350
    %4217 = vmatprep.subr.mxu0 %v355
    %4218 = vmatpush1.msra.mxu0 %v354
    %4219 = vmatprep.subr.mxu0 %v359
    %4220 = vmatpush1.msra.mxu0 %v358
    %4221 = vmatprep.subr.mxu0 %v363
    %4222 = vmatpush1.msra.mxu0 %v362
    %4223 = vmatprep.subr.mxu0 %v367
    %4224 = vmatpush1.msra.mxu0 %v366
    %4225 = vmatprep.subr.mxu0 %v371
    %4226 = vmatpush1.msra.mxu0 %v370
    %4227 = vmatprep.subr.mxu0 %v375
    %4228 = vmatpush1.msra.mxu0 %v374
    %4229 = vmatprep.subr.mxu0 %v379
    %4230 = vmatpush1.msra.mxu0 %v378
    %4231 = vmatprep.subr.mxu0 %v383
    %4232 = vmatpush1.msra.mxu0 %v382
    %4233 = vmatprep.subr.mxu0 %v387
    %4234 = vmatpush1.msra.mxu0 %v386
    %4235 = vmatprep.subr.mxu0 %v391
    %4236 = vmatpush1.msra.mxu0 %v390
    %4237 = vmatprep.subr.mxu0 %v395
    %4238 = vmatpush1.msra.mxu0 %v394
    %4239 = vmatprep.subr.mxu0 %v399
    %4240 = vmatpush1.msra.mxu0 %v398
    %4241 = vmatprep.subr.mxu0 %v403
    %4242 = vmatpush1.msra.mxu0 %v402
    %4243 = vmatprep.subr.mxu0 %v407
    %4244 = vmatpush1.msra.mxu0 %v406
    %4245 = vmatprep.subr.mxu0 %v411
    %4246 = vmatpush1.msra.mxu0 %v410
    %4247 = vmatprep.subr.mxu0 %v415
    %4248 = vmatpush1.msra.mxu0 %v414
    %4249 = vmatprep.subr.mxu0 %v419
    %4250 = vmatpush1.msra.mxu0 %v418
    %4251 = vmatprep.subr.mxu0 %v423
    %4252 = vmatpush1.msra.mxu0 %v422
    %4253 = vmatprep.subr.mxu0 %v427
    %4254 = vmatpush1.msra.mxu0 %v426
    %4255 = vmatprep.subr.mxu0 %v431
    %4256 = vmatpush1.msra.mxu0 %v430
    %4257 = vmatprep.subr.mxu0 %v435
    %4258 = vmatpush1.msra.mxu0 %v434
    %4259 = vmatprep.subr.mxu0 %v439
    %4260 = vmatpush1.msra.mxu0 %v438
    %4261 = vmatprep.subr.mxu0 %v443
    %4262 = vmatpush1.msra.mxu0 %v442
    %4263 = vmatprep.subr.mxu0 %v447
    %4264 = vmatpush1.msra.mxu0 %v446
    %4265 = vmatprep.subr.mxu0 %v451
    %4266 = vmatpush1.msra.mxu0 %v450
    %4267 = vmatprep.subr.mxu0 %v455
    %4268 = vmatpush1.msra.mxu0 %v454
    %4269 = vmatprep.subr.mxu0 %v459
    %4270 = vmatpush1.msra.mxu0 %v458
    %4271 = vmatprep.subr.mxu0 %v463
    %4272 = vmatpush1.msra.mxu0 %v462
    %4273 = vmatprep.mubr.f32.mxu0 %v4064
    %4274 = vmatmul.mubr.f32.gmra.mrb[0].mxu0 %v4063
    %v4275 = vpop.f32.mrb[0].mxu0
    %v4276 = vadd.f32 %v614, %v4275
    %v4277 = vpop.f32.mrb[0].mxu0
    %v4278 = vadd.f32 %v618, %v4277
    %4279 = vdwg.mxu0
    %4280 = vmatprep.subr.mxu0 %v467
    %4281 = vmatpush1.msra.mxu0 %v466
    %4282 = vmatprep.subr.mxu0 %v471
    %4283 = vmatpush1.msra.mxu0 %v470
    %4284 = vmatprep.subr.mxu0 %v475
    %4285 = vmatpush1.msra.mxu0 %v474
    %4286 = vmatprep.subr.mxu0 %v479
    %4287 = vmatpush1.msra.mxu0 %v478
    %4288 = vmatprep.subr.mxu0 %v483
    %4289 = vmatpush1.msra.mxu0 %v482
    %4290 = vmatprep.subr.mxu0 %v487
    %4291 = vmatpush1.msra.mxu0 %v486
    %4292 = vmatprep.subr.mxu0 %v491
    %4293 = vmatpush1.msra.mxu0 %v490
    %4294 = vmatprep.subr.mxu0 %v495
    %4295 = vmatpush1.msra.mxu0 %v494
    %4296 = vmatprep.subr.mxu0 %v499
    %4297 = vmatpush1.msra.mxu0 %v498
    %4298 = vmatprep.subr.mxu0 %v503
    %4299 = vmatpush1.msra.mxu0 %v502
    %4300 = vmatprep.subr.mxu0 %v507
    %4301 = vmatpush1.msra.mxu0 %v506
    %4302 = vmatprep.subr.mxu0 %v511
    %4303 = vmatpush1.msra.mxu0 %v510
    %4304 = vmatprep.subr.mxu0 %v515
    %4305 = vmatpush1.msra.mxu0 %v514
    %4306 = vmatprep.subr.mxu0 %v519
    %4307 = vmatpush1.msra.mxu0 %v518
    %4308 = vmatprep.subr.mxu0 %v523
    %4309 = vmatpush1.msra.mxu0 %v522
    %4310 = vmatprep.subr.mxu0 %v527
    %4311 = vmatpush1.msra.mxu0 %v526
    %4312 = vmatprep.subr.mxu0 %v531
    %4313 = vmatpush1.msra.mxu0 %v530
    %4314 = vmatprep.subr.mxu0 %v535
    %4315 = vmatpush1.msra.mxu0 %v534
    %4316 = vmatprep.subr.mxu0 %v539
    %4317 = vmatpush1.msra.mxu0 %v538
    %4318 = vmatprep.subr.mxu0 %v543
    %4319 = vmatpush1.msra.mxu0 %v542
    %4320 = vmatprep.subr.mxu0 %v547
    %4321 = vmatpush1.msra.mxu0 %v546
    %4322 = vmatprep.subr.mxu0 %v551
    %4323 = vmatpush1.msra.mxu0 %v550
    %4324 = vmatprep.subr.mxu0 %v555
    %4325 = vmatpush1.msra.mxu0 %v554
    %4326 = vmatprep.subr.mxu0 %v559
    %4327 = vmatpush1.msra.mxu0 %v558
    %4328 = vmatprep.subr.mxu0 %v563
    %4329 = vmatpush1.msra.mxu0 %v562
    %4330 = vmatprep.subr.mxu0 %v567
    %4331 = vmatpush1.msra.mxu0 %v566
    %4332 = vmatprep.subr.mxu0 %v571
    %4333 = vmatpush1.msra.mxu0 %v570
    %4334 = vmatprep.subr.mxu0 %v575
    %4335 = vmatpush1.msra.mxu0 %v574
    %4336 = vmatprep.subr.mxu0 %v579
    %4337 = vmatpush1.msra.mxu0 %v578
    %4338 = vmatprep.subr.mxu0 %v583
    %4339 = vmatpush1.msra.mxu0 %v582
    %4340 = vmatprep.subr.mxu0 %v587
    %4341 = vmatpush1.msra.mxu0 %v586
    %4342 = vmatprep.subr.mxu0 %v591
    %4343 = vmatpush1.msra.mxu0 %v590
    %4344 = vmatprep.mubr.f32.mxu0 %v4066
    %4345 = vmatmul.mubr.f32.gmra.mrb[0].mxu0 %v4065
    %v4346 = vpop.f32.mrb[0].mxu0
    %v4347 = vadd.f32 %v4276, %v4346
    %v4348 = vpop.f32.mrb[0].mxu0
    %v4349 = vadd.f32 %v4278, %v4348
    %4350 = vdwg.mxu0
    %v4351 = vtanh.pop %v4205
    %v4352 = vtanh.pop %v4207
    %v4353 = vtanh.pop %v4347
    %v4354 = vtanh.pop %v4349
    %4355 = vmatprep.subr.mxu0 %v337
    %4356 = vmatpush1.msra.mxu0 %v336
    %4357 = vmatprep.subr.mxu0 %v341
    %4358 = vmatpush1.msra.mxu0 %v340
    %4359 = vmatprep.subr.mxu0 %v345
    %4360 = vmatpush1.msra.mxu0 %v344
    %4361 = vmatprep.subr.mxu0 %v349
    %4362 = vmatpush1.msra.mxu0 %v348
    %4363 = vmatprep.subr.mxu0 %v353
    %4364 = vmatpush1.msra.mxu0 %v352
    %4365 = vmatprep.subr.mxu0 %v357
    %4366 = vmatpush1.msra.mxu0 %v356
    %4367 = vmatprep.subr.mxu0 %v361
    %4368 = vmatpush1.msra.mxu0 %v360
    %4369 = vmatprep.subr.mxu0 %v365
    %4370 = vmatpush1.msra.mxu0 %v364
    %4371 = vmatprep.subr.mxu0 %v369
    %4372 = vmatpush1.msra.mxu0 %v368
    %4373 = vmatprep.subr.mxu0 %v373
    %4374 = vmatpush1.msra.mxu0 %v372
    %4375 = vmatprep.subr.mxu0 %v377
    %4376 = vmatpush1.msra.mxu0 %v376
    %4377 = vmatprep.subr.mxu0 %v381
    %4378 = vmatpush1.msra.mxu0 %v380
    %4379 = vmatprep.subr.mxu0 %v385
    %4380 = vmatpush1.msra.mxu0 %v384
    %4381 = vmatprep.subr.mxu0 %v389
    %4382 = vmatpush1.msra.mxu0 %v388
    %4383 = vmatprep.subr.mxu0 %v393
    %4384 = vmatpush1.msra.mxu0 %v392
    %4385 = vmatprep.subr.mxu0 %v397
    %4386 = vmatpush1.msra.mxu0 %v396
    %4387 = vmatprep.subr.mxu0 %v401
    %4388 = vmatpush1.msra.mxu0 %v400
    %4389 = vmatprep.subr.mxu0 %v405
    %4390 = vmatpush1.msra.mxu0 %v404
    %4391 = vmatprep.subr.mxu0 %v409
    %4392 = vmatpush1.msra.mxu0 %v408
    %4393 = vmatprep.subr.mxu0 %v413
    %4394 = vmatpush1.msra.mxu0 %v412
    %4395 = vmatprep.subr.mxu0 %v417
    %4396 = vmatpush1.msra.mxu0 %v416
    %4397 = vmatprep.subr.mxu0 %v421
    %4398 = vmatpush1.msra.mxu0 %v420
    %4399 = vmatprep.subr.mxu0 %v425
    %4400 = vmatpush1.msra.mxu0 %v424
    %4401 = vmatprep.subr.mxu0 %v429
    %4402 = vmatpush1.msra.mxu0 %v428
    %4403 = vmatprep.subr.mxu0 %v433
    %4404 = vmatpush1.msra.mxu0 %v432
    %4405 = vmatprep.subr.mxu0 %v437
    %4406 = vmatpush1.msra.mxu0 %v436
    %4407 = vmatprep.subr.mxu0 %v441
    %4408 = vmatpush1.msra.mxu0 %v440
    %4409 = vmatprep.subr.mxu0 %v445
    %4410 = vmatpush1.msra.mxu0 %v444
    %4411 = vmatprep.subr.mxu0 %v449
    %4412 = vmatpush1.msra.mxu0 %v448
    %4413 = vmatprep.subr.mxu0 %v453
    %4414 = vmatpush1.msra.mxu0 %v452
    %4415 = vmatprep.subr.mxu0 %v457
    %4416 = vmatpush1.msra.mxu0 %v456
    %4417 = vmatprep.subr.mxu0 %v461
    %4418 = vmatpush1.msra.mxu0 %v460
    %4419 = vmatprep.mubr.f32.mxu0 %v4352
    %4420 = vmatmul.mubr.f32.gmra.mrb[0].mxu0 %v4351
    %v4421 = vpop.f32.mrb[0].mxu0
    %v4422 = vadd.f32 %v606, %v4421
    %v4423 = vpop.f32.mrb[0].mxu0
    %v4424 = vadd.f32 %v610, %v4423
    %4425 = vdwg.mxu0
    %4426 = vmatprep.subr.mxu0 %v465
    %4427 = vmatpush1.msra.mxu0 %v464
    %4428 = vmatprep.subr.mxu0 %v469
    %4429 = vmatpush1.msra.mxu0 %v468
    %4430 = vmatprep.subr.mxu0 %v473
    %4431 = vmatpush1.msra.mxu0 %v472
    %4432 = vmatprep.subr.mxu0 %v477
    %4433 = vmatpush1.msra.mxu0 %v476
    %4434 = vmatprep.subr.mxu0 %v481
    %4435 = vmatpush1.msra.mxu0 %v480
    %4436 = vmatprep.subr.mxu0 %v485
    %4437 = vmatpush1.msra.mxu0 %v484
    %4438 = vmatprep.subr.mxu0 %v489
    %4439 = vmatpush1.msra.mxu0 %v488
    %4440 = vmatprep.subr.mxu0 %v493
    %4441 = vmatpush1.msra.mxu0 %v492
    %4442 = vmatprep.subr.mxu0 %v497
    %4443 = vmatpush1.msra.mxu0 %v496
    %4444 = vmatprep.subr.mxu0 %v501
    %4445 = vmatpush1.msra.mxu0 %v500
    %4446 = vmatprep.subr.mxu0 %v505
    %4447 = vmatpush1.msra.mxu0 %v504
    %4448 = vmatprep.subr.mxu0 %v509
    %4449 = vmatpush1.msra.mxu0 %v508
    %4450 = vmatprep.subr.mxu0 %v513
    %4451 = vmatpush1.msra.mxu0 %v512
    %4452 = vmatprep.subr.mxu0 %v517
    %4453 = vmatpush1.msra.mxu0 %v516
    %4454 = vmatprep.subr.mxu0 %v521
    %4455 = vmatpush1.msra.mxu0 %v520
    %4456 = vmatprep.subr.mxu0 %v525
    %4457 = vmatpush1.msra.mxu0 %v524
    %4458 = vmatprep.subr.mxu0 %v529
    %4459 = vmatpush1.msra.mxu0 %v528
    %4460 = vmatprep.subr.mxu0 %v533
    %4461 = vmatpush1.msra.mxu0 %v532
    %4462 = vmatprep.subr.mxu0 %v537
    %4463 = vmatpush1.msra.mxu0 %v536
    %4464 = vmatprep.subr.mxu0 %v541
    %4465 = vmatpush1.msra.mxu0 %v540
    %4466 = vmatprep.subr.mxu0 %v545
    %4467 = vmatpush1.msra.mxu0 %v544
    %4468 = vmatprep.subr.mxu0 %v549
    %4469 = vmatpush1.msra.mxu0 %v548
    %4470 = vmatprep.subr.mxu0 %v553
    %4471 = vmatpush1.msra.mxu0 %v552
    %4472 = vmatprep.subr.mxu0 %v557
    %4473 = vmatpush1.msra.mxu0 %v556
    %4474 = vmatprep.subr.mxu0 %v561
    %4475 = vmatpush1.msra.mxu0 %v560
    %4476 = vmatprep.subr.mxu0 %v565
    %4477 = vmatpush1.msra.mxu0 %v564
    %4478 = vmatprep.subr.mxu0 %v569
    %4479 = vmatpush1.msra.mxu0 %v568
    %4480 = vmatprep.subr.mxu0 %v573
    %4481 = vmatpush1.msra.mxu0 %v572
    %4482 = vmatprep.subr.mxu0 %v577
    %4483 = vmatpush1.msra.mxu0 %v576
    %4484 = vmatprep.subr.mxu0 %v581
    %4485 = vmatpush1.msra.mxu0 %v580
    %4486 = vmatprep.subr.mxu0 %v585
    %4487 = vmatpush1.msra.mxu0 %v584
    %4488 = vmatprep.subr.mxu0 %v589
    %4489 = vmatpush1.msra.mxu0 %v588
    %4490 = vmatprep.mubr.f32.mxu0 %v4354
    %4491 = vmatmul.mubr.f32.gmra.mrb[0].mxu0 %v4353
    %v4492 = vpop.f32.mrb[0].mxu0
    %v4493 = vadd.f32 %v4422, %v4492
    %v4494 = vpop.f32.mrb[0].mxu0
    %v4495 = vadd.f32 %v4424, %v4494
    %4496 = vdwg.mxu0
    %4497 = vmatprep.subr.mxu0 %v339
    %4498 = vmatpush1.msra.mxu0 %v338
    %4499 = vmatprep.subr.mxu0 %v343
    %4500 = vmatpush1.msra.mxu0 %v342
    %4501 = vmatprep.subr.mxu0 %v347
    %4502 = vmatpush1.msra.mxu0 %v346
    %4503 = vmatprep.subr.mxu0 %v351
    %4504 = vmatpush1.msra.mxu0 %v350
    %4505 = vmatprep.subr.mxu0 %v355
    %4506 = vmatpush1.msra.mxu0 %v354
    %4507 = vmatprep.subr.mxu0 %v359
    %4508 = vmatpush1.msra.mxu0 %v358
    %4509 = vmatprep.subr.mxu0 %v363
    %4510 = vmatpush1.msra.mxu0 %v362
    %4511 = vmatprep.subr.mxu0 %v367
    %4512 = vmatpush1.msra.mxu0 %v366
    %4513 = vmatprep.subr.mxu0 %v371
    %4514 = vmatpush1.msra.mxu0 %v370
    %4515 = vmatprep.subr.mxu0 %v375
    %4516 = vmatpush1.msra.mxu0 %v374
    %4517 = vmatprep.subr.mxu0 %v379
    %4518 = vmatpush1.msra.mxu0 %v378
    %4519 = vmatprep.subr.mxu0 %v383
    %4520 = vmatpush1.msra.mxu0 %v382
    %4521 = vmatprep.subr.mxu0 %v387
    %4522 = vmatpush1.msra.mxu0 %v386
    %4523 = vmatprep.subr.mxu0 %v391
    %4524 = vmatpush1.msra.mxu0 %v390
    %4525 = vmatprep.subr.mxu0 %v395
    %4526 = vmatpush1.msra.mxu0 %v394
    %4527 = vmatprep.subr.mxu0 %v399
    %4528 = vmatpush1.msra.mxu0 %v398
    %4529 = vmatprep.subr.mxu0 %v403
    %4530 = vmatpush1.msra.mxu0 %v402
    %4531 = vmatprep.subr.mxu0 %v407
    %4532 = vmatpush1.msra.mxu0 %v406
    %4533 = vmatprep.subr.mxu0 %v411
    %4534 = vmatpush1.msra.mxu0 %v410
    %4535 = vmatprep.subr.mxu0 %v415
    %4536 = vmatpush1.msra.mxu0 %v414
    %4537 = vmatprep.subr.mxu0 %v419
    %4538 = vmatpush1.msra.mxu0 %v418
    %4539 = vmatprep.subr.mxu0 %v423
    %4540 = vmatpush1.msra.mxu0 %v422
    %4541 = vmatprep.subr.mxu0 %v427
    %4542 = vmatpush1.msra.mxu0 %v426
    %4543 = vmatprep.subr.mxu0 %v431
    %4544 = vmatpush1.msra.mxu0 %v430
    %4545 = vmatprep.subr.mxu0 %v435
    %4546 = vmatpush1.msra.mxu0 %v434
    %4547 = vmatprep.subr.mxu0 %v439
    %4548 = vmatpush1.msra.mxu0 %v438
    %4549 = vmatprep.subr.mxu0 %v443
    %4550 = vmatpush1.msra.mxu0 %v442
    %4551 = vmatprep.subr.mxu0 %v447
    %4552 = vmatpush1.msra.mxu0 %v446
    %4553 = vmatprep.subr.mxu0 %v451
    %4554 = vmatpush1.msra.mxu0 %v450
    %4555 = vmatprep.subr.mxu0 %v455
    %4556 = vmatpush1.msra.mxu0 %v454
    %4557 = vmatprep.subr.mxu0 %v459
    %4558 = vmatpush1.msra.mxu0 %v458
    %4559 = vmatprep.subr.mxu0 %v463
    %4560 = vmatpush1.msra.mxu0 %v462
    %4561 = vmatprep.mubr.f32.mxu0 %v4352
    %4562 = vmatmul.mubr.f32.gmra.mrb[0].mxu0 %v4351
    %v4563 = vpop.f32.mrb[0].mxu0
    %v4564 = vadd.f32 %v614, %v4563
    %v4565 = vpop.f32.mrb[0].mxu0
    %v4566 = vadd.f32 %v618, %v4565
    %4567 = vdwg.mxu0
    %4568 = vmatprep.subr.mxu0 %v467
    %4569 = vmatpush1.msra.mxu0 %v466
    %4570 = vmatprep.subr.mxu0 %v471
    %4571 = vmatpush1.msra.mxu0 %v470
    %4572 = vmatprep.subr.mxu0 %v475
    %4573 = vmatpush1.msra.mxu0 %v474
    %4574 = vmatprep.subr.mxu0 %v479
    %4575 = vmatpush1.msra.mxu0 %v478
    %4576 = vmatprep.subr.mxu0 %v483
    %4577 = vmatpush1.msra.mxu0 %v482
    %4578 = vmatprep.subr.mxu0 %v487
    %4579 = vmatpush1.msra.mxu0 %v486
    %4580 = vmatprep.subr.mxu0 %v491
    %4581 = vmatpush1.msra.mxu0 %v490
    %4582 = vmatprep.subr.mxu0 %v495
    %4583 = vmatpush1.msra.mxu0 %v494
    %4584 = vmatprep.subr.mxu0 %v499
    %4585 = vmatpush1.msra.mxu0 %v498
    %4586 = vmatprep.subr.mxu0 %v503
    %4587 = vmatpush1.msra.mxu0 %v502
    %4588 = vmatprep.subr.mxu0 %v507
    %4589 = vmatpush1.msra.mxu0 %v506
    %4590 = vmatprep.subr.mxu0 %v511
    %4591 = vmatpush1.msra.mxu0 %v510
    %4592 = vmatprep.subr.mxu0 %v515
    %4593 = vmatpush1.msra.mxu0 %v514
    %4594 = vmatprep.subr.mxu0 %v519
    %4595 = vmatpush1.msra.mxu0 %v518
    %4596 = vmatprep.subr.mxu0 %v523
    %4597 = vmatpush1.msra.mxu0 %v522
    %4598 = vmatprep.subr.mxu0 %v527
    %4599 = vmatpush1.msra.mxu0 %v526
    %4600 = vmatprep.subr.mxu0 %v531
    %4601 = vmatpush1.msra.mxu0 %v530
    %4602 = vmatprep.subr.mxu0 %v535
    %4603 = vmatpush1.msra.mxu0 %v534
    %4604 = vmatprep.subr.mxu0 %v539
    %4605 = vmatpush1.msra.mxu0 %v538
    %4606 = vmatprep.subr.mxu0 %v543
    %4607 = vmatpush1.msra.mxu0 %v542
    %4608 = vmatprep.subr.mxu0 %v547
    %4609 = vmatpush1.msra.mxu0 %v546
    %4610 = vmatprep.subr.mxu0 %v551
    %4611 = vmatpush1.msra.mxu0 %v550
    %4612 = vmatprep.subr.mxu0 %v555
    %4613 = vmatpush1.msra.mxu0 %v554
    %4614 = vmatprep.subr.mxu0 %v559
    %4615 = vmatpush1.msra.mxu0 %v558
    %4616 = vmatprep.subr.mxu0 %v563
    %4617 = vmatpush1.msra.mxu0 %v562
    %4618 = vmatprep.subr.mxu0 %v567
    %4619 = vmatpush1.msra.mxu0 %v566
    %4620 = vmatprep.subr.mxu0 %v571
    %4621 = vmatpush1.msra.mxu0 %v570
    %4622 = vmatprep.subr.mxu0 %v575
    %4623 = vmatpush1.msra.mxu0 %v574
    %4624 = vmatprep.subr.mxu0 %v579
    %4625 = vmatpush1.msra.mxu0 %v578
    %4626 = vmatprep.subr.mxu0 %v583
    %4627 = vmatpush1.msra.mxu0 %v582
    %4628 = vmatprep.subr.mxu0 %v587
    %4629 = vmatpush1.msra.mxu0 %v586
    %4630 = vmatprep.subr.mxu0 %v591
    %4631 = vmatpush1.msra.mxu0 %v590
    %4632 = vmatprep.mubr.f32.mxu0 %v4354
    %4633 = vmatmul.mubr.f32.gmra.mrb[0].mxu0 %v4353
    %v4634 = vpop.f32.mrb[0].mxu0
    %v4635 = vadd.f32 %v4564, %v4634
    %v4636 = vpop.f32.mrb[0].mxu0
    %v4637 = vadd.f32 %v4566, %v4636
    %4638 = vdwg.mxu0
    %v4639 = vtanh.pop %v4493
    %v4640 = vtanh.pop %v4495
    %v4641 = vtanh.pop %v4635
    %v4642 = vtanh.pop %v4637
    %4643 = vmatprep.subr.mxu0 %v337
    %4644 = vmatpush1.msra.mxu0 %v336
    %4645 = vmatprep.subr.mxu0 %v341
    %4646 = vmatpush1.msra.mxu0 %v340
    %4647 = vmatprep.subr.mxu0 %v345
    %4648 = vmatpush1.msra.mxu0 %v344
    %4649 = vmatprep.subr.mxu0 %v349
    %4650 = vmatpush1.msra.mxu0 %v348
    %4651 = vmatprep.subr.mxu0 %v353
    %4652 = vmatpush1.msra.mxu0 %v352
    %4653 = vmatprep.subr.mxu0 %v357
    %4654 = vmatpush1.msra.mxu0 %v356
    %4655 = vmatprep.subr.mxu0 %v361
    %4656 = vmatpush1.msra.mxu0 %v360
    %4657 = vmatprep.subr.mxu0 %v365
    %4658 = vmatpush1.msra.mxu0 %v364
    %4659 = vmatprep.subr.mxu0 %v369
    %4660 = vmatpush1.msra.mxu0 %v368
    %4661 = vmatprep.subr.mxu0 %v373
    %4662 = vmatpush1.msra.mxu0 %v372
    %4663 = vmatprep.subr.mxu0 %v377
    %4664 = vmatpush1.msra.mxu0 %v376
    %4665 = vmatprep.subr.mxu0 %v381
    %4666 = vmatpush1.msra.mxu0 %v380
    %4667 = vmatprep.subr.mxu0 %v385
    %4668 = vmatpush1.msra.mxu0 %v384
    %4669 = vmatprep.subr.mxu0 %v389
    %4670 = vmatpush1.msra.mxu0 %v388
    %4671 = vmatprep.subr.mxu0 %v393
    %4672 = vmatpush1.msra.mxu0 %v392
    %4673 = vmatprep.subr.mxu0 %v397
    %4674 = vmatpush1.msra.mxu0 %v396
    %4675 = vmatprep.subr.mxu0 %v401
    %4676 = vmatpush1.msra.mxu0 %v400
    %4677 = vmatprep.subr.mxu0 %v405
    %4678 = vmatpush1.msra.mxu0 %v404
    %4679 = vmatprep.subr.mxu0 %v409
    %4680 = vmatpush1.msra.mxu0 %v408
    %4681 = vmatprep.subr.mxu0 %v413
    %4682 = vmatpush1.msra.mxu0 %v412
    %4683 = vmatprep.subr.mxu0 %v417
    %4684 = vmatpush1.msra.mxu0 %v416
    %4685 = vmatprep.subr.mxu0 %v421
    %4686 = vmatpush1.msra.mxu0 %v420
    %4687 = vmatprep.subr.mxu0 %v425
    %4688 = vmatpush1.msra.mxu0 %v424
    %4689 = vmatprep.subr.mxu0 %v429
    %4690 = vmatpush1.msra.mxu0 %v428
    %4691 = vmatprep.subr.mxu0 %v433
    %4692 = vmatpush1.msra.mxu0 %v432
    %4693 = vmatprep.subr.mxu0 %v437
    %4694 = vmatpush1.msra.mxu0 %v436
    %4695 = vmatprep.subr.mxu0 %v441
    %4696 = vmatpush1.msra.mxu0 %v440
    %4697 = vmatprep.subr.mxu0 %v445
    %4698 = vmatpush1.msra.mxu0 %v444
    %4699 = vmatprep.subr.mxu0 %v449
    %4700 = vmatpush1.msra.mxu0 %v448
    %4701 = vmatprep.subr.mxu0 %v453
    %4702 = vmatpush1.msra.mxu0 %v452
    %4703 = vmatprep.subr.mxu0 %v457
    %4704 = vmatpush1.msra.mxu0 %v456
    %4705 = vmatprep.subr.mxu0 %v461
    %4706 = vmatpush1.msra.mxu0 %v460
    %4707 = vmatprep.mubr.f32.mxu0 %v4640
    %4708 = vmatmul.mubr.f32.gmra.mrb[0].mxu0 %v4639
    %v4709 = vpop.f32.mrb[0].mxu0
    %v4710 = vadd.f32 %v606, %v4709
    %v4711 = vpop.f32.mrb[0].mxu0
    %v4712 = vadd.f32 %v610, %v4711
    %4713 = vdwg.mxu0
    %4714 = vmatprep.subr.mxu0 %v465
    %4715 = vmatpush1.msra.mxu0 %v464
    %4716 = vmatprep.subr.mxu0 %v469
    %4717 = vmatpush1.msra.mxu0 %v468
    %4718 = vmatprep.subr.mxu0 %v473
    %4719 = vmatpush1.msra.mxu0 %v472
    %4720 = vmatprep.subr.mxu0 %v477
    %4721 = vmatpush1.msra.mxu0 %v476
    %4722 = vmatprep.subr.mxu0 %v481
    %4723 = vmatpush1.msra.mxu0 %v480
    %4724 = vmatprep.subr.mxu0 %v485
    %4725 = vmatpush1.msra.mxu0 %v484
    %4726 = vmatprep.subr.mxu0 %v489
    %4727 = vmatpush1.msra.mxu0 %v488
    %4728 = vmatprep.subr.mxu0 %v493
    %4729 = vmatpush1.msra.mxu0 %v492
    %4730 = vmatprep.subr.mxu0 %v497
    %4731 = vmatpush1.msra.mxu0 %v496
    %4732 = vmatprep.subr.mxu0 %v501
    %4733 = vmatpush1.msra.mxu0 %v500
    %4734 = vmatprep.subr.mxu0 %v505
    %4735 = vmatpush1.msra.mxu0 %v504
    %4736 = vmatprep.subr.mxu0 %v509
    %4737 = vmatpush1.msra.mxu0 %v508
    %4738 = vmatprep.subr.mxu0 %v513
    %4739 = vmatpush1.msra.mxu0 %v512
    %4740 = vmatprep.subr.mxu0 %v517
    %4741 = vmatpush1.msra.mxu0 %v516
    %4742 = vmatprep.subr.mxu0 %v521
    %4743 = vmatpush1.msra.mxu0 %v520
    %4744 = vmatprep.subr.mxu0 %v525
    %4745 = vmatpush1.msra.mxu0 %v524
    %4746 = vmatprep.subr.mxu0 %v529
    %4747 = vmatpush1.msra.mxu0 %v528
    %4748 = vmatprep.subr.mxu0 %v533
    %4749 = vmatpush1.msra.mxu0 %v532
    %4750 = vmatprep.subr.mxu0 %v537
    %4751 = vmatpush1.msra.mxu0 %v536
    %4752 = vmatprep.subr.mxu0 %v541
    %4753 = vmatpush1.msra.mxu0 %v540
    %4754 = vmatprep.subr.mxu0 %v545
    %4755 = vmatpush1.msra.mxu0 %v544
    %4756 = vmatprep.subr.mxu0 %v549
    %4757 = vmatpush1.msra.mxu0 %v548
    %4758 = vmatprep.subr.mxu0 %v553
    %4759 = vmatpush1.msra.mxu0 %v552
    %4760 = vmatprep.subr.mxu0 %v557
    %4761 = vmatpush1.msra.mxu0 %v556
    %4762 = vmatprep.subr.mxu0 %v561
    %4763 = vmatpush1.msra.mxu0 %v560
    %4764 = vmatprep.subr.mxu0 %v565
    %4765 = vmatpush1.msra.mxu0 %v564
    %4766 = vmatprep.subr.mxu0 %v569
    %4767 = vmatpush1.msra.mxu0 %v568
    %4768 = vmatprep.subr.mxu0 %v573
    %4769 = vmatpush1.msra.mxu0 %v572
    %4770 = vmatprep.subr.mxu0 %v577
    %4771 = vmatpush1.msra.mxu0 %v576
    %4772 = vmatprep.subr.mxu0 %v581
    %4773 = vmatpush1.msra.mxu0 %v580
    %4774 = vmatprep.subr.mxu0 %v585
    %4775 = vmatpush1.msra.mxu0 %v584
    %4776 = vmatprep.subr.mxu0 %v589
    %4777 = vmatpush1.msra.mxu0 %v588
    %4778 = vmatprep.mubr.f32.mxu0 %v4642
    %4779 = vmatmul.mubr.f32.gmra.mrb[0].mxu0 %v4641
    %v4780 = vpop.f32.mrb[0].mxu0
    %v4781 = vadd.f32 %v4710, %v4780
    %v4782 = vpop.f32.mrb[0].mxu0
    %v4783 = vadd.f32 %v4712, %v4782
    %4784 = vdwg.mxu0
    %4785 = vmatprep.subr.mxu0 %v339
    %4786 = vmatpush1.msra.mxu0 %v338
    %4787 = vmatprep.subr.mxu0 %v343
    %4788 = vmatpush1.msra.mxu0 %v342
    %4789 = vmatprep.subr.mxu0 %v347
    %4790 = vmatpush1.msra.mxu0 %v346
    %4791 = vmatprep.subr.mxu0 %v351
    %4792 = vmatpush1.msra.mxu0 %v350
    %4793 = vmatprep.subr.mxu0 %v355
    %4794 = vmatpush1.msra.mxu0 %v354
    %4795 = vmatprep.subr.mxu0 %v359
    %4796 = vmatpush1.msra.mxu0 %v358
    %4797 = vmatprep.subr.mxu0 %v363
    %4798 = vmatpush1.msra.mxu0 %v362
    %4799 = vmatprep.subr.mxu0 %v367
    %4800 = vmatpush1.msra.mxu0 %v366
    %4801 = vmatprep.subr.mxu0 %v371
    %4802 = vmatpush1.msra.mxu0 %v370
    %4803 = vmatprep.subr.mxu0 %v375
    %4804 = vmatpush1.msra.mxu0 %v374
    %4805 = vmatprep.subr.mxu0 %v379
    %4806 = vmatpush1.msra.mxu0 %v378
    %4807 = vmatprep.subr.mxu0 %v383
    %4808 = vmatpush1.msra.mxu0 %v382
    %4809 = vmatprep.subr.mxu0 %v387
    %4810 = vmatpush1.msra.mxu0 %v386
    %4811 = vmatprep.subr.mxu0 %v391
    %4812 = vmatpush1.msra.mxu0 %v390
    %4813 = vmatprep.subr.mxu0 %v395
    %4814 = vmatpush1.msra.mxu0 %v394
    %4815 = vmatprep.subr.mxu0 %v399
    %4816 = vmatpush1.msra.mxu0 %v398
    %4817 = vmatprep.subr.mxu0 %v403
    %4818 = vmatpush1.msra.mxu0 %v402
    %4819 = vmatprep.subr.mxu0 %v407
    %4820 = vmatpush1.msra.mxu0 %v406
    %4821 = vmatprep.subr.mxu0 %v411
    %4822 = vmatpush1.msra.mxu0 %v410
    %4823 = vmatprep.subr.mxu0 %v415
    %4824 = vmatpush1.msra.mxu0 %v414
    %4825 = vmatprep.subr.mxu0 %v419
    %4826 = vmatpush1.msra.mxu0 %v418
    %4827 = vmatprep.subr.mxu0 %v423
    %4828 = vmatpush1.msra.mxu0 %v422
    %4829 = vmatprep.subr.mxu0 %v427
    %4830 = vmatpush1.msra.mxu0 %v426
    %4831 = vmatprep.subr.mxu0 %v431
    %4832 = vmatpush1.msra.mxu0 %v430
    %4833 = vmatprep.subr.mxu0 %v435
    %4834 = vmatpush1.msra.mxu0 %v434
    %4835 = vmatprep.subr.mxu0 %v439
    %4836 = vmatpush1.msra.mxu0 %v438
    %4837 = vmatprep.subr.mxu0 %v443
    %4838 = vmatpush1.msra.mxu0 %v442
    %4839 = vmatprep.subr.mxu0 %v447
    %4840 = vmatpush1.msra.mxu0 %v446
    %4841 = vmatprep.subr.mxu0 %v451
    %4842 = vmatpush1.msra.mxu0 %v450
    %4843 = vmatprep.subr.mxu0 %v455
    %4844 = vmatpush1.msra.mxu0 %v454
    %4845 = vmatprep.subr.mxu0 %v459
    %4846 = vmatpush1.msra.mxu0 %v458
    %4847 = vmatprep.subr.mxu0 %v463
    %4848 = vmatpush1.msra.mxu0 %v462
    %4849 = vmatprep.mubr.f32.mxu0 %v4640
    %4850 = vmatmul.mubr.f32.gmra.mrb[0].mxu0 %v4639
    %v4851 = vpop.f32.mrb[0].mxu0
    %v4852 = vadd.f32 %v614, %v4851
    %v4853 = vpop.f32.mrb[0].mxu0
    %v4854 = vadd.f32 %v618, %v4853
    %4855 = vdwg.mxu0
    %4856 = vmatprep.subr.mxu0 %v467
    %4857 = vmatpush1.msra.mxu0 %v466
    %4858 = vmatprep.subr.mxu0 %v471
    %4859 = vmatpush1.msra.mxu0 %v470
    %4860 = vmatprep.subr.mxu0 %v475
    %4861 = vmatpush1.msra.mxu0 %v474
    %4862 = vmatprep.subr.mxu0 %v479
    %4863 = vmatpush1.msra.mxu0 %v478
    %4864 = vmatprep.subr.mxu0 %v483
    %4865 = vmatpush1.msra.mxu0 %v482
    %4866 = vmatprep.subr.mxu0 %v487
    %4867 = vmatpush1.msra.mxu0 %v486
    %4868 = vmatprep.subr.mxu0 %v491
    %4869 = vmatpush1.msra.mxu0 %v490
    %4870 = vmatprep.subr.mxu0 %v495
    %4871 = vmatpush1.msra.mxu0 %v494
    %4872 = vmatprep.subr.mxu0 %v499
    %4873 = vmatpush1.msra.mxu0 %v498
    %4874 = vmatprep.subr.mxu0 %v503
    %4875 = vmatpush1.msra.mxu0 %v502
    %4876 = vmatprep.subr.mxu0 %v507
    %4877 = vmatpush1.msra.mxu0 %v506
    %4878 = vmatprep.subr.mxu0 %v511
    %4879 = vmatpush1.msra.mxu0 %v510
    %4880 = vmatprep.subr.mxu0 %v515
    %4881 = vmatpush1.msra.mxu0 %v514
    %4882 = vmatprep.subr.mxu0 %v519
    %4883 = vmatpush1.msra.mxu0 %v518
    %4884 = vmatprep.subr.mxu0 %v523
    %4885 = vmatpush1.msra.mxu0 %v522
    %4886 = vmatprep.subr.mxu0 %v527
    %4887 = vmatpush1.msra.mxu0 %v526
    %4888 = vmatprep.subr.mxu0 %v531
    %4889 = vmatpush1.msra.mxu0 %v530
    %4890 = vmatprep.subr.mxu0 %v535
    %4891 = vmatpush1.msra.mxu0 %v534
    %4892 = vmatprep.subr.mxu0 %v539
    %4893 = vmatpush1.msra.mxu0 %v538
    %4894 = vmatprep.subr.mxu0 %v543
    %4895 = vmatpush1.msra.mxu0 %v542
    %4896 = vmatprep.subr.mxu0 %v547
    %4897 = vmatpush1.msra.mxu0 %v546
    %4898 = vmatprep.subr.mxu0 %v551
    %4899 = vmatpush1.msra.mxu0 %v550
    %4900 = vmatprep.subr.mxu0 %v555
    %4901 = vmatpush1.msra.mxu0 %v554
    %4902 = vmatprep.subr.mxu0 %v559
    %4903 = vmatpush1.msra.mxu0 %v558
    %4904 = vmatprep.subr.mxu0 %v563
    %4905 = vmatpush1.msra.mxu0 %v562
    %4906 = vmatprep.subr.mxu0 %v567
    %4907 = vmatpush1.msra.mxu0 %v566
    %4908 = vmatprep.subr.mxu0 %v571
    %4909 = vmatpush1.msra.mxu0 %v570
    %4910 = vmatprep.subr.mxu0 %v575
    %4911 = vmatpush1.msra.mxu0 %v574
    %4912 = vmatprep.subr.mxu0 %v579
    %4913 = vmatpush1.msra.mxu0 %v578
    %4914 = vmatprep.subr.mxu0 %v583
    %4915 = vmatpush1.msra.mxu0 %v582
    %4916 = vmatprep.subr.mxu0 %v587
    %4917 = vmatpush1.msra.mxu0 %v586
    %4918 = vmatprep.subr.mxu0 %v591
    %4919 = vmatpush1.msra.mxu0 %v590
    %4920 = vmatprep.mubr.f32.mxu0 %v4642
    %4921 = vmatmul.mubr.f32.gmra.mrb[0].mxu0 %v4641
    %v4922 = vpop.f32.mrb[0].mxu0
    %v4923 = vadd.f32 %v4852, %v4922
    %v4924 = vpop.f32.mrb[0].mxu0
    %v4925 = vadd.f32 %v4854, %v4924
    %4926 = vdwg.mxu0
    %v4927 = vtanh.pop %v4781
    %v4928 = vtanh.pop %v4783
    %v4929 = vtanh.pop %v4923
    %v4930 = vtanh.pop %v4925
    %4931 = vmatprep.subr.mxu0 %v337
    %4932 = vmatpush1.msra.mxu0 %v336
    %4933 = vmatprep.subr.mxu0 %v341
    %4934 = vmatpush1.msra.mxu0 %v340
    %4935 = vmatprep.subr.mxu0 %v345
    %4936 = vmatpush1.msra.mxu0 %v344
    %4937 = vmatprep.subr.mxu0 %v349
    %4938 = vmatpush1.msra.mxu0 %v348
    %4939 = vmatprep.subr.mxu0 %v353
    %4940 = vmatpush1.msra.mxu0 %v352
    %4941 = vmatprep.subr.mxu0 %v357
    %4942 = vmatpush1.msra.mxu0 %v356
    %4943 = vmatprep.subr.mxu0 %v361
    %4944 = vmatpush1.msra.mxu0 %v360
    %4945 = vmatprep.subr.mxu0 %v365
    %4946 = vmatpush1.msra.mxu0 %v364
    %4947 = vmatprep.subr.mxu0 %v369
    %4948 = vmatpush1.msra.mxu0 %v368
    %4949 = vmatprep.subr.mxu0 %v373
    %4950 = vmatpush1.msra.mxu0 %v372
    %4951 = vmatprep.subr.mxu0 %v377
    %4952 = vmatpush1.msra.mxu0 %v376
    %4953 = vmatprep.subr.mxu0 %v381
    %4954 = vmatpush1.msra.mxu0 %v380
    %4955 = vmatprep.subr.mxu0 %v385
    %4956 = vmatpush1.msra.mxu0 %v384
    %4957 = vmatprep.subr.mxu0 %v389
    %4958 = vmatpush1.msra.mxu0 %v388
    %4959 = vmatprep.subr.mxu0 %v393
    %4960 = vmatpush1.msra.mxu0 %v392
    %4961 = vmatprep.subr.mxu0 %v397
    %4962 = vmatpush1.msra.mxu0 %v396
    %4963 = vmatprep.subr.mxu0 %v401
    %4964 = vmatpush1.msra.mxu0 %v400
    %4965 = vmatprep.subr.mxu0 %v405
    %4966 = vmatpush1.msra.mxu0 %v404
    %4967 = vmatprep.subr.mxu0 %v409
    %4968 = vmatpush1.msra.mxu0 %v408
    %4969 = vmatprep.subr.mxu0 %v413
    %4970 = vmatpush1.msra.mxu0 %v412
    %4971 = vmatprep.subr.mxu0 %v417
    %4972 = vmatpush1.msra.mxu0 %v416
    %4973 = vmatprep.subr.mxu0 %v421
    %4974 = vmatpush1.msra.mxu0 %v420
    %4975 = vmatprep.subr.mxu0 %v425
    %4976 = vmatpush1.msra.mxu0 %v424
    %4977 = vmatprep.subr.mxu0 %v429
    %4978 = vmatpush1.msra.mxu0 %v428
    %4979 = vmatprep.subr.mxu0 %v433
    %4980 = vmatpush1.msra.mxu0 %v432
    %4981 = vmatprep.subr.mxu0 %v437
    %4982 = vmatpush1.msra.mxu0 %v436
    %4983 = vmatprep.subr.mxu0 %v441
    %4984 = vmatpush1.msra.mxu0 %v440
    %4985 = vmatprep.subr.mxu0 %v445
    %4986 = vmatpush1.msra.mxu0 %v444
    %4987 = vmatprep.subr.mxu0 %v449
    %4988 = vmatpush1.msra.mxu0 %v448
    %4989 = vmatprep.subr.mxu0 %v453
    %4990 = vmatpush1.msra.mxu0 %v452
    %4991 = vmatprep.subr.mxu0 %v457
    %4992 = vmatpush1.msra.mxu0 %v456
    %4993 = vmatprep.subr.mxu0 %v461
    %4994 = vmatpush1.msra.mxu0 %v460
    %4995 = vmatprep.mubr.f32.mxu0 %v4928
    %4996 = vmatmul.mubr.f32.gmra.mrb[0].mxu0 %v4927
    %v4997 = vpop.f32.mrb[0].mxu0
    %v4998 = vadd.f32 %v606, %v4997
    %v4999 = vpop.f32.mrb[0].mxu0
    %v5000 = vadd.f32 %v610, %v4999
    %5001 = vdwg.mxu0
    %5002 = vmatprep.subr.mxu0 %v465
    %5003 = vmatpush1.msra.mxu0 %v464
    %5004 = vmatprep.subr.mxu0 %v469
    %5005 = vmatpush1.msra.mxu0 %v468
    %5006 = vmatprep.subr.mxu0 %v473
    %5007 = vmatpush1.msra.mxu0 %v472
    %5008 = vmatprep.subr.mxu0 %v477
    %5009 = vmatpush1.msra.mxu0 %v476
    %5010 = vmatprep.subr.mxu0 %v481
    %5011 = vmatpush1.msra.mxu0 %v480
    %5012 = vmatprep.subr.mxu0 %v485
    %5013 = vmatpush1.msra.mxu0 %v484
    %5014 = vmatprep.subr.mxu0 %v489
    %5015 = vmatpush1.msra.mxu0 %v488
    %5016 = vmatprep.subr.mxu0 %v493
    %5017 = vmatpush1.msra.mxu0 %v492
    %5018 = vmatprep.subr.mxu0 %v497
    %5019 = vmatpush1.msra.mxu0 %v496
    %5020 = vmatprep.subr.mxu0 %v501
    %5021 = vmatpush1.msra.mxu0 %v500
    %5022 = vmatprep.subr.mxu0 %v505
    %5023 = vmatpush1.msra.mxu0 %v504
    %5024 = vmatprep.subr.mxu0 %v509
    %5025 = vmatpush1.msra.mxu0 %v508
    %5026 = vmatprep.subr.mxu0 %v513
    %5027 = vmatpush1.msra.mxu0 %v512
    %5028 = vmatprep.subr.mxu0 %v517
    %5029 = vmatpush1.msra.mxu0 %v516
    %5030 = vmatprep.subr.mxu0 %v521
    %5031 = vmatpush1.msra.mxu0 %v520
    %5032 = vmatprep.subr.mxu0 %v525
    %5033 = vmatpush1.msra.mxu0 %v524
    %5034 = vmatprep.subr.mxu0 %v529
    %5035 = vmatpush1.msra.mxu0 %v528
    %5036 = vmatprep.subr.mxu0 %v533
    %5037 = vmatpush1.msra.mxu0 %v532
    %5038 = vmatprep.subr.mxu0 %v537
    %5039 = vmatpush1.msra.mxu0 %v536
    %5040 = vmatprep.subr.mxu0 %v541
    %5041 = vmatpush1.msra.mxu0 %v540
    %5042 = vmatprep.subr.mxu0 %v545
    %5043 = vmatpush1.msra.mxu0 %v544
    %5044 = vmatprep.subr.mxu0 %v549
    %5045 = vmatpush1.msra.mxu0 %v548
    %5046 = vmatprep.subr.mxu0 %v553
    %5047 = vmatpush1.msra.mxu0 %v552
    %5048 = vmatprep.subr.mxu0 %v557
    %5049 = vmatpush1.msra.mxu0 %v556
    %5050 = vmatprep.subr.mxu0 %v561
    %5051 = vmatpush1.msra.mxu0 %v560
    %5052 = vmatprep.subr.mxu0 %v565
    %5053 = vmatpush1.msra.mxu0 %v564
    %5054 = vmatprep.subr.mxu0 %v569
    %5055 = vmatpush1.msra.mxu0 %v568
    %5056 = vmatprep.subr.mxu0 %v573
    %5057 = vmatpush1.msra.mxu0 %v572
    %5058 = vmatprep.subr.mxu0 %v577
    %5059 = vmatpush1.msra.mxu0 %v576
    %5060 = vmatprep.subr.mxu0 %v581
    %5061 = vmatpush1.msra.mxu0 %v580
    %5062 = vmatprep.subr.mxu0 %v585
    %5063 = vmatpush1.msra.mxu0 %v584
    %5064 = vmatprep.subr.mxu0 %v589
    %5065 = vmatpush1.msra.mxu0 %v588
    %5066 = vmatprep.mubr.f32.mxu0 %v4930
    %5067 = vmatmul.mubr.f32.gmra.mrb[0].mxu0 %v4929
    %v5068 = vpop.f32.mrb[0].mxu0
    %v5069 = vadd.f32 %v4998, %v5068
    %v5070 = vpop.f32.mrb[0].mxu0
    %v5071 = vadd.f32 %v5000, %v5070
    %5072 = vdwg.mxu0
    %5073 = vmatprep.subr.mxu0 %v339
    %5074 = vmatpush1.msra.mxu0 %v338
    %5075 = vmatprep.subr.mxu0 %v343
    %5076 = vmatpush1.msra.mxu0 %v342
    %5077 = vmatprep.subr.mxu0 %v347
    %5078 = vmatpush1.msra.mxu0 %v346
    %5079 = vmatprep.subr.mxu0 %v351
    %5080 = vmatpush1.msra.mxu0 %v350
    %5081 = vmatprep.subr.mxu0 %v355
    %5082 = vmatpush1.msra.mxu0 %v354
    %5083 = vmatprep.subr.mxu0 %v359
    %5084 = vmatpush1.msra.mxu0 %v358
    %5085 = vmatprep.subr.mxu0 %v363
    %5086 = vmatpush1.msra.mxu0 %v362
    %5087 = vmatprep.subr.mxu0 %v367
    %5088 = vmatpush1.msra.mxu0 %v366
    %5089 = vmatprep.subr.mxu0 %v371
    %5090 = vmatpush1.msra.mxu0 %v370
    %5091 = vmatprep.subr.mxu0 %v375
    %5092 = vmatpush1.msra.mxu0 %v374
    %5093 = vmatprep.subr.mxu0 %v379
    %5094 = vmatpush1.msra.mxu0 %v378
    %5095 = vmatprep.subr.mxu0 %v383
    %5096 = vmatpush1.msra.mxu0 %v382
    %5097 = vmatprep.subr.mxu0 %v387
    %5098 = vmatpush1.msra.mxu0 %v386
    %5099 = vmatprep.subr.mxu0 %v391
    %5100 = vmatpush1.msra.mxu0 %v390
    %5101 = vmatprep.subr.mxu0 %v395
    %5102 = vmatpush1.msra.mxu0 %v394
    %5103 = vmatprep.subr.mxu0 %v399
    %5104 = vmatpush1.msra.mxu0 %v398
    %5105 = vmatprep.subr.mxu0 %v403
    %5106 = vmatpush1.msra.mxu0 %v402
    %5107 = vmatprep.subr.mxu0 %v407
    %5108 = vmatpush1.msra.mxu0 %v406
    %5109 = vmatprep.subr.mxu0 %v411
    %5110 = vmatpush1.msra.mxu0 %v410
    %5111 = vmatprep.subr.mxu0 %v415
    %5112 = vmatpush1.msra.mxu0 %v414
    %5113 = vmatprep.subr.mxu0 %v419
    %5114 = vmatpush1.msra.mxu0 %v418
    %5115 = vmatprep.subr.mxu0 %v423
    %5116 = vmatpush1.msra.mxu0 %v422
    %5117 = vmatprep.subr.mxu0 %v427
    %5118 = vmatpush1.msra.mxu0 %v426
    %5119 = vmatprep.subr.mxu0 %v431
    %5120 = vmatpush1.msra.mxu0 %v430
    %5121 = vmatprep.subr.mxu0 %v435
    %5122 = vmatpush1.msra.mxu0 %v434
    %5123 = vmatprep.subr.mxu0 %v439
    %5124 = vmatpush1.msra.mxu0 %v438
    %5125 = vmatprep.subr.mxu0 %v443
    %5126 = vmatpush1.msra.mxu0 %v442
    %5127 = vmatprep.subr.mxu0 %v447
    %5128 = vmatpush1.msra.mxu0 %v446
    %5129 = vmatprep.subr.mxu0 %v451
    %5130 = vmatpush1.msra.mxu0 %v450
    %5131 = vmatprep.subr.mxu0 %v455
    %5132 = vmatpush1.msra.mxu0 %v454
    %5133 = vmatprep.subr.mxu0 %v459
    %5134 = vmatpush1.msra.mxu0 %v458
    %5135 = vmatprep.subr.mxu0 %v463
    %5136 = vmatpush1.msra.mxu0 %v462
    %5137 = vmatprep.mubr.f32.mxu0 %v4928
    %5138 = vmatmul.mubr.f32.gmra.mrb[0].mxu0 %v4927
    %v5139 = vpop.f32.mrb[0].mxu0
    %v5140 = vadd.f32 %v614, %v5139
    %v5141 = vpop.f32.mrb[0].mxu0
    %v5142 = vadd.f32 %v618, %v5141
    %5143 = vdwg.mxu0
    %5144 = vmatprep.subr.mxu0 %v467
    %5145 = vmatpush1.msra.mxu0 %v466
    %5146 = vmatprep.subr.mxu0 %v471
    %5147 = vmatpush1.msra.mxu0 %v470
    %5148 = vmatprep.subr.mxu0 %v475
    %5149 = vmatpush1.msra.mxu0 %v474
    %5150 = vmatprep.subr.mxu0 %v479
    %5151 = vmatpush1.msra.mxu0 %v478
    %5152 = vmatprep.subr.mxu0 %v483
    %5153 = vmatpush1.msra.mxu0 %v482
    %5154 = vmatprep.subr.mxu0 %v487
    %5155 = vmatpush1.msra.mxu0 %v486
    %5156 = vmatprep.subr.mxu0 %v491
    %5157 = vmatpush1.msra.mxu0 %v490
    %5158 = vmatprep.subr.mxu0 %v495
    %5159 = vmatpush1.msra.mxu0 %v494
    %5160 = vmatprep.subr.mxu0 %v499
    %5161 = vmatpush1.msra.mxu0 %v498
    %5162 = vmatprep.subr.mxu0 %v503
    %5163 = vmatpush1.msra.mxu0 %v502
    %5164 = vmatprep.subr.mxu0 %v507
    %5165 = vmatpush1.msra.mxu0 %v506
    %5166 = vmatprep.subr.mxu0 %v511
    %5167 = vmatpush1.msra.mxu0 %v510
    %5168 = vmatprep.subr.mxu0 %v515
    %5169 = vmatpush1.msra.mxu0 %v514
    %5170 = vmatprep.subr.mxu0 %v519
    %5171 = vmatpush1.msra.mxu0 %v518
    %5172 = vmatprep.subr.mxu0 %v523
    %5173 = vmatpush1.msra.mxu0 %v522
    %5174 = vmatprep.subr.mxu0 %v527
    %5175 = vmatpush1.msra.mxu0 %v526
    %5176 = vmatprep.subr.mxu0 %v531
    %5177 = vmatpush1.msra.mxu0 %v530
    %5178 = vmatprep.subr.mxu0 %v535
    %5179 = vmatpush1.msra.mxu0 %v534
    %5180 = vmatprep.subr.mxu0 %v539
    %5181 = vmatpush1.msra.mxu0 %v538
    %5182 = vmatprep.subr.mxu0 %v543
    %5183 = vmatpush1.msra.mxu0 %v542
    %5184 = vmatprep.subr.mxu0 %v547
    %5185 = vmatpush1.msra.mxu0 %v546
    %5186 = vmatprep.subr.mxu0 %v551
    %5187 = vmatpush1.msra.mxu0 %v550
    %5188 = vmatprep.subr.mxu0 %v555
    %5189 = vmatpush1.msra.mxu0 %v554
    %5190 = vmatprep.subr.mxu0 %v559
    %5191 = vmatpush1.msra.mxu0 %v558
    %5192 = vmatprep.subr.mxu0 %v563
    %5193 = vmatpush1.msra.mxu0 %v562
    %5194 = vmatprep.subr.mxu0 %v567
    %5195 = vmatpush1.msra.mxu0 %v566
    %5196 = vmatprep.subr.mxu0 %v571
    %5197 = vmatpush1.msra.mxu0 %v570
    %5198 = vmatprep.subr.mxu0 %v575
    %5199 = vmatpush1.msra.mxu0 %v574
    %5200 = vmatprep.subr.mxu0 %v579
    %5201 = vmatpush1.msra.mxu0 %v578
    %5202 = vmatprep.subr.mxu0 %v583
    %5203 = vmatpush1.msra.mxu0 %v582
    %5204 = vmatprep.subr.mxu0 %v587
    %5205 = vmatpush1.msra.mxu0 %v586
    %5206 = vmatprep.subr.mxu0 %v591
    %5207 = vmatpush1.msra.mxu0 %v590
    %5208 = vmatprep.mubr.f32.mxu0 %v4930
    %5209 = vmatmul.mubr.f32.gmra.mrb[0].mxu0 %v4929
    %v5210 = vpop.f32.mrb[0].mxu0
    %v5211 = vadd.f32 %v5140, %v5210
    %v5212 = vpop.f32.mrb[0].mxu0
    %v5213 = vadd.f32 %v5142, %v5212
    %5214 = vdwg.mxu0
    %v5215 = vtanh.pop %v5069
    %v5216 = vtanh.pop %v5071
    %v5217 = vtanh.pop %v5211
    %v5218 = vtanh.pop %v5213
    %5219 = vmatprep.subr.mxu0 %v337
    %5220 = vmatpush1.msra.mxu0 %v336
    %5221 = vmatprep.subr.mxu0 %v341
    %5222 = vmatpush1.msra.mxu0 %v340
    %5223 = vmatprep.subr.mxu0 %v345
    %5224 = vmatpush1.msra.mxu0 %v344
    %5225 = vmatprep.subr.mxu0 %v349
    %5226 = vmatpush1.msra.mxu0 %v348
    %5227 = vmatprep.subr.mxu0 %v353
    %5228 = vmatpush1.msra.mxu0 %v352
    %5229 = vmatprep.subr.mxu0 %v357
    %5230 = vmatpush1.msra.mxu0 %v356
    %5231 = vmatprep.subr.mxu0 %v361
    %5232 = vmatpush1.msra.mxu0 %v360
    %5233 = vmatprep.subr.mxu0 %v365
    %5234 = vmatpush1.msra.mxu0 %v364
    %5235 = vmatprep.subr.mxu0 %v369
    %5236 = vmatpush1.msra.mxu0 %v368
    %5237 = vmatprep.subr.mxu0 %v373
    %5238 = vmatpush1.msra.mxu0 %v372
    %5239 = vmatprep.subr.mxu0 %v377
    %5240 = vmatpush1.msra.mxu0 %v376
    %5241 = vmatprep.subr.mxu0 %v381
    %5242 = vmatpush1.msra.mxu0 %v380
    %5243 = vmatprep.subr.mxu0 %v385
    %5244 = vmatpush1.msra.mxu0 %v384
    %5245 = vmatprep.subr.mxu0 %v389
    %5246 = vmatpush1.msra.mxu0 %v388
    %5247 = vmatprep.subr.mxu0 %v393
    %5248 = vmatpush1.msra.mxu0 %v392
    %5249 = vmatprep.subr.mxu0 %v397
    %5250 = vmatpush1.msra.mxu0 %v396
    %5251 = vmatprep.subr.mxu0 %v401
    %5252 = vmatpush1.msra.mxu0 %v400
    %5253 = vmatprep.subr.mxu0 %v405
    %5254 = vmatpush1.msra.mxu0 %v404
    %5255 = vmatprep.subr.mxu0 %v409
    %5256 = vmatpush1.msra.mxu0 %v408
    %5257 = vmatprep.subr.mxu0 %v413
    %5258 = vmatpush1.msra.mxu0 %v412
    %5259 = vmatprep.subr.mxu0 %v417
    %5260 = vmatpush1.msra.mxu0 %v416
    %5261 = vmatprep.subr.mxu0 %v421
    %5262 = vmatpush1.msra.mxu0 %v420
    %5263 = vmatprep.subr.mxu0 %v425
    %5264 = vmatpush1.msra.mxu0 %v424
    %5265 = vmatprep.subr.mxu0 %v429
    %5266 = vmatpush1.msra.mxu0 %v428
    %5267 = vmatprep.subr.mxu0 %v433
    %5268 = vmatpush1.msra.mxu0 %v432
    %5269 = vmatprep.subr.mxu0 %v437
    %5270 = vmatpush1.msra.mxu0 %v436
    %5271 = vmatprep.subr.mxu0 %v441
    %5272 = vmatpush1.msra.mxu0 %v440
    %5273 = vmatprep.subr.mxu0 %v445
    %5274 = vmatpush1.msra.mxu0 %v444
    %5275 = vmatprep.subr.mxu0 %v449
    %5276 = vmatpush1.msra.mxu0 %v448
    %5277 = vmatprep.subr.mxu0 %v453
    %5278 = vmatpush1.msra.mxu0 %v452
    %5279 = vmatprep.subr.mxu0 %v457
    %5280 = vmatpush1.msra.mxu0 %v456
    %5281 = vmatprep.subr.mxu0 %v461
    %5282 = vmatpush1.msra.mxu0 %v460
    %5283 = vmatprep.mubr.f32.mxu0 %v5216
    %5284 = vmatmul.mubr.f32.gmra.mrb[0].mxu0 %v5215
    %v5285 = vpop.f32.mrb[0].mxu0
    %v5286 = vadd.f32 %v606, %v5285
    %v5287 = vpop.f32.mrb[0].mxu0
    %v5288 = vadd.f32 %v610, %v5287
    %5289 = vdwg.mxu0
    %5290 = vmatprep.subr.mxu0 %v465
    %5291 = vmatpush1.msra.mxu0 %v464
    %5292 = vmatprep.subr.mxu0 %v469
    %5293 = vmatpush1.msra.mxu0 %v468
    %5294 = vmatprep.subr.mxu0 %v473
    %5295 = vmatpush1.msra.mxu0 %v472
    %5296 = vmatprep.subr.mxu0 %v477
    %5297 = vmatpush1.msra.mxu0 %v476
    %5298 = vmatprep.subr.mxu0 %v481
    %5299 = vmatpush1.msra.mxu0 %v480
    %5300 = vmatprep.subr.mxu0 %v485
    %5301 = vmatpush1.msra.mxu0 %v484
    %5302 = vmatprep.subr.mxu0 %v489
    %5303 = vmatpush1.msra.mxu0 %v488
    %5304 = vmatprep.subr.mxu0 %v493
    %5305 = vmatpush1.msra.mxu0 %v492
    %5306 = vmatprep.subr.mxu0 %v497
    %5307 = vmatpush1.msra.mxu0 %v496
    %5308 = vmatprep.subr.mxu0 %v501
    %5309 = vmatpush1.msra.mxu0 %v500
    %5310 = vmatprep.subr.mxu0 %v505
    %5311 = vmatpush1.msra.mxu0 %v504
    %5312 = vmatprep.subr.mxu0 %v509
    %5313 = vmatpush1.msra.mxu0 %v508
    %5314 = vmatprep.subr.mxu0 %v513
    %5315 = vmatpush1.msra.mxu0 %v512
    %5316 = vmatprep.subr.mxu0 %v517
    %5317 = vmatpush1.msra.mxu0 %v516
    %5318 = vmatprep.subr.mxu0 %v521
    %5319 = vmatpush1.msra.mxu0 %v520
    %5320 = vmatprep.subr.mxu0 %v525
    %5321 = vmatpush1.msra.mxu0 %v524
    %5322 = vmatprep.subr.mxu0 %v529
    %5323 = vmatpush1.msra.mxu0 %v528
    %5324 = vmatprep.subr.mxu0 %v533
    %5325 = vmatpush1.msra.mxu0 %v532
    %5326 = vmatprep.subr.mxu0 %v537
    %5327 = vmatpush1.msra.mxu0 %v536
    %5328 = vmatprep.subr.mxu0 %v541
    %5329 = vmatpush1.msra.mxu0 %v540
    %5330 = vmatprep.subr.mxu0 %v545
    %5331 = vmatpush1.msra.mxu0 %v544
    %5332 = vmatprep.subr.mxu0 %v549
    %5333 = vmatpush1.msra.mxu0 %v548
    %5334 = vmatprep.subr.mxu0 %v553
    %5335 = vmatpush1.msra.mxu0 %v552
    %5336 = vmatprep.subr.mxu0 %v557
    %5337 = vmatpush1.msra.mxu0 %v556
    %5338 = vmatprep.subr.mxu0 %v561
    %5339 = vmatpush1.msra.mxu0 %v560
    %5340 = vmatprep.subr.mxu0 %v565
    %5341 = vmatpush1.msra.mxu0 %v564
    %5342 = vmatprep.subr.mxu0 %v569
    %5343 = vmatpush1.msra.mxu0 %v568
    %5344 = vmatprep.subr.mxu0 %v573
    %5345 = vmatpush1.msra.mxu0 %v572
    %5346 = vmatprep.subr.mxu0 %v577
    %5347 = vmatpush1.msra.mxu0 %v576
    %5348 = vmatprep.subr.mxu0 %v581
    %5349 = vmatpush1.msra.mxu0 %v580
    %5350 = vmatprep.subr.mxu0 %v585
    %5351 = vmatpush1.msra.mxu0 %v584
    %5352 = vmatprep.subr.mxu0 %v589
    %5353 = vmatpush1.msra.mxu0 %v588
    %5354 = vmatprep.mubr.f32.mxu0 %v5218
    %5355 = vmatmul.mubr.f32.gmra.mrb[0].mxu0 %v5217
    %v5356 = vpop.f32.mrb[0].mxu0
    %v5357 = vadd.f32 %v5286, %v5356
    %v5358 = vpop.f32.mrb[0].mxu0
    %v5359 = vadd.f32 %v5288, %v5358
    %5360 = vdwg.mxu0
    %5361 = vmatprep.subr.mxu0 %v339
    %5362 = vmatpush1.msra.mxu0 %v338
    %5363 = vmatprep.subr.mxu0 %v343
    %5364 = vmatpush1.msra.mxu0 %v342
    %5365 = vmatprep.subr.mxu0 %v347
    %5366 = vmatpush1.msra.mxu0 %v346
    %5367 = vmatprep.subr.mxu0 %v351
    %5368 = vmatpush1.msra.mxu0 %v350
    %5369 = vmatprep.subr.mxu0 %v355
    %5370 = vmatpush1.msra.mxu0 %v354
    %5371 = vmatprep.subr.mxu0 %v359
    %5372 = vmatpush1.msra.mxu0 %v358
    %5373 = vmatprep.subr.mxu0 %v363
    %5374 = vmatpush1.msra.mxu0 %v362
    %5375 = vmatprep.subr.mxu0 %v367
    %5376 = vmatpush1.msra.mxu0 %v366
    %5377 = vmatprep.subr.mxu0 %v371
    %5378 = vmatpush1.msra.mxu0 %v370
    %5379 = vmatprep.subr.mxu0 %v375
    %5380 = vmatpush1.msra.mxu0 %v374
    %5381 = vmatprep.subr.mxu0 %v379
    %5382 = vmatpush1.msra.mxu0 %v378
    %5383 = vmatprep.subr.mxu0 %v383
    %5384 = vmatpush1.msra.mxu0 %v382
    %5385 = vmatprep.subr.mxu0 %v387
    %5386 = vmatpush1.msra.mxu0 %v386
    %5387 = vmatprep.subr.mxu0 %v391
    %5388 = vmatpush1.msra.mxu0 %v390
    %5389 = vmatprep.subr.mxu0 %v395
    %5390 = vmatpush1.msra.mxu0 %v394
    %5391 = vmatprep.subr.mxu0 %v399
    %5392 = vmatpush1.msra.mxu0 %v398
    %5393 = vmatprep.subr.mxu0 %v403
    %5394 = vmatpush1.msra.mxu0 %v402
    %5395 = vmatprep.subr.mxu0 %v407
    %5396 = vmatpush1.msra.mxu0 %v406
    %5397 = vmatprep.subr.mxu0 %v411
    %5398 = vmatpush1.msra.mxu0 %v410
    %5399 = vmatprep.subr.mxu0 %v415
    %5400 = vmatpush1.msra.mxu0 %v414
    %5401 = vmatprep.subr.mxu0 %v419
    %5402 = vmatpush1.msra.mxu0 %v418
    %5403 = vmatprep.subr.mxu0 %v423
    %5404 = vmatpush1.msra.mxu0 %v422
    %5405 = vmatprep.subr.mxu0 %v427
    %5406 = vmatpush1.msra.mxu0 %v426
    %5407 = vmatprep.subr.mxu0 %v431
    %5408 = vmatpush1.msra.mxu0 %v430
    %5409 = vmatprep.subr.mxu0 %v435
    %5410 = vmatpush1.msra.mxu0 %v434
    %5411 = vmatprep.subr.mxu0 %v439
    %5412 = vmatpush1.msra.mxu0 %v438
    %5413 = vmatprep.subr.mxu0 %v443
    %5414 = vmatpush1.msra.mxu0 %v442
    %5415 = vmatprep.subr.mxu0 %v447
    %5416 = vmatpush1.msra.mxu0 %v446
    %5417 = vmatprep.subr.mxu0 %v451
    %5418 = vmatpush1.msra.mxu0 %v450
    %5419 = vmatprep.subr.mxu0 %v455
    %5420 = vmatpush1.msra.mxu0 %v454
    %5421 = vmatprep.subr.mxu0 %v459
    %5422 = vmatpush1.msra.mxu0 %v458
    %5423 = vmatprep.subr.mxu0 %v463
    %5424 = vmatpush1.msra.mxu0 %v462
    %5425 = vmatprep.mubr.f32.mxu0 %v5216
    %5426 = vmatmul.mubr.f32.gmra.mrb[0].mxu0 %v5215
    %v5427 = vpop.f32.mrb[0].mxu0
    %v5428 = vadd.f32 %v614, %v5427
    %v5429 = vpop.f32.mrb[0].mxu0
    %v5430 = vadd.f32 %v618, %v5429
    %5431 = vdwg.mxu0
    %5432 = vmatprep.subr.mxu0 %v467
    %5433 = vmatpush1.msra.mxu0 %v466
    %5434 = vmatprep.subr.mxu0 %v471
    %5435 = vmatpush1.msra.mxu0 %v470
    %5436 = vmatprep.subr.mxu0 %v475
    %5437 = vmatpush1.msra.mxu0 %v474
    %5438 = vmatprep.subr.mxu0 %v479
    %5439 = vmatpush1.msra.mxu0 %v478
    %5440 = vmatprep.subr.mxu0 %v483
    %5441 = vmatpush1.msra.mxu0 %v482
    %5442 = vmatprep.subr.mxu0 %v487
    %5443 = vmatpush1.msra.mxu0 %v486
    %5444 = vmatprep.subr.mxu0 %v491
    %5445 = vmatpush1.msra.mxu0 %v490
    %5446 = vmatprep.subr.mxu0 %v495
    %5447 = vmatpush1.msra.mxu0 %v494
    %5448 = vmatprep.subr.mxu0 %v499
    %5449 = vmatpush1.msra.mxu0 %v498
    %5450 = vmatprep.subr.mxu0 %v503
    %5451 = vmatpush1.msra.mxu0 %v502
    %5452 = vmatprep.subr.mxu0 %v507
    %5453 = vmatpush1.msra.mxu0 %v506
    %5454 = vmatprep.subr.mxu0 %v511
    %5455 = vmatpush1.msra.mxu0 %v510
    %5456 = vmatprep.subr.mxu0 %v515
    %5457 = vmatpush1.msra.mxu0 %v514
    %5458 = vmatprep.subr.mxu0 %v519
    %5459 = vmatpush1.msra.mxu0 %v518
    %5460 = vmatprep.subr.mxu0 %v523
    %5461 = vmatpush1.msra.mxu0 %v522
    %5462 = vmatprep.subr.mxu0 %v527
    %5463 = vmatpush1.msra.mxu0 %v526
    %5464 = vmatprep.subr.mxu0 %v531
    %5465 = vmatpush1.msra.mxu0 %v530
    %5466 = vmatprep.subr.mxu0 %v535
    %5467 = vmatpush1.msra.mxu0 %v534
    %5468 = vmatprep.subr.mxu0 %v539
    %5469 = vmatpush1.msra.mxu0 %v538
    %5470 = vmatprep.subr.mxu0 %v543
    %5471 = vmatpush1.msra.mxu0 %v542
    %5472 = vmatprep.subr.mxu0 %v547
    %5473 = vmatpush1.msra.mxu0 %v546
    %5474 = vmatprep.subr.mxu0 %v551
    %5475 = vmatpush1.msra.mxu0 %v550
    %5476 = vmatprep.subr.mxu0 %v555
    %5477 = vmatpush1.msra.mxu0 %v554
    %5478 = vmatprep.subr.mxu0 %v559
    %5479 = vmatpush1.msra.mxu0 %v558
    %5480 = vmatprep.subr.mxu0 %v563
    %5481 = vmatpush1.msra.mxu0 %v562
    %5482 = vmatprep.subr.mxu0 %v567
    %5483 = vmatpush1.msra.mxu0 %v566
    %5484 = vmatprep.subr.mxu0 %v571
    %5485 = vmatpush1.msra.mxu0 %v570
    %5486 = vmatprep.subr.mxu0 %v575
    %5487 = vmatpush1.msra.mxu0 %v574
    %5488 = vmatprep.subr.mxu0 %v579
    %5489 = vmatpush1.msra.mxu0 %v578
    %5490 = vmatprep.subr.mxu0 %v583
    %5491 = vmatpush1.msra.mxu0 %v582
    %5492 = vmatprep.subr.mxu0 %v587
    %5493 = vmatpush1.msra.mxu0 %v586
    %5494 = vmatprep.subr.mxu0 %v591
    %5495 = vmatpush1.msra.mxu0 %v590
    %5496 = vmatprep.mubr.f32.mxu0 %v5218
    %5497 = vmatmul.mubr.f32.gmra.mrb[0].mxu0 %v5217
    %v5498 = vpop.f32.mrb[0].mxu0
    %v5499 = vadd.f32 %v5428, %v5498
    %v5500 = vpop.f32.mrb[0].mxu0
    %v5501 = vadd.f32 %v5430, %v5500
    %5502 = vdwg.mxu0
    %v5503 = vtanh.pop %v5357
    %v5504 = vtanh.pop %v5359
    %v5505 = vtanh.pop %v5499
    %v5506 = vtanh.pop %v5501
    %5507 = vmatprep.subr.mxu0 %v337
    %5508 = vmatpush1.msra.mxu0 %v336
    %5509 = vmatprep.subr.mxu0 %v341
    %5510 = vmatpush1.msra.mxu0 %v340
    %5511 = vmatprep.subr.mxu0 %v345
    %5512 = vmatpush1.msra.mxu0 %v344
    %5513 = vmatprep.subr.mxu0 %v349
    %5514 = vmatpush1.msra.mxu0 %v348
    %5515 = vmatprep.subr.mxu0 %v353
    %5516 = vmatpush1.msra.mxu0 %v352
    %5517 = vmatprep.subr.mxu0 %v357
    %5518 = vmatpush1.msra.mxu0 %v356
    %5519 = vmatprep.subr.mxu0 %v361
    %5520 = vmatpush1.msra.mxu0 %v360
    %5521 = vmatprep.subr.mxu0 %v365
    %5522 = vmatpush1.msra.mxu0 %v364
    %5523 = vmatprep.subr.mxu0 %v369
    %5524 = vmatpush1.msra.mxu0 %v368
    %5525 = vmatprep.subr.mxu0 %v373
    %5526 = vmatpush1.msra.mxu0 %v372
    %5527 = vmatprep.subr.mxu0 %v377
    %5528 = vmatpush1.msra.mxu0 %v376
    %5529 = vmatprep.subr.mxu0 %v381
    %5530 = vmatpush1.msra.mxu0 %v380
    %5531 = vmatprep.subr.mxu0 %v385
    %5532 = vmatpush1.msra.mxu0 %v384
    %5533 = vmatprep.subr.mxu0 %v389
    %5534 = vmatpush1.msra.mxu0 %v388
    %5535 = vmatprep.subr.mxu0 %v393
    %5536 = vmatpush1.msra.mxu0 %v392
    %5537 = vmatprep.subr.mxu0 %v397
    %5538 = vmatpush1.msra.mxu0 %v396
    %5539 = vmatprep.subr.mxu0 %v401
    %5540 = vmatpush1.msra.mxu0 %v400
    %5541 = vmatprep.subr.mxu0 %v405
    %5542 = vmatpush1.msra.mxu0 %v404
    %5543 = vmatprep.subr.mxu0 %v409
    %5544 = vmatpush1.msra.mxu0 %v408
    %5545 = vmatprep.subr.mxu0 %v413
    %5546 = vmatpush1.msra.mxu0 %v412
    %5547 = vmatprep.subr.mxu0 %v417
    %5548 = vmatpush1.msra.mxu0 %v416
    %5549 = vmatprep.subr.mxu0 %v421
    %5550 = vmatpush1.msra.mxu0 %v420
    %5551 = vmatprep.subr.mxu0 %v425
    %5552 = vmatpush1.msra.mxu0 %v424
    %5553 = vmatprep.subr.mxu0 %v429
    %5554 = vmatpush1.msra.mxu0 %v428
    %5555 = vmatprep.subr.mxu0 %v433
    %5556 = vmatpush1.msra.mxu0 %v432
    %5557 = vmatprep.subr.mxu0 %v437
    %5558 = vmatpush1.msra.mxu0 %v436
    %5559 = vmatprep.subr.mxu0 %v441
    %5560 = vmatpush1.msra.mxu0 %v440
    %5561 = vmatprep.subr.mxu0 %v445
    %5562 = vmatpush1.msra.mxu0 %v444
    %5563 = vmatprep.subr.mxu0 %v449
    %5564 = vmatpush1.msra.mxu0 %v448
    %5565 = vmatprep.subr.mxu0 %v453
    %5566 = vmatpush1.msra.mxu0 %v452
    %5567 = vmatprep.subr.mxu0 %v457
    %5568 = vmatpush1.msra.mxu0 %v456
    %5569 = vmatprep.subr.mxu0 %v461
    %5570 = vmatpush1.msra.mxu0 %v460
    %5571 = vmatprep.mubr.f32.mxu0 %v5504
    %5572 = vmatmul.mubr.f32.gmra.mrb[0].mxu0 %v5503
    %v5573 = vpop.f32.mrb[0].mxu0
    %v5574 = vadd.f32 %v606, %v5573
    %v5575 = vpop.f32.mrb[0].mxu0
    %v5576 = vadd.f32 %v610, %v5575
    %5577 = vdwg.mxu0
    %5578 = vmatprep.subr.mxu0 %v465
    %5579 = vmatpush1.msra.mxu0 %v464
    %5580 = vmatprep.subr.mxu0 %v469
    %5581 = vmatpush1.msra.mxu0 %v468
    %5582 = vmatprep.subr.mxu0 %v473
    %5583 = vmatpush1.msra.mxu0 %v472
    %5584 = vmatprep.subr.mxu0 %v477
    %5585 = vmatpush1.msra.mxu0 %v476
    %5586 = vmatprep.subr.mxu0 %v481
    %5587 = vmatpush1.msra.mxu0 %v480
    %5588 = vmatprep.subr.mxu0 %v485
    %5589 = vmatpush1.msra.mxu0 %v484
    %5590 = vmatprep.subr.mxu0 %v489
    %5591 = vmatpush1.msra.mxu0 %v488
    %5592 = vmatprep.subr.mxu0 %v493
    %5593 = vmatpush1.msra.mxu0 %v492
    %5594 = vmatprep.subr.mxu0 %v497
    %5595 = vmatpush1.msra.mxu0 %v496
    %5596 = vmatprep.subr.mxu0 %v501
    %5597 = vmatpush1.msra.mxu0 %v500
    %5598 = vmatprep.subr.mxu0 %v505
    %5599 = vmatpush1.msra.mxu0 %v504
    %5600 = vmatprep.subr.mxu0 %v509
    %5601 = vmatpush1.msra.mxu0 %v508
    %5602 = vmatprep.subr.mxu0 %v513
    %5603 = vmatpush1.msra.mxu0 %v512
    %5604 = vmatprep.subr.mxu0 %v517
    %5605 = vmatpush1.msra.mxu0 %v516
    %5606 = vmatprep.subr.mxu0 %v521
    %5607 = vmatpush1.msra.mxu0 %v520
    %5608 = vmatprep.subr.mxu0 %v525
    %5609 = vmatpush1.msra.mxu0 %v524
    %5610 = vmatprep.subr.mxu0 %v529
    %5611 = vmatpush1.msra.mxu0 %v528
    %5612 = vmatprep.subr.mxu0 %v533
    %5613 = vmatpush1.msra.mxu0 %v532
    %5614 = vmatprep.subr.mxu0 %v537
    %5615 = vmatpush1.msra.mxu0 %v536
    %5616 = vmatprep.subr.mxu0 %v541
    %5617 = vmatpush1.msra.mxu0 %v540
    %5618 = vmatprep.subr.mxu0 %v545
    %5619 = vmatpush1.msra.mxu0 %v544
    %5620 = vmatprep.subr.mxu0 %v549
    %5621 = vmatpush1.msra.mxu0 %v548
    %5622 = vmatprep.subr.mxu0 %v553
    %5623 = vmatpush1.msra.mxu0 %v552
    %5624 = vmatprep.subr.mxu0 %v557
    %5625 = vmatpush1.msra.mxu0 %v556
    %5626 = vmatprep.subr.mxu0 %v561
    %5627 = vmatpush1.msra.mxu0 %v560
    %5628 = vmatprep.subr.mxu0 %v565
    %5629 = vmatpush1.msra.mxu0 %v564
    %5630 = vmatprep.subr.mxu0 %v569
    %5631 = vmatpush1.msra.mxu0 %v568
    %5632 = vmatprep.subr.mxu0 %v573
    %5633 = vmatpush1.msra.mxu0 %v572
    %5634 = vmatprep.subr.mxu0 %v577
    %5635 = vmatpush1.msra.mxu0 %v576
    %5636 = vmatprep.subr.mxu0 %v581
    %5637 = vmatpush1.msra.mxu0 %v580
    %5638 = vmatprep.subr.mxu0 %v585
    %5639 = vmatpush1.msra.mxu0 %v584
    %5640 = vmatprep.subr.mxu0 %v589
    %5641 = vmatpush1.msra.mxu0 %v588
    %5642 = vmatprep.mubr.f32.mxu0 %v5506
    %5643 = vmatmul.mubr.f32.gmra.mrb[0].mxu0 %v5505
    %v5644 = vpop.f32.mrb[0].mxu0
    %v5645 = vadd.f32 %v5574, %v5644
    %v5646 = vpop.f32.mrb[0].mxu0
    %v5647 = vadd.f32 %v5576, %v5646
    %5648 = vdwg.mxu0
    %5649 = vmatprep.subr.mxu0 %v339
    %5650 = vmatpush1.msra.mxu0 %v338
    %5651 = vmatprep.subr.mxu0 %v343
    %5652 = vmatpush1.msra.mxu0 %v342
    %5653 = vmatprep.subr.mxu0 %v347
    %5654 = vmatpush1.msra.mxu0 %v346
    %5655 = vmatprep.subr.mxu0 %v351
    %5656 = vmatpush1.msra.mxu0 %v350
    %5657 = vmatprep.subr.mxu0 %v355
    %5658 = vmatpush1.msra.mxu0 %v354
    %5659 = vmatprep.subr.mxu0 %v359
    %5660 = vmatpush1.msra.mxu0 %v358
    %5661 = vmatprep.subr.mxu0 %v363
    %5662 = vmatpush1.msra.mxu0 %v362
    %5663 = vmatprep.subr.mxu0 %v367
    %5664 = vmatpush1.msra.mxu0 %v366
    %5665 = vmatprep.subr.mxu0 %v371
    %5666 = vmatpush1.msra.mxu0 %v370
    %5667 = vmatprep.subr.mxu0 %v375
    %5668 = vmatpush1.msra.mxu0 %v374
    %5669 = vmatprep.subr.mxu0 %v379
    %5670 = vmatpush1.msra.mxu0 %v378
    %5671 = vmatprep.subr.mxu0 %v383
    %5672 = vmatpush1.msra.mxu0 %v382
    %5673 = vmatprep.subr.mxu0 %v387
    %5674 = vmatpush1.msra.mxu0 %v386
    %5675 = vmatprep.subr.mxu0 %v391
    %5676 = vmatpush1.msra.mxu0 %v390
    %5677 = vmatprep.subr.mxu0 %v395
    %5678 = vmatpush1.msra.mxu0 %v394
    %5679 = vmatprep.subr.mxu0 %v399
    %5680 = vmatpush1.msra.mxu0 %v398
    %5681 = vmatprep.subr.mxu0 %v403
    %5682 = vmatpush1.msra.mxu0 %v402
    %5683 = vmatprep.subr.mxu0 %v407
    %5684 = vmatpush1.msra.mxu0 %v406
    %5685 = vmatprep.subr.mxu0 %v411
    %5686 = vmatpush1.msra.mxu0 %v410
    %5687 = vmatprep.subr.mxu0 %v415
    %5688 = vmatpush1.msra.mxu0 %v414
    %5689 = vmatprep.subr.mxu0 %v419
    %5690 = vmatpush1.msra.mxu0 %v418
    %5691 = vmatprep.subr.mxu0 %v423
    %5692 = vmatpush1.msra.mxu0 %v422
    %5693 = vmatprep.subr.mxu0 %v427
    %5694 = vmatpush1.msra.mxu0 %v426
    %5695 = vmatprep.subr.mxu0 %v431
    %5696 = vmatpush1.msra.mxu0 %v430
    %5697 = vmatprep.subr.mxu0 %v435
    %5698 = vmatpush1.msra.mxu0 %v434
    %5699 = vmatprep.subr.mxu0 %v439
    %5700 = vmatpush1.msra.mxu0 %v438
    %5701 = vmatprep.subr.mxu0 %v443
    %5702 = vmatpush1.msra.mxu0 %v442
    %5703 = vmatprep.subr.mxu0 %v447
    %5704 = vmatpush1.msra.mxu0 %v446
    %5705 = vmatprep.subr.mxu0 %v451
    %5706 = vmatpush1.msra.mxu0 %v450
    %5707 = vmatprep.subr.mxu0 %v455
    %5708 = vmatpush1.msra.mxu0 %v454
    %5709 = vmatprep.subr.mxu0 %v459
    %5710 = vmatpush1.msra.mxu0 %v458
    %5711 = vmatprep.subr.mxu0 %v463
    %5712 = vmatpush1.msra.mxu0 %v462
    %5713 = vmatprep.mubr.f32.mxu0 %v5504
    %5714 = vmatmul.mubr.f32.gmra.mrb[0].mxu0 %v5503
    %v5715 = vpop.f32.mrb[0].mxu0
    %v5716 = vadd.f32 %v614, %v5715
    %v5717 = vpop.f32.mrb[0].mxu0
    %v5718 = vadd.f32 %v618, %v5717
    %5719 = vdwg.mxu0
    %5720 = vmatprep.subr.mxu0 %v467
    %5721 = vmatpush1.msra.mxu0 %v466
    %5722 = vmatprep.subr.mxu0 %v471
    %5723 = vmatpush1.msra.mxu0 %v470
    %5724 = vmatprep.subr.mxu0 %v475
    %5725 = vmatpush1.msra.mxu0 %v474
    %5726 = vmatprep.subr.mxu0 %v479
    %5727 = vmatpush1.msra.mxu0 %v478
    %5728 = vmatprep.subr.mxu0 %v483
    %5729 = vmatpush1.msra.mxu0 %v482
    %5730 = vmatprep.subr.mxu0 %v487
    %5731 = vmatpush1.msra.mxu0 %v486
    %5732 = vmatprep.subr.mxu0 %v491
    %5733 = vmatpush1.msra.mxu0 %v490
    %5734 = vmatprep.subr.mxu0 %v495
    %5735 = vmatpush1.msra.mxu0 %v494
    %5736 = vmatprep.subr.mxu0 %v499
    %5737 = vmatpush1.msra.mxu0 %v498
    %5738 = vmatprep.subr.mxu0 %v503
    %5739 = vmatpush1.msra.mxu0 %v502
    %5740 = vmatprep.subr.mxu0 %v507
    %5741 = vmatpush1.msra.mxu0 %v506
    %5742 = vmatprep.subr.mxu0 %v511
    %5743 = vmatpush1.msra.mxu0 %v510
    %5744 = vmatprep.subr.mxu0 %v515
    %5745 = vmatpush1.msra.mxu0 %v514
    %5746 = vmatprep.subr.mxu0 %v519
    %5747 = vmatpush1.msra.mxu0 %v518
    %5748 = vmatprep.subr.mxu0 %v523
    %5749 = vmatpush1.msra.mxu0 %v522
    %5750 = vmatprep.subr.mxu0 %v527
    %5751 = vmatpush1.msra.mxu0 %v526
    %5752 = vmatprep.subr.mxu0 %v531
    %5753 = vmatpush1.msra.mxu0 %v530
    %5754 = vmatprep.subr.mxu0 %v535
    %5755 = vmatpush1.msra.mxu0 %v534
    %5756 = vmatprep.subr.mxu0 %v539
    %5757 = vmatpush1.msra.mxu0 %v538
    %5758 = vmatprep.subr.mxu0 %v543
    %5759 = vmatpush1.msra.mxu0 %v542
    %5760 = vmatprep.subr.mxu0 %v547
    %5761 = vmatpush1.msra.mxu0 %v546
    %5762 = vmatprep.subr.mxu0 %v551
    %5763 = vmatpush1.msra.mxu0 %v550
    %5764 = vmatprep.subr.mxu0 %v555
    %5765 = vmatpush1.msra.mxu0 %v554
    %5766 = vmatprep.subr.mxu0 %v559
    %5767 = vmatpush1.msra.mxu0 %v558
    %5768 = vmatprep.subr.mxu0 %v563
    %5769 = vmatpush1.msra.mxu0 %v562
    %5770 = vmatprep.subr.mxu0 %v567
    %5771 = vmatpush1.msra.mxu0 %v566
    %5772 = vmatprep.subr.mxu0 %v571
    %5773 = vmatpush1.msra.mxu0 %v570
    %5774 = vmatprep.subr.mxu0 %v575
    %5775 = vmatpush1.msra.mxu0 %v574
    %5776 = vmatprep.subr.mxu0 %v579
    %5777 = vmatpush1.msra.mxu0 %v578
    %5778 = vmatprep.subr.mxu0 %v583
    %5779 = vmatpush1.msra.mxu0 %v582
    %5780 = vmatprep.subr.mxu0 %v587
    %5781 = vmatpush1.msra.mxu0 %v586
    %5782 = vmatprep.subr.mxu0 %v591
    %5783 = vmatpush1.msra.mxu0 %v590
    %5784 = vmatprep.mubr.f32.mxu0 %v5506
    %5785 = vmatmul.mubr.f32.gmra.mrb[0].mxu0 %v5505
    %v5786 = vpop.f32.mrb[0].mxu0
    %v5787 = vadd.f32 %v5716, %v5786
    %v5788 = vpop.f32.mrb[0].mxu0
    %v5789 = vadd.f32 %v5718, %v5788
    %5790 = vdwg.mxu0
    %v5791 = vtanh.pop %v5645
    %v5792 = vtanh.pop %v5647
    %v5793 = vtanh.pop %v5787
    %v5794 = vtanh.pop %v5789
    %v5795 = vld [vmem:[%s4] sm:$0xff]
    %v5796 = vld [vmem:[%s4 + $0x8] sm:$0xff]
    %v5797 = vld [vmem:[%s4 + $0x10] sm:$0xff]
    %v5798 = vld [vmem:[%s4 + $0x18] sm:$0xff]
    %v5799 = vld [vmem:[%s4 + $0x20] sm:$0xff]
    %v5800 = vld [vmem:[%s4 + $0x28] sm:$0xff]
    %v5801 = vld [vmem:[%s4 + $0x30] sm:$0xff]
    %v5802 = vld [vmem:[%s4 + $0x38] sm:$0xff]
    %v5803 = vld [vmem:[%s4 + $0x40] sm:$0xff]
    %v5804 = vld [vmem:[%s4 + $0x48] sm:$0xff]
    %v5805 = vld [vmem:[%s4 + $0x50] sm:$0xff]
    %v5806 = vld [vmem:[%s4 + $0x58] sm:$0xff]
    %v5807 = vld [vmem:[%s4 + $0x60] sm:$0xff]
    %v5808 = vld [vmem:[%s4 + $0x68] sm:$0xff]
    %v5809 = vld [vmem:[%s4 + $0x70] sm:$0xff]
    %v5810 = vld [vmem:[%s4 + $0x78] sm:$0xff]
    %v5811 = vld [vmem:[%s4 + $0x80] sm:$0xff]
    %v5812 = vld [vmem:[%s4 + $0x88] sm:$0xff]
    %v5813 = vld [vmem:[%s4 + $0x90] sm:$0xff]
    %v5814 = vld [vmem:[%s4 + $0x98] sm:$0xff]
    %v5815 = vld [vmem:[%s4 + $0xa0] sm:$0xff]
    %v5816 = vld [vmem:[%s4 + $0xa8] sm:$0xff]
    %v5817 = vld [vmem:[%s4 + $0xb0] sm:$0xff]
    %v5818 = vld [vmem:[%s4 + $0xb8] sm:$0xff]
    %v5819 = vld [vmem:[%s4 + $0xc0] sm:$0xff]
    %v5820 = vld [vmem:[%s4 + $0xc8] sm:$0xff]
    %v5821 = vld [vmem:[%s4 + $0xd0] sm:$0xff]
    %v5822 = vld [vmem:[%s4 + $0xd8] sm:$0xff]
    %v5823 = vld [vmem:[%s4 + $0xe0] sm:$0xff]
    %v5824 = vld [vmem:[%s4 + $0xe8] sm:$0xff]
    %v5825 = vld [vmem:[%s4 + $0xf0] sm:$0xff]
    %v5826 = vld [vmem:[%s4 + $0xf8] sm:$0xff]
    %v5827 = vld [vmem:[%s4 + $0x100] sm:$0xff]
    %v5828 = vld [vmem:[%s4 + $0x108] sm:$0xff]
    %v5829 = vld [vmem:[%s4 + $0x110] sm:$0xff]
    %v5830 = vld [vmem:[%s4 + $0x118] sm:$0xff]
    %v5831 = vld [vmem:[%s4 + $0x120] sm:$0xff]
    %v5832 = vld [vmem:[%s4 + $0x128] sm:$0xff]
    %v5833 = vld [vmem:[%s4 + $0x130] sm:$0xff]
    %v5834 = vld [vmem:[%s4 + $0x138] sm:$0xff]
    %v5835 = vld [vmem:[%s4 + $0x140] sm:$0xff]
    %v5836 = vld [vmem:[%s4 + $0x148] sm:$0xff]
    %v5837 = vld [vmem:[%s4 + $0x150] sm:$0xff]
    %v5838 = vld [vmem:[%s4 + $0x158] sm:$0xff]
    %v5839 = vld [vmem:[%s4 + $0x160] sm:$0xff]
    %v5840 = vld [vmem:[%s4 + $0x168] sm:$0xff]
    %v5841 = vld [vmem:[%s4 + $0x170] sm:$0xff]
    %v5842 = vld [vmem:[%s4 + $0x178] sm:$0xff]
    %v5843 = vld [vmem:[%s4 + $0x180] sm:$0xff]
    %v5844 = vld [vmem:[%s4 + $0x188] sm:$0xff]
    %v5845 = vld [vmem:[%s4 + $0x190] sm:$0xff]
    %v5846 = vld [vmem:[%s4 + $0x198] sm:$0xff]
    %v5847 = vld [vmem:[%s4 + $0x1a0] sm:$0xff]
    %v5848 = vld [vmem:[%s4 + $0x1a8] sm:$0xff]
    %v5849 = vld [vmem:[%s4 + $0x1b0] sm:$0xff]
    %v5850 = vld [vmem:[%s4 + $0x1b8] sm:$0xff]
    %v5851 = vld [vmem:[%s4 + $0x1c0] sm:$0xff]
    %v5852 = vld [vmem:[%s4 + $0x1c8] sm:$0xff]
    %v5853 = vld [vmem:[%s4 + $0x1d0] sm:$0xff]
    %v5854 = vld [vmem:[%s4 + $0x1d8] sm:$0xff]
    %v5855 = vld [vmem:[%s4 + $0x1e0] sm:$0xff]
    %v5856 = vld [vmem:[%s4 + $0x1e8] sm:$0xff]
    %v5857 = vld [vmem:[%s4 + $0x1f0] sm:$0xff]
    %v5858 = vld [vmem:[%s4 + $0x1f8] sm:$0xff]
    %v5859 = vld [vmem:[%s5] sm:$0x1]
    %v5861 = vlaneseq
    %v5862 = vshrl.u32 %v5861, 7
    %v5863 = vsub.s32 0, %v5862
    %v5864 = vrot.slane %v5859, %v5863
    %5866 = vmatprep.subr.mxu0 0.0
    %5867 = vmatpush1.msra.mxu0 %v5795
    %5868 = vmatprep.subr.mxu0 0.0
    %5869 = vmatpush1.msra.mxu0 %v5796
    %5870 = vmatprep.subr.mxu0 0.0
    %5871 = vmatpush1.msra.mxu0 %v5797
    %5872 = vmatprep.subr.mxu0 0.0
    %5873 = vmatpush1.msra.mxu0 %v5798
    %5874 = vmatprep.subr.mxu0 0.0
    %5875 = vmatpush1.msra.mxu0 %v5799
    %5876 = vmatprep.subr.mxu0 0.0
    %5877 = vmatpush1.msra.mxu0 %v5800
    %5878 = vmatprep.subr.mxu0 0.0
    %5879 = vmatpush1.msra.mxu0 %v5801
    %5880 = vmatprep.subr.mxu0 0.0
    %5881 = vmatpush1.msra.mxu0 %v5802
    %5882 = vmatprep.subr.mxu0 0.0
    %5883 = vmatpush1.msra.mxu0 %v5803
    %5884 = vmatprep.subr.mxu0 0.0
    %5885 = vmatpush1.msra.mxu0 %v5804
    %5886 = vmatprep.subr.mxu0 0.0
    %5887 = vmatpush1.msra.mxu0 %v5805
    %5888 = vmatprep.subr.mxu0 0.0
    %5889 = vmatpush1.msra.mxu0 %v5806
    %5890 = vmatprep.subr.mxu0 0.0
    %5891 = vmatpush1.msra.mxu0 %v5807
    %5892 = vmatprep.subr.mxu0 0.0
    %5893 = vmatpush1.msra.mxu0 %v5808
    %5894 = vmatprep.subr.mxu0 0.0
    %5895 = vmatpush1.msra.mxu0 %v5809
    %5896 = vmatprep.subr.mxu0 0.0
    %5897 = vmatpush1.msra.mxu0 %v5810
    %5898 = vmatprep.subr.mxu0 0.0
    %5899 = vmatpush1.msra.mxu0 %v5811
    %5900 = vmatprep.subr.mxu0 0.0
    %5901 = vmatpush1.msra.mxu0 %v5812
    %5902 = vmatprep.subr.mxu0 0.0
    %5903 = vmatpush1.msra.mxu0 %v5813
    %5904 = vmatprep.subr.mxu0 0.0
    %5905 = vmatpush1.msra.mxu0 %v5814
    %5906 = vmatprep.subr.mxu0 0.0
    %5907 = vmatpush1.msra.mxu0 %v5815
    %5908 = vmatprep.subr.mxu0 0.0
    %5909 = vmatpush1.msra.mxu0 %v5816
    %5910 = vmatprep.subr.mxu0 0.0
    %5911 = vmatpush1.msra.mxu0 %v5817
    %5912 = vmatprep.subr.mxu0 0.0
    %5913 = vmatpush1.msra.mxu0 %v5818
    %5914 = vmatprep.subr.mxu0 0.0
    %5915 = vmatpush1.msra.mxu0 %v5819
    %5916 = vmatprep.subr.mxu0 0.0
    %5917 = vmatpush1.msra.mxu0 %v5820
    %5918 = vmatprep.subr.mxu0 0.0
    %5919 = vmatpush1.msra.mxu0 %v5821
    %5920 = vmatprep.subr.mxu0 0.0
    %5921 = vmatpush1.msra.mxu0 %v5822
    %5922 = vmatprep.subr.mxu0 0.0
    %5923 = vmatpush1.msra.mxu0 %v5823
    %5924 = vmatprep.subr.mxu0 0.0
    %5925 = vmatpush1.msra.mxu0 %v5824
    %5926 = vmatprep.subr.mxu0 0.0
    %5927 = vmatpush1.msra.mxu0 %v5825
    %5928 = vmatprep.subr.mxu0 0.0
    %5929 = vmatpush1.msra.mxu0 %v5826
    %5930 = vmatprep.mubr.f32.mxu0 %v5792
    %5931 = vmatmul.mubr.f32.gmra.mrb[0].mxu0 %v5791
    %v5932 = vpop.f32.mrb[0].mxu0
    %v5933 = vadd.f32 %v5864, %v5932
    %v5934 = vpop.f32.mrb[0].mxu0
    %5935 = vdwg.mxu0
    %5936 = vmatprep.subr.mxu0 0.0
    %5937 = vmatpush1.msra.mxu0 %v5827
    %5938 = vmatprep.subr.mxu0 0.0
    %5939 = vmatpush1.msra.mxu0 %v5828
    %5940 = vmatprep.subr.mxu0 0.0
    %5941 = vmatpush1.msra.mxu0 %v5829
    %5942 = vmatprep.subr.mxu0 0.0
    %5943 = vmatpush1.msra.mxu0 %v5830
    %5944 = vmatprep.subr.mxu0 0.0
    %5945 = vmatpush1.msra.mxu0 %v5831
    %5946 = vmatprep.subr.mxu0 0.0
    %5947 = vmatpush1.msra.mxu0 %v5832
    %5948 = vmatprep.subr.mxu0 0.0
    %5949 = vmatpush1.msra.mxu0 %v5833
    %5950 = vmatprep.subr.mxu0 0.0
    %5951 = vmatpush1.msra.mxu0 %v5834
    %5952 = vmatprep.subr.mxu0 0.0
    %5953 = vmatpush1.msra.mxu0 %v5835
    %5954 = vmatprep.subr.mxu0 0.0
    %5955 = vmatpush1.msra.mxu0 %v5836
    %5956 = vmatprep.subr.mxu0 0.0
    %5957 = vmatpush1.msra.mxu0 %v5837
    %5958 = vmatprep.subr.mxu0 0.0
    %5959 = vmatpush1.msra.mxu0 %v5838
    %5960 = vmatprep.subr.mxu0 0.0
    %5961 = vmatpush1.msra.mxu0 %v5839
    %5962 = vmatprep.subr.mxu0 0.0
    %5963 = vmatpush1.msra.mxu0 %v5840
    %5964 = vmatprep.subr.mxu0 0.0
    %5965 = vmatpush1.msra.mxu0 %v5841
    %5966 = vmatprep.subr.mxu0 0.0
    %5967 = vmatpush1.msra.mxu0 %v5842
    %5968 = vmatprep.subr.mxu0 0.0
    %5969 = vmatpush1.msra.mxu0 %v5843
    %5970 = vmatprep.subr.mxu0 0.0
    %5971 = vmatpush1.msra.mxu0 %v5844
    %5972 = vmatprep.subr.mxu0 0.0
    %5973 = vmatpush1.msra.mxu0 %v5845
    %5974 = vmatprep.subr.mxu0 0.0
    %5975 = vmatpush1.msra.mxu0 %v5846
    %5976 = vmatprep.subr.mxu0 0.0
    %5977 = vmatpush1.msra.mxu0 %v5847
    %5978 = vmatprep.subr.mxu0 0.0
    %5979 = vmatpush1.msra.mxu0 %v5848
    %5980 = vmatprep.subr.mxu0 0.0
    %5981 = vmatpush1.msra.mxu0 %v5849
    %5982 = vmatprep.subr.mxu0 0.0
    %5983 = vmatpush1.msra.mxu0 %v5850
    %5984 = vmatprep.subr.mxu0 0.0
    %5985 = vmatpush1.msra.mxu0 %v5851
    %5986 = vmatprep.subr.mxu0 0.0
    %5987 = vmatpush1.msra.mxu0 %v5852
    %5988 = vmatprep.subr.mxu0 0.0
    %5989 = vmatpush1.msra.mxu0 %v5853
    %5990 = vmatprep.subr.mxu0 0.0
    %5991 = vmatpush1.msra.mxu0 %v5854
    %5992 = vmatprep.subr.mxu0 0.0
    %5993 = vmatpush1.msra.mxu0 %v5855
    %5994 = vmatprep.subr.mxu0 0.0
    %5995 = vmatpush1.msra.mxu0 %v5856
    %5996 = vmatprep.subr.mxu0 0.0
    %5997 = vmatpush1.msra.mxu0 %v5857
    %5998 = vmatprep.subr.mxu0 0.0
    %5999 = vmatpush1.msra.mxu0 %v5858
    %6000 = vmatprep.mubr.f32.mxu0 %v5794
    %6001 = vmatmul.mubr.f32.gmra.mrb[0].mxu0 %v5793
    %v6002 = vpop.f32.mrb[0].mxu0
    %v6003 = vadd.f32 %v5933, %v6002
    %v6004 = vpop.f32.mrb[0].mxu0
    %6005 = vdwg.mxu0
    %vm6006 = vcmask 31744
    %6007 = vst.msk [vmem:[%s6] sm:$0xff] %vm6006, %v6003
    // Predicated region
    $region30: #{method_rnn_forward.1} parent=1 // pred_check
      _
    $region31: #{method_rnn_forward.1} parent=1 // pred_check_branch
      %6009 = sbr.rel (0) target = $region33
    $region32: #{method_rnn_forward.1} parent=1 // pred_region
      _
    $region33: #{method_rnn_forward.1} parent=1 // pred_fallthru
      _
    // Predicated region
    $region34: #{method_rnn_forward.1} parent=1 // pred_check
      _
    $region35: #{method_rnn_forward.1} parent=1 // pred_check_branch
      %6011 = sbr.rel (0) target = $region37
    $region36: #{method_rnn_forward.1} parent=1 // pred_region
      _
    $region37: #{method_rnn_forward.1} parent=1 // pred_fallthru
      _
    %6012 = vsyncpa [#allocation4], 1

</llo_original>
